<compile_context>
chip_gen: v7x
topology: tpu7x:2x2x1
jax: 0.10.0
libtpu: 0.0.40
codegen_flags: <defaults>
</compile_context>

<pallas_src>
import math
import jax
import jax.numpy as jnp
import numpy as np
from jax.experimental import pallas as pl
from jax.experimental.pallas import tpu as pltpu

D_MODEL = 32
N_HEADS = 4
D_K = D_MODEL // N_HEADS
D_FF = 64
N_LAYERS = 2
EPS = 1e-6
NEG_INF = -1e9
SCALE = 1.0 / math.sqrt(D_K)


def _layer_norm(x, gamma, beta):
    # PyTorch Tensor.std() is unbiased (divide by N-1) and the reference adds
    # eps to std (not var) -- reproduce that exactly.
    d = x.shape[-1]
    mean = jnp.mean(x, axis=-1, keepdims=True)
    var = jnp.sum((x - mean) ** 2, axis=-1, keepdims=True) * (1.0 / (d - 1))
    std = jnp.sqrt(var)
    return gamma * (x - mean) / (std + EPS) + beta


def encoder_kernel(x_ref, bias_ref, wqkv_ref, wo_ref, w1_ref, w2_ref,
                   vecs_ref, fnorm_ref, out_ref):
    B, S, D = x_ref.shape
    x = x_ref[...].reshape(B * S, D)      # fold batch into the matmul row axis
    bias = bias_ref[...]                  # (B, S, S) additive mask bias

    for l in range(N_LAYERS):             # static unroll over layers
        wqkv = wqkv_ref[l]                # (D, 3D)   fused Wq|Wk|Wv
        wo = wo_ref[l]                    # (D, D)
        w1 = w1_ref[l]                    # (D, D_FF)
        w2 = w2_ref[l]                    # (D_FF, D)
        vec = vecs_ref[l]                 # (8, 3D)   packed bias / LN vectors
        bqkv = vec[0:1, :]                # (1, 3D)
        bo = vec[1:2, 0:D]
        b1 = vec[2:3, 0:D_FF]
        b2 = vec[3:4, 0:D]
        g1 = vec[4:5, 0:D]
        be1 = vec[5:6, 0:D]
        g2 = vec[6:7, 0:D]
        be2 = vec[7:8, 0:D]

        # ---- sublayer 0: pre-norm + multi-head self-attention + residual ----
        y = _layer_norm(x, g1, be1)                                      # (BS, D)
        qkv = jnp.dot(y, wqkv, preferred_element_type=jnp.float32) + bqkv
        qkv = qkv.reshape(B, S, 3 * D)                                   # (B, S, 3D)

        attn = jnp.zeros((B * S, D), jnp.float32)
        for h in range(N_HEADS):                                         # static unroll
            qh = qkv[..., h * D_K:(h + 1) * D_K]                         # (B, S, d_k)
            kh = qkv[..., D + h * D_K:D + (h + 1) * D_K]
            vh = qkv[..., 2 * D + h * D_K:2 * D + (h + 1) * D_K]
            s = jnp.einsum("bqd,bkd->bqk", qh, kh,
                           preferred_element_type=jnp.float32) * SCALE + bias
            s = s - jnp.max(s, axis=-1, keepdims=True)
            p = jnp.exp(s)
            p = p * pl.reciprocal(jnp.sum(p, axis=-1, keepdims=True), approx=True)
            ctx = jnp.einsum("bqk,bkd->bqd", p, vh,
                             preferred_element_type=jnp.float32)         # (B, S, d_k)
            # fold the output projection per head (sublane-aligned rows of W_o)
            # and accumulate -> no concatenate of head outputs.
            attn = attn + jnp.dot(ctx.reshape(B * S, D_K),
                                  wo[h * D_K:(h + 1) * D_K, :],
                                  preferred_element_type=jnp.float32)
        x = x + attn + bo                 # dropout == identity (eval mode)

        # ---- sublayer 1: pre-norm + position-wise feed-forward + residual ----
        y2 = _layer_norm(x, g2, be2)
        hdn = jnp.maximum(
            jnp.dot(y2, w1, preferred_element_type=jnp.float32) + b1, 0.0)
        x = x + jnp.dot(hdn, w2, preferred_element_type=jnp.float32) + b2

    # ---- final encoder LayerNorm ----
    out = _layer_norm(x, fnorm_ref[0:1, :], fnorm_ref[1:2, :])
    out_ref[...] = out.reshape(B, S, D).astype(out_ref.dtype)


def _pack_params(layer_params, final_gamma, final_beta):
    width = 3 * D_MODEL

    def row(v):
        v = v.reshape(1, -1)
        return jnp.pad(v, ((0, 0), (0, width - v.shape[1])))

    WQKV = jnp.stack([jnp.concatenate([p["wq"], p["wk"], p["wv"]], axis=1)
                      for p in layer_params])                     # (L, D, 3D)
    WO = jnp.stack([p["wo"] for p in layer_params])               # (L, D, D)
    W1 = jnp.stack([p["w1"] for p in layer_params])               # (L, D, D_FF)
    W2 = jnp.stack([p["w2"] for p in layer_params])               # (L, D_FF, D)
    VECS = jnp.stack([
        jnp.concatenate([
            jnp.concatenate([p["bq"], p["bk"], p["bv"]], axis=1),
            row(p["bo"]), row(p["b1"]), row(p["b2"]),
            row(p["g1"]), row(p["be1"]), row(p["g2"]), row(p["be2"]),
        ], axis=0)
        for p in layer_params])                                   # (L, 8, 3D)
    FNORM = jnp.concatenate([final_gamma.reshape(1, -1),
                             final_beta.reshape(1, -1)], axis=0)  # (2, D)
    return WQKV, WO, W1, W2, VECS, FNORM


def encoder_forward(x, mask, layer_params, final_gamma, final_beta):
    B, S, D = x.shape
    WQKV, WO, W1, W2, VECS, FNORM = _pack_params(layer_params, final_gamma,
                                                 final_beta)
    # additive attention-mask bias, precomputed once in the wrapper
    bias = jnp.where(mask == 0.0, jnp.float32(NEG_INF), jnp.float32(0.0))

    vmem = pl.BlockSpec(memory_space=pltpu.MemorySpace.VMEM)
    return pl.pallas_call(
        encoder_kernel,
        out_shape=jax.ShapeDtypeStruct((B, S, D), x.dtype),
        in_specs=[vmem] * 8,
        out_specs=vmem,
    )(x, bias, WQKV, WO, W1, W2, VECS, FNORM)


def reference(x, mask, layer_params, final_gamma, final_beta):
    """Pure-JAX reference mirroring the PyTorch Encoder (eval mode)."""
    def ln(v, g, b):
        d = v.shape[-1]
        mean = v.mean(-1, keepdims=True)
        var = ((v - mean) ** 2).sum(-1, keepdims=True) / (d - 1)
        std = jnp.sqrt(var)
        return g * (v - mean) / (std + EPS) + b

    B, S, D = x.shape
    dk = D // N_HEADS
    for p in layer_params:
        y = ln(x, p["g1"], p["be1"])
        q = y @ p["wq"] + p["bq"]
        k = y @ p["wk"] + p["bk"]
        v = y @ p["wv"] + p["bv"]
        q = q.reshape(B, S, N_HEADS, dk).transpose(0, 2, 1, 3)
        k = k.reshape(B, S, N_HEADS, dk).transpose(0, 2, 1, 3)
        v = v.reshape(B, S, N_HEADS, dk).transpose(0, 2, 1, 3)
        scores = jnp.einsum("bhqd,bhkd->bhqk", q, k) / math.sqrt(dk)
        scores = jnp.where(mask[:, None, :, :] == 0.0, NEG_INF, scores)
        probs = jax.nn.softmax(scores, axis=-1)
        ctx = jnp.einsum("bhqk,bhkd->bhqd", probs, v)
        ctx = ctx.transpose(0, 2, 1, 3).reshape(B, S, D)
        x = x + (ctx @ p["wo"] + p["bo"])

        y2 = ln(x, p["g2"], p["be2"])
        h1 = jnp.maximum(y2 @ p["w1"] + p["b1"], 0.0)
        x = x + (h1 @ p["w2"] + p["b2"])
    return ln(x, final_gamma, final_beta)


def init_layer_params(key):
    ks = jax.random.split(key, 16)
    s = 0.05

    def rn(k, shape, scale=s):
        return scale * jax.random.normal(k, shape, jnp.float32)

    return {
        "wq": rn(ks[0], (D_MODEL, D_MODEL)),
        "wk": rn(ks[1], (D_MODEL, D_MODEL)),
        "wv": rn(ks[2], (D_MODEL, D_MODEL)),
        "wo": rn(ks[3], (D_MODEL, D_MODEL)),
        "w1": rn(ks[4], (D_MODEL, D_FF)),
        "w2": rn(ks[5], (D_FF, D_MODEL)),
        "bq": rn(ks[6], (1, D_MODEL)),
        "bk": rn(ks[7], (1, D_MODEL)),
        "bv": rn(ks[8], (1, D_MODEL)),
        "bo": rn(ks[9], (1, D_MODEL)),
        "b1": rn(ks[10], (1, D_FF)),
        "b2": rn(ks[11], (1, D_MODEL)),
        "g1": 1.0 + rn(ks[12], (1, D_MODEL), 0.1),
        "be1": rn(ks[13], (1, D_MODEL), 0.1),
        "g2": 1.0 + rn(ks[14], (1, D_MODEL), 0.1),
        "be2": rn(ks[15], (1, D_MODEL), 0.1),
    }


if __name__ == "__main__":
    B, S = 2, 8
    key = jax.random.PRNGKey(0)
    keys = jax.random.split(key, 2 + N_LAYERS)
    kx, kf, kls = keys[0], keys[1], keys[2:]

    x = jax.random.normal(kx, (B, S, D_MODEL), jnp.float32)
    # mask: all positions visible, except batch 0 masks out the last key pos.
    mask = jnp.ones((B, S, S), jnp.float32)
    mask = mask.at[0, :, -1].set(0.0)

    layer_params = [init_layer_params(k) for k in kls]
    kg, kb = jax.random.split(kf)
    final_gamma = 1.0 + 0.1 * jax.random.normal(kg, (1, D_MODEL), jnp.float32)
    final_beta = 0.1 * jax.random.normal(kb, (1, D_MODEL), jnp.float32)

    out = encoder_forward(x, mask, layer_params, final_gamma, final_beta)
    out = jax.block_until_ready(out)

    ref = reference(x, mask, layer_params, final_gamma, final_beta)
    # 2e-4 tolerance leaves margin for pl.reciprocal(approx=True) in the softmax.
    np.testing.assert_allclose(np.asarray(out), np.asarray(ref),
                               rtol=2e-4, atol=2e-4)
    print("KERNEL_OK")
</pallas_src>

<mosaic_0001>
module attributes {stable_mosaic.version = 11 : i64} {
  func.func @encoder_kernel(%arg0: memref<2x8x32xf32, #tpu.memory_space<vmem>>, %arg1: memref<2x8x8xf32, #tpu.memory_space<vmem>>, %arg2: memref<2x32x96xf32, #tpu.memory_space<vmem>>, %arg3: memref<2x32x32xf32, #tpu.memory_space<vmem>>, %arg4: memref<2x32x64xf32, #tpu.memory_space<vmem>>, %arg5: memref<2x64x32xf32, #tpu.memory_space<vmem>>, %arg6: memref<2x8x96xf32, #tpu.memory_space<vmem>>, %arg7: memref<2x32xf32, #tpu.memory_space<vmem>>, %arg8: memref<2x8x32xf32, #tpu.memory_space<vmem>>) attributes {dimension_semantics = [], scalar_prefetch = 0 : i64, scratch_operands = 0 : i64, tpu.core_type = #tpu.core_type<tc>} {
    %c0 = arith.constant 0 : index
    %c0_0 = arith.constant 0 : index
    %c0_1 = arith.constant 0 : index
    %0 = vector.load %arg0[%c0, %c0_0, %c0_1] : memref<2x8x32xf32, #tpu.memory_space<vmem>>, vector<2x8x32xf32>
    %1 = vector.shape_cast %0 : vector<2x8x32xf32> to vector<16x32xf32>
    %c0_2 = arith.constant 0 : index
    %c0_3 = arith.constant 0 : index
    %c0_4 = arith.constant 0 : index
    %2 = vector.load %arg1[%c0_2, %c0_3, %c0_4] : memref<2x8x8xf32, #tpu.memory_space<vmem>>, vector<2x8x8xf32>
    %c0_5 = arith.constant 0 : index
    %c0_6 = arith.constant 0 : index
    %c0_7 = arith.constant 0 : index
    %3 = vector.load %arg2[%c0_5, %c0_6, %c0_7] : memref<2x32x96xf32, #tpu.memory_space<vmem>>, vector<1x32x96xf32>
    %4 = vector.shape_cast %3 : vector<1x32x96xf32> to vector<32x96xf32>
    %c0_8 = arith.constant 0 : index
    %c0_9 = arith.constant 0 : index
    %c0_10 = arith.constant 0 : index
    %5 = vector.load %arg3[%c0_8, %c0_9, %c0_10] : memref<2x32x32xf32, #tpu.memory_space<vmem>>, vector<1x32x32xf32>
    %6 = vector.shape_cast %5 : vector<1x32x32xf32> to vector<32x32xf32>
    %c0_11 = arith.constant 0 : index
    %c0_12 = arith.constant 0 : index
    %c0_13 = arith.constant 0 : index
    %7 = vector.load %arg4[%c0_11, %c0_12, %c0_13] : memref<2x32x64xf32, #tpu.memory_space<vmem>>, vector<1x32x64xf32>
    %8 = vector.shape_cast %7 : vector<1x32x64xf32> to vector<32x64xf32>
    %c0_14 = arith.constant 0 : index
    %c0_15 = arith.constant 0 : index
    %c0_16 = arith.constant 0 : index
    %9 = vector.load %arg5[%c0_14, %c0_15, %c0_16] : memref<2x64x32xf32, #tpu.memory_space<vmem>>, vector<1x64x32xf32>
    %10 = vector.shape_cast %9 : vector<1x64x32xf32> to vector<64x32xf32>
    %c0_17 = arith.constant 0 : index
    %c0_18 = arith.constant 0 : index
    %c0_19 = arith.constant 0 : index
    %11 = vector.load %arg6[%c0_17, %c0_18, %c0_19] : memref<2x8x96xf32, #tpu.memory_space<vmem>>, vector<1x8x96xf32>
    %12 = vector.shape_cast %11 : vector<1x8x96xf32> to vector<8x96xf32>
    %13 = vector.extract_strided_slice %12 {offsets = [0, 0], sizes = [1, 96], strides = [1, 1]} : vector<8x96xf32> to vector<1x96xf32>
    %14 = vector.extract_strided_slice %12 {offsets = [1, 0], sizes = [1, 32], strides = [1, 1]} : vector<8x96xf32> to vector<1x32xf32>
    %15 = vector.extract_strided_slice %12 {offsets = [2, 0], sizes = [1, 64], strides = [1, 1]} : vector<8x96xf32> to vector<1x64xf32>
    %16 = vector.extract_strided_slice %12 {offsets = [3, 0], sizes = [1, 32], strides = [1, 1]} : vector<8x96xf32> to vector<1x32xf32>
    %17 = vector.extract_strided_slice %12 {offsets = [4, 0], sizes = [1, 32], strides = [1, 1]} : vector<8x96xf32> to vector<1x32xf32>
    %18 = vector.extract_strided_slice %12 {offsets = [5, 0], sizes = [1, 32], strides = [1, 1]} : vector<8x96xf32> to vector<1x32xf32>
    %19 = vector.extract_strided_slice %12 {offsets = [6, 0], sizes = [1, 32], strides = [1, 1]} : vector<8x96xf32> to vector<1x32xf32>
    %20 = vector.extract_strided_slice %12 {offsets = [7, 0], sizes = [1, 32], strides = [1, 1]} : vector<8x96xf32> to vector<1x32xf32>
    %cst = arith.constant dense<0.000000e+00> : vector<16xf32>
    %21 = vector.multi_reduction <add>, %1, %cst [1] : vector<16x32xf32> to vector<16xf32>
    %22 = vector.shape_cast %21 : vector<16xf32> to vector<16x1xf32>
    %cst_20 = arith.constant 3.200000e+01 : f32
    %23 = vector.broadcast %cst_20 : f32 to vector<16x1xf32>
    %24 = arith.divf %22, %23 : vector<16x1xf32>
    %25 = vector.broadcast %24 : vector<16x1xf32> to vector<16x32xf32>
    %26 = arith.subf %1, %25 : vector<16x32xf32>
    %27 = arith.mulf %26, %26 : vector<16x32xf32>
    %cst_21 = arith.constant dense<0.000000e+00> : vector<16xf32>
    %28 = vector.multi_reduction <add>, %27, %cst_21 [1] : vector<16x32xf32> to vector<16xf32>
    %29 = vector.shape_cast %28 : vector<16xf32> to vector<16x1xf32>
    %cst_22 = arith.constant 0.0322580636 : f32
    %30 = vector.broadcast %cst_22 : f32 to vector<16x1xf32>
    %31 = arith.mulf %29, %30 : vector<16x1xf32>
    %32 = math.sqrt %31 : vector<16x1xf32>
    %33 = vector.broadcast %24 : vector<16x1xf32> to vector<16x32xf32>
    %34 = arith.subf %1, %33 : vector<16x32xf32>
    %35 = vector.broadcast %17 : vector<1x32xf32> to vector<16x32xf32>
    %36 = arith.mulf %35, %34 : vector<16x32xf32>
    %cst_23 = arith.constant 9.99999997E-7 : f32
    %37 = vector.broadcast %cst_23 : f32 to vector<16x1xf32>
    %38 = arith.addf %32, %37 : vector<16x1xf32>
    %39 = vector.broadcast %38 : vector<16x1xf32> to vector<16x32xf32>
    %40 = arith.divf %36, %39 : vector<16x32xf32>
    %41 = vector.broadcast %18 : vector<1x32xf32> to vector<16x32xf32>
    %42 = arith.addf %40, %41 : vector<16x32xf32>
    %cst_24 = arith.constant dense<0.000000e+00> : vector<16x96xf32>
    %43 = tpu.matmul %42, %4, %cst_24 {dimension_numbers = #tpu.dot_dimension_numbers<[1], [0], [0], [1], [0, 0, 1, 1], [], []>} : vector<16x32xf32>, vector<32x96xf32>, vector<16x96xf32> -> vector<16x96xf32>
    %44 = vector.broadcast %13 : vector<1x96xf32> to vector<16x96xf32>
    %45 = arith.addf %43, %44 : vector<16x96xf32>
    %46 = vector.shape_cast %45 : vector<16x96xf32> to vector<2x8x96xf32>
    %cst_25 = arith.constant 0.000000e+00 : f32
    %47 = vector.broadcast %cst_25 : f32 to vector<16x32xf32>
    %48 = vector.extract_strided_slice %46 {offsets = [0, 0, 0], sizes = [2, 8, 8], strides = [1, 1, 1]} : vector<2x8x96xf32> to vector<2x8x8xf32>
    %49 = vector.extract_strided_slice %46 {offsets = [0, 0, 32], sizes = [2, 8, 8], strides = [1, 1, 1]} : vector<2x8x96xf32> to vector<2x8x8xf32>
    %50 = vector.extract_strided_slice %46 {offsets = [0, 0, 64], sizes = [2, 8, 8], strides = [1, 1, 1]} : vector<2x8x96xf32> to vector<2x8x8xf32>
    "tpu.trace_start"() <{level = 10 : i32, message = "bqd,bkd->bqk"}> : () -> ()
    %cst_26 = arith.constant dense<0.000000e+00> : vector<2x8x8xf32>
    %51 = tpu.matmul %48, %49, %cst_26 {dimension_numbers = #tpu.dot_dimension_numbers<[2], [2], [1], [1], [0, 0, 0, 1, 1, 1], [0], [0]>} : vector<2x8x8xf32>, vector<2x8x8xf32>, vector<2x8x8xf32> -> vector<2x8x8xf32>
    "tpu.trace_stop"() : () -> ()
    %cst_27 = arith.constant 0.353553385 : f32
    %52 = vector.broadcast %cst_27 : f32 to vector<2x8x8xf32>
    %53 = arith.mulf %51, %52 : vector<2x8x8xf32>
    %54 = arith.addf %53, %2 : vector<2x8x8xf32>
    %cst_28 = arith.constant dense<0xFF800000> : vector<2x8xf32>
    %55 = vector.multi_reduction <maximumf>, %54, %cst_28 [2] : vector<2x8x8xf32> to vector<2x8xf32>
    %56 = vector.shape_cast %55 : vector<2x8xf32> to vector<2x8x1xf32>
    %57 = vector.broadcast %56 : vector<2x8x1xf32> to vector<2x8x8xf32>
    %58 = arith.subf %54, %57 : vector<2x8x8xf32>
    %59 = math.exp %58 : vector<2x8x8xf32>
    %cst_29 = arith.constant dense<0.000000e+00> : vector<2x8xf32>
    %60 = vector.multi_reduction <add>, %59, %cst_29 [2] : vector<2x8x8xf32> to vector<2x8xf32>
    %61 = vector.shape_cast %60 : vector<2x8xf32> to vector<2x8x1xf32>
    %62 = tpu.reciprocal %61 {approx = true} : vector<2x8x1xf32> -> vector<2x8x1xf32>
    %63 = vector.broadcast %62 : vector<2x8x1xf32> to vector<2x8x8xf32>
    %64 = arith.mulf %59, %63 : vector<2x8x8xf32>
    "tpu.trace_start"() <{level = 10 : i32, message = "bqk,bkd->bqd"}> : () -> ()
    %cst_30 = arith.constant dense<0.000000e+00> : vector<2x8x8xf32>
    %65 = tpu.matmul %64, %50, %cst_30 {dimension_numbers = #tpu.dot_dimension_numbers<[2], [1], [1], [2], [0, 0, 0, 1, 1, 2], [0], [0]>} : vector<2x8x8xf32>, vector<2x8x8xf32>, vector<2x8x8xf32> -> vector<2x8x8xf32>
    "tpu.trace_stop"() : () -> ()
    %66 = vector.shape_cast %65 : vector<2x8x8xf32> to vector<16x8xf32>
    %67 = vector.extract_strided_slice %6 {offsets = [0, 0], sizes = [8, 32], strides = [1, 1]} : vector<32x32xf32> to vector<8x32xf32>
    %cst_31 = arith.constant dense<0.000000e+00> : vector<16x32xf32>
    %68 = tpu.matmul %66, %67, %cst_31 {dimension_numbers = #tpu.dot_dimension_numbers<[1], [0], [0], [1], [0, 0, 1, 1], [], []>} : vector<16x8xf32>, vector<8x32xf32>, vector<16x32xf32> -> vector<16x32xf32>
    %69 = arith.addf %47, %68 : vector<16x32xf32>
    %70 = vector.extract_strided_slice %46 {offsets = [0, 0, 8], sizes = [2, 8, 8], strides = [1, 1, 1]} : vector<2x8x96xf32> to vector<2x8x8xf32>
    %71 = vector.extract_strided_slice %46 {offsets = [0, 0, 40], sizes = [2, 8, 8], strides = [1, 1, 1]} : vector<2x8x96xf32> to vector<2x8x8xf32>
    %72 = vector.extract_strided_slice %46 {offsets = [0, 0, 72], sizes = [2, 8, 8], strides = [1, 1, 1]} : vector<2x8x96xf32> to vector<2x8x8xf32>
    "tpu.trace_start"() <{level = 10 : i32, message = "bqd,bkd->bqk"}> : () -> ()
    %cst_32 = arith.constant dense<0.000000e+00> : vector<2x8x8xf32>
    %73 = tpu.matmul %70, %71, %cst_32 {dimension_numbers = #tpu.dot_dimension_numbers<[2], [2], [1], [1], [0, 0, 0, 1, 1, 1], [0], [0]>} : vector<2x8x8xf32>, vector<2x8x8xf32>, vector<2x8x8xf32> -> vector<2x8x8xf32>
    "tpu.trace_stop"() : () -> ()
    %cst_33 = arith.constant 0.353553385 : f32
    %74 = vector.broadcast %cst_33 : f32 to vector<2x8x8xf32>
    %75 = arith.mulf %73, %74 : vector<2x8x8xf32>
    %76 = arith.addf %75, %2 : vector<2x8x8xf32>
    %cst_34 = arith.constant dense<0xFF800000> : vector<2x8xf32>
    %77 = vector.multi_reduction <maximumf>, %76, %cst_34 [2] : vector<2x8x8xf32> to vector<2x8xf32>
    %78 = vector.shape_cast %77 : vector<2x8xf32> to vector<2x8x1xf32>
    %79 = vector.broadcast %78 : vector<2x8x1xf32> to vector<2x8x8xf32>
    %80 = arith.subf %76, %79 : vector<2x8x8xf32>
    %81 = math.exp %80 : vector<2x8x8xf32>
    %cst_35 = arith.constant dense<0.000000e+00> : vector<2x8xf32>
    %82 = vector.multi_reduction <add>, %81, %cst_35 [2] : vector<2x8x8xf32> to vector<2x8xf32>
    %83 = vector.shape_cast %82 : vector<2x8xf32> to vector<2x8x1xf32>
    %84 = tpu.reciprocal %83 {approx = true} : vector<2x8x1xf32> -> vector<2x8x1xf32>
    %85 = vector.broadcast %84 : vector<2x8x1xf32> to vector<2x8x8xf32>
    %86 = arith.mulf %81, %85 : vector<2x8x8xf32>
    "tpu.trace_start"() <{level = 10 : i32, message = "bqk,bkd->bqd"}> : () -> ()
    %cst_36 = arith.constant dense<0.000000e+00> : vector<2x8x8xf32>
    %87 = tpu.matmul %86, %72, %cst_36 {dimension_numbers = #tpu.dot_dimension_numbers<[2], [1], [1], [2], [0, 0, 0, 1, 1, 2], [0], [0]>} : vector<2x8x8xf32>, vector<2x8x8xf32>, vector<2x8x8xf32> -> vector<2x8x8xf32>
    "tpu.trace_stop"() : () -> ()
    %88 = vector.shape_cast %87 : vector<2x8x8xf32> to vector<16x8xf32>
    %89 = vector.extract_strided_slice %6 {offsets = [8, 0], sizes = [8, 32], strides = [1, 1]} : vector<32x32xf32> to vector<8x32xf32>
    %cst_37 = arith.constant dense<0.000000e+00> : vector<16x32xf32>
    %90 = tpu.matmul %88, %89, %cst_37 {dimension_numbers = #tpu.dot_dimension_numbers<[1], [0], [0], [1], [0, 0, 1, 1], [], []>} : vector<16x8xf32>, vector<8x32xf32>, vector<16x32xf32> -> vector<16x32xf32>
    %91 = arith.addf %69, %90 : vector<16x32xf32>
    %92 = vector.extract_strided_slice %46 {offsets = [0, 0, 16], sizes = [2, 8, 8], strides = [1, 1, 1]} : vector<2x8x96xf32> to vector<2x8x8xf32>
    %93 = vector.extract_strided_slice %46 {offsets = [0, 0, 48], sizes = [2, 8, 8], strides = [1, 1, 1]} : vector<2x8x96xf32> to vector<2x8x8xf32>
    %94 = vector.extract_strided_slice %46 {offsets = [0, 0, 80], sizes = [2, 8, 8], strides = [1, 1, 1]} : vector<2x8x96xf32> to vector<2x8x8xf32>
    "tpu.trace_start"() <{level = 10 : i32, message = "bqd,bkd->bqk"}> : () -> ()
    %cst_38 = arith.constant dense<0.000000e+00> : vector<2x8x8xf32>
    %95 = tpu.matmul %92, %93, %cst_38 {dimension_numbers = #tpu.dot_dimension_numbers<[2], [2], [1], [1], [0, 0, 0, 1, 1, 1], [0], [0]>} : vector<2x8x8xf32>, vector<2x8x8xf32>, vector<2x8x8xf32> -> vector<2x8x8xf32>
    "tpu.trace_stop"() : () -> ()
    %cst_39 = arith.constant 0.353553385 : f32
    %96 = vector.broadcast %cst_39 : f32 to vector<2x8x8xf32>
    %97 = arith.mulf %95, %96 : vector<2x8x8xf32>
    %98 = arith.addf %97, %2 : vector<2x8x8xf32>
    %cst_40 = arith.constant dense<0xFF800000> : vector<2x8xf32>
    %99 = vector.multi_reduction <maximumf>, %98, %cst_40 [2] : vector<2x8x8xf32> to vector<2x8xf32>
    %100 = vector.shape_cast %99 : vector<2x8xf32> to vector<2x8x1xf32>
    %101 = vector.broadcast %100 : vector<2x8x1xf32> to vector<2x8x8xf32>
    %102 = arith.subf %98, %101 : vector<2x8x8xf32>
    %103 = math.exp %102 : vector<2x8x8xf32>
    %cst_41 = arith.constant dense<0.000000e+00> : vector<2x8xf32>
    %104 = vector.multi_reduction <add>, %103, %cst_41 [2] : vector<2x8x8xf32> to vector<2x8xf32>
    %105 = vector.shape_cast %104 : vector<2x8xf32> to vector<2x8x1xf32>
    %106 = tpu.reciprocal %105 {approx = true} : vector<2x8x1xf32> -> vector<2x8x1xf32>
    %107 = vector.broadcast %106 : vector<2x8x1xf32> to vector<2x8x8xf32>
    %108 = arith.mulf %103, %107 : vector<2x8x8xf32>
    "tpu.trace_start"() <{level = 10 : i32, message = "bqk,bkd->bqd"}> : () -> ()
    %cst_42 = arith.constant dense<0.000000e+00> : vector<2x8x8xf32>
    %109 = tpu.matmul %108, %94, %cst_42 {dimension_numbers = #tpu.dot_dimension_numbers<[2], [1], [1], [2], [0, 0, 0, 1, 1, 2], [0], [0]>} : vector<2x8x8xf32>, vector<2x8x8xf32>, vector<2x8x8xf32> -> vector<2x8x8xf32>
    "tpu.trace_stop"() : () -> ()
    %110 = vector.shape_cast %109 : vector<2x8x8xf32> to vector<16x8xf32>
    %111 = vector.extract_strided_slice %6 {offsets = [16, 0], sizes = [8, 32], strides = [1, 1]} : vector<32x32xf32> to vector<8x32xf32>
    %cst_43 = arith.constant dense<0.000000e+00> : vector<16x32xf32>
    %112 = tpu.matmul %110, %111, %cst_43 {dimension_numbers = #tpu.dot_dimension_numbers<[1], [0], [0], [1], [0, 0, 1, 1], [], []>} : vector<16x8xf32>, vector<8x32xf32>, vector<16x32xf32> -> vector<16x32xf32>
    %113 = arith.addf %91, %112 : vector<16x32xf32>
    %114 = vector.extract_strided_slice %46 {offsets = [0, 0, 24], sizes = [2, 8, 8], strides = [1, 1, 1]} : vector<2x8x96xf32> to vector<2x8x8xf32>
    %115 = vector.extract_strided_slice %46 {offsets = [0, 0, 56], sizes = [2, 8, 8], strides = [1, 1, 1]} : vector<2x8x96xf32> to vector<2x8x8xf32>
    %116 = vector.extract_strided_slice %46 {offsets = [0, 0, 88], sizes = [2, 8, 8], strides = [1, 1, 1]} : vector<2x8x96xf32> to vector<2x8x8xf32>
    "tpu.trace_start"() <{level = 10 : i32, message = "bqd,bkd->bqk"}> : () -> ()
    %cst_44 = arith.constant dense<0.000000e+00> : vector<2x8x8xf32>
    %117 = tpu.matmul %114, %115, %cst_44 {dimension_numbers = #tpu.dot_dimension_numbers<[2], [2], [1], [1], [0, 0, 0, 1, 1, 1], [0], [0]>} : vector<2x8x8xf32>, vector<2x8x8xf32>, vector<2x8x8xf32> -> vector<2x8x8xf32>
    "tpu.trace_stop"() : () -> ()
    %cst_45 = arith.constant 0.353553385 : f32
    %118 = vector.broadcast %cst_45 : f32 to vector<2x8x8xf32>
    %119 = arith.mulf %117, %118 : vector<2x8x8xf32>
    %120 = arith.addf %119, %2 : vector<2x8x8xf32>
    %cst_46 = arith.constant dense<0xFF800000> : vector<2x8xf32>
    %121 = vector.multi_reduction <maximumf>, %120, %cst_46 [2] : vector<2x8x8xf32> to vector<2x8xf32>
    %122 = vector.shape_cast %121 : vector<2x8xf32> to vector<2x8x1xf32>
    %123 = vector.broadcast %122 : vector<2x8x1xf32> to vector<2x8x8xf32>
    %124 = arith.subf %120, %123 : vector<2x8x8xf32>
    %125 = math.exp %124 : vector<2x8x8xf32>
    %cst_47 = arith.constant dense<0.000000e+00> : vector<2x8xf32>
    %126 = vector.multi_reduction <add>, %125, %cst_47 [2] : vector<2x8x8xf32> to vector<2x8xf32>
    %127 = vector.shape_cast %126 : vector<2x8xf32> to vector<2x8x1xf32>
    %128 = tpu.reciprocal %127 {approx = true} : vector<2x8x1xf32> -> vector<2x8x1xf32>
    %129 = vector.broadcast %128 : vector<2x8x1xf32> to vector<2x8x8xf32>
    %130 = arith.mulf %125, %129 : vector<2x8x8xf32>
    "tpu.trace_start"() <{level = 10 : i32, message = "bqk,bkd->bqd"}> : () -> ()
    %cst_48 = arith.constant dense<0.000000e+00> : vector<2x8x8xf32>
    %131 = tpu.matmul %130, %116, %cst_48 {dimension_numbers = #tpu.dot_dimension_numbers<[2], [1], [1], [2], [0, 0, 0, 1, 1, 2], [0], [0]>} : vector<2x8x8xf32>, vector<2x8x8xf32>, vector<2x8x8xf32> -> vector<2x8x8xf32>
    "tpu.trace_stop"() : () -> ()
    %132 = vector.shape_cast %131 : vector<2x8x8xf32> to vector<16x8xf32>
    %133 = vector.extract_strided_slice %6 {offsets = [24, 0], sizes = [8, 32], strides = [1, 1]} : vector<32x32xf32> to vector<8x32xf32>
    %cst_49 = arith.constant dense<0.000000e+00> : vector<16x32xf32>
    %134 = tpu.matmul %132, %133, %cst_49 {dimension_numbers = #tpu.dot_dimension_numbers<[1], [0], [0], [1], [0, 0, 1, 1], [], []>} : vector<16x8xf32>, vector<8x32xf32>, vector<16x32xf32> -> vector<16x32xf32>
    %135 = arith.addf %113, %134 : vector<16x32xf32>
    %136 = arith.addf %1, %135 : vector<16x32xf32>
    %137 = vector.broadcast %14 : vector<1x32xf32> to vector<16x32xf32>
    %138 = arith.addf %136, %137 : vector<16x32xf32>
    %cst_50 = arith.constant dense<0.000000e+00> : vector<16xf32>
    %139 = vector.multi_reduction <add>, %138, %cst_50 [1] : vector<16x32xf32> to vector<16xf32>
    %140 = vector.shape_cast %139 : vector<16xf32> to vector<16x1xf32>
    %cst_51 = arith.constant 3.200000e+01 : f32
    %141 = vector.broadcast %cst_51 : f32 to vector<16x1xf32>
    %142 = arith.divf %140, %141 : vector<16x1xf32>
    %143 = vector.broadcast %142 : vector<16x1xf32> to vector<16x32xf32>
    %144 = arith.subf %138, %143 : vector<16x32xf32>
    %145 = arith.mulf %144, %144 : vector<16x32xf32>
    %cst_52 = arith.constant dense<0.000000e+00> : vector<16xf32>
    %146 = vector.multi_reduction <add>, %145, %cst_52 [1] : vector<16x32xf32> to vector<16xf32>
    %147 = vector.shape_cast %146 : vector<16xf32> to vector<16x1xf32>
    %cst_53 = arith.constant 0.0322580636 : f32
    %148 = vector.broadcast %cst_53 : f32 to vector<16x1xf32>
    %149 = arith.mulf %147, %148 : vector<16x1xf32>
    %150 = math.sqrt %149 : vector<16x1xf32>
    %151 = vector.broadcast %142 : vector<16x1xf32> to vector<16x32xf32>
    %152 = arith.subf %138, %151 : vector<16x32xf32>
    %153 = vector.broadcast %19 : vector<1x32xf32> to vector<16x32xf32>
    %154 = arith.mulf %153, %152 : vector<16x32xf32>
    %cst_54 = arith.constant 9.99999997E-7 : f32
    %155 = vector.broadcast %cst_54 : f32 to vector<16x1xf32>
    %156 = arith.addf %150, %155 : vector<16x1xf32>
    %157 = vector.broadcast %156 : vector<16x1xf32> to vector<16x32xf32>
    %158 = arith.divf %154, %157 : vector<16x32xf32>
    %159 = vector.broadcast %20 : vector<1x32xf32> to vector<16x32xf32>
    %160 = arith.addf %158, %159 : vector<16x32xf32>
    %cst_55 = arith.constant dense<0.000000e+00> : vector<16x64xf32>
    %161 = tpu.matmul %160, %8, %cst_55 {dimension_numbers = #tpu.dot_dimension_numbers<[1], [0], [0], [1], [0, 0, 1, 1], [], []>} : vector<16x32xf32>, vector<32x64xf32>, vector<16x64xf32> -> vector<16x64xf32>
    %162 = vector.broadcast %15 : vector<1x64xf32> to vector<16x64xf32>
    %163 = arith.addf %161, %162 : vector<16x64xf32>
    %cst_56 = arith.constant 0.000000e+00 : f32
    %164 = vector.broadcast %cst_56 : f32 to vector<16x64xf32>
    %165 = arith.maximumf %163, %164 : vector<16x64xf32>
    %cst_57 = arith.constant dense<0.000000e+00> : vector<16x32xf32>
    %166 = tpu.matmul %165, %10, %cst_57 {dimension_numbers = #tpu.dot_dimension_numbers<[1], [0], [0], [1], [0, 0, 1, 1], [], []>} : vector<16x64xf32>, vector<64x32xf32>, vector<16x32xf32> -> vector<16x32xf32>
    %167 = arith.addf %138, %166 : vector<16x32xf32>
    %168 = vector.broadcast %16 : vector<1x32xf32> to vector<16x32xf32>
    %169 = arith.addf %167, %168 : vector<16x32xf32>
    %c1 = arith.constant 1 : index
    %c0_58 = arith.constant 0 : index
    %c0_59 = arith.constant 0 : index
    %170 = vector.load %arg2[%c1, %c0_58, %c0_59] : memref<2x32x96xf32, #tpu.memory_space<vmem>>, vector<1x32x96xf32>
    %171 = vector.shape_cast %170 : vector<1x32x96xf32> to vector<32x96xf32>
    %c1_60 = arith.constant 1 : index
    %c0_61 = arith.constant 0 : index
    %c0_62 = arith.constant 0 : index
    %172 = vector.load %arg3[%c1_60, %c0_61, %c0_62] : memref<2x32x32xf32, #tpu.memory_space<vmem>>, vector<1x32x32xf32>
    %173 = vector.shape_cast %172 : vector<1x32x32xf32> to vector<32x32xf32>
    %c1_63 = arith.constant 1 : index
    %c0_64 = arith.constant 0 : index
    %c0_65 = arith.constant 0 : index
    %174 = vector.load %arg4[%c1_63, %c0_64, %c0_65] : memref<2x32x64xf32, #tpu.memory_space<vmem>>, vector<1x32x64xf32>
    %175 = vector.shape_cast %174 : vector<1x32x64xf32> to vector<32x64xf32>
    %c1_66 = arith.constant 1 : index
    %c0_67 = arith.constant 0 : index
    %c0_68 = arith.constant 0 : index
    %176 = vector.load %arg5[%c1_66, %c0_67, %c0_68] : memref<2x64x32xf32, #tpu.memory_space<vmem>>, vector<1x64x32xf32>
    %177 = vector.shape_cast %176 : vector<1x64x32xf32> to vector<64x32xf32>
    %c1_69 = arith.constant 1 : index
    %c0_70 = arith.constant 0 : index
    %c0_71 = arith.constant 0 : index
    %178 = vector.load %arg6[%c1_69, %c0_70, %c0_71] : memref<2x8x96xf32, #tpu.memory_space<vmem>>, vector<1x8x96xf32>
    %179 = vector.shape_cast %178 : vector<1x8x96xf32> to vector<8x96xf32>
    %180 = vector.extract_strided_slice %179 {offsets = [0, 0], sizes = [1, 96], strides = [1, 1]} : vector<8x96xf32> to vector<1x96xf32>
    %181 = vector.extract_strided_slice %179 {offsets = [1, 0], sizes = [1, 32], strides = [1, 1]} : vector<8x96xf32> to vector<1x32xf32>
    %182 = vector.extract_strided_slice %179 {offsets = [2, 0], sizes = [1, 64], strides = [1, 1]} : vector<8x96xf32> to vector<1x64xf32>
    %183 = vector.extract_strided_slice %179 {offsets = [3, 0], sizes = [1, 32], strides = [1, 1]} : vector<8x96xf32> to vector<1x32xf32>
    %184 = vector.extract_strided_slice %179 {offsets = [4, 0], sizes = [1, 32], strides = [1, 1]} : vector<8x96xf32> to vector<1x32xf32>
    %185 = vector.extract_strided_slice %179 {offsets = [5, 0], sizes = [1, 32], strides = [1, 1]} : vector<8x96xf32> to vector<1x32xf32>
    %186 = vector.extract_strided_slice %179 {offsets = [6, 0], sizes = [1, 32], strides = [1, 1]} : vector<8x96xf32> to vector<1x32xf32>
    %187 = vector.extract_strided_slice %179 {offsets = [7, 0], sizes = [1, 32], strides = [1, 1]} : vector<8x96xf32> to vector<1x32xf32>
    %cst_72 = arith.constant dense<0.000000e+00> : vector<16xf32>
    %188 = vector.multi_reduction <add>, %169, %cst_72 [1] : vector<16x32xf32> to vector<16xf32>
    %189 = vector.shape_cast %188 : vector<16xf32> to vector<16x1xf32>
    %cst_73 = arith.constant 3.200000e+01 : f32
    %190 = vector.broadcast %cst_73 : f32 to vector<16x1xf32>
    %191 = arith.divf %189, %190 : vector<16x1xf32>
    %192 = vector.broadcast %191 : vector<16x1xf32> to vector<16x32xf32>
    %193 = arith.subf %169, %192 : vector<16x32xf32>
    %194 = arith.mulf %193, %193 : vector<16x32xf32>
    %cst_74 = arith.constant dense<0.000000e+00> : vector<16xf32>
    %195 = vector.multi_reduction <add>, %194, %cst_74 [1] : vector<16x32xf32> to vector<16xf32>
    %196 = vector.shape_cast %195 : vector<16xf32> to vector<16x1xf32>
    %cst_75 = arith.constant 0.0322580636 : f32
    %197 = vector.broadcast %cst_75 : f32 to vector<16x1xf32>
    %198 = arith.mulf %196, %197 : vector<16x1xf32>
    %199 = math.sqrt %198 : vector<16x1xf32>
    %200 = vector.broadcast %191 : vector<16x1xf32> to vector<16x32xf32>
    %201 = arith.subf %169, %200 : vector<16x32xf32>
    %202 = vector.broadcast %184 : vector<1x32xf32> to vector<16x32xf32>
    %203 = arith.mulf %202, %201 : vector<16x32xf32>
    %cst_76 = arith.constant 9.99999997E-7 : f32
    %204 = vector.broadcast %cst_76 : f32 to vector<16x1xf32>
    %205 = arith.addf %199, %204 : vector<16x1xf32>
    %206 = vector.broadcast %205 : vector<16x1xf32> to vector<16x32xf32>
    %207 = arith.divf %203, %206 : vector<16x32xf32>
    %208 = vector.broadcast %185 : vector<1x32xf32> to vector<16x32xf32>
    %209 = arith.addf %207, %208 : vector<16x32xf32>
    %cst_77 = arith.constant dense<0.000000e+00> : vector<16x96xf32>
    %210 = tpu.matmul %209, %171, %cst_77 {dimension_numbers = #tpu.dot_dimension_numbers<[1], [0], [0], [1], [0, 0, 1, 1], [], []>} : vector<16x32xf32>, vector<32x96xf32>, vector<16x96xf32> -> vector<16x96xf32>
    %211 = vector.broadcast %180 : vector<1x96xf32> to vector<16x96xf32>
    %212 = arith.addf %210, %211 : vector<16x96xf32>
    %213 = vector.shape_cast %212 : vector<16x96xf32> to vector<2x8x96xf32>
    %cst_78 = arith.constant 0.000000e+00 : f32
    %214 = vector.broadcast %cst_78 : f32 to vector<16x32xf32>
    %215 = vector.extract_strided_slice %213 {offsets = [0, 0, 0], sizes = [2, 8, 8], strides = [1, 1, 1]} : vector<2x8x96xf32> to vector<2x8x8xf32>
    %216 = vector.extract_strided_slice %213 {offsets = [0, 0, 32], sizes = [2, 8, 8], strides = [1, 1, 1]} : vector<2x8x96xf32> to vector<2x8x8xf32>
    %217 = vector.extract_strided_slice %213 {offsets = [0, 0, 64], sizes = [2, 8, 8], strides = [1, 1, 1]} : vector<2x8x96xf32> to vector<2x8x8xf32>
    "tpu.trace_start"() <{level = 10 : i32, message = "bqd,bkd->bqk"}> : () -> ()
    %cst_79 = arith.constant dense<0.000000e+00> : vector<2x8x8xf32>
    %218 = tpu.matmul %215, %216, %cst_79 {dimension_numbers = #tpu.dot_dimension_numbers<[2], [2], [1], [1], [0, 0, 0, 1, 1, 1], [0], [0]>} : vector<2x8x8xf32>, vector<2x8x8xf32>, vector<2x8x8xf32> -> vector<2x8x8xf32>
    "tpu.trace_stop"() : () -> ()
    %cst_80 = arith.constant 0.353553385 : f32
    %219 = vector.broadcast %cst_80 : f32 to vector<2x8x8xf32>
    %220 = arith.mulf %218, %219 : vector<2x8x8xf32>
    %221 = arith.addf %220, %2 : vector<2x8x8xf32>
    %cst_81 = arith.constant dense<0xFF800000> : vector<2x8xf32>
    %222 = vector.multi_reduction <maximumf>, %221, %cst_81 [2] : vector<2x8x8xf32> to vector<2x8xf32>
    %223 = vector.shape_cast %222 : vector<2x8xf32> to vector<2x8x1xf32>
    %224 = vector.broadcast %223 : vector<2x8x1xf32> to vector<2x8x8xf32>
    %225 = arith.subf %221, %224 : vector<2x8x8xf32>
    %226 = math.exp %225 : vector<2x8x8xf32>
    %cst_82 = arith.constant dense<0.000000e+00> : vector<2x8xf32>
    %227 = vector.multi_reduction <add>, %226, %cst_82 [2] : vector<2x8x8xf32> to vector<2x8xf32>
    %228 = vector.shape_cast %227 : vector<2x8xf32> to vector<2x8x1xf32>
    %229 = tpu.reciprocal %228 {approx = true} : vector<2x8x1xf32> -> vector<2x8x1xf32>
    %230 = vector.broadcast %229 : vector<2x8x1xf32> to vector<2x8x8xf32>
    %231 = arith.mulf %226, %230 : vector<2x8x8xf32>
    "tpu.trace_start"() <{level = 10 : i32, message = "bqk,bkd->bqd"}> : () -> ()
    %cst_83 = arith.constant dense<0.000000e+00> : vector<2x8x8xf32>
    %232 = tpu.matmul %231, %217, %cst_83 {dimension_numbers = #tpu.dot_dimension_numbers<[2], [1], [1], [2], [0, 0, 0, 1, 1, 2], [0], [0]>} : vector<2x8x8xf32>, vector<2x8x8xf32>, vector<2x8x8xf32> -> vector<2x8x8xf32>
    "tpu.trace_stop"() : () -> ()
    %233 = vector.shape_cast %232 : vector<2x8x8xf32> to vector<16x8xf32>
    %234 = vector.extract_strided_slice %173 {offsets = [0, 0], sizes = [8, 32], strides = [1, 1]} : vector<32x32xf32> to vector<8x32xf32>
    %cst_84 = arith.constant dense<0.000000e+00> : vector<16x32xf32>
    %235 = tpu.matmul %233, %234, %cst_84 {dimension_numbers = #tpu.dot_dimension_numbers<[1], [0], [0], [1], [0, 0, 1, 1], [], []>} : vector<16x8xf32>, vector<8x32xf32>, vector<16x32xf32> -> vector<16x32xf32>
    %236 = arith.addf %214, %235 : vector<16x32xf32>
    %237 = vector.extract_strided_slice %213 {offsets = [0, 0, 8], sizes = [2, 8, 8], strides = [1, 1, 1]} : vector<2x8x96xf32> to vector<2x8x8xf32>
    %238 = vector.extract_strided_slice %213 {offsets = [0, 0, 40], sizes = [2, 8, 8], strides = [1, 1, 1]} : vector<2x8x96xf32> to vector<2x8x8xf32>
    %239 = vector.extract_strided_slice %213 {offsets = [0, 0, 72], sizes = [2, 8, 8], strides = [1, 1, 1]} : vector<2x8x96xf32> to vector<2x8x8xf32>
    "tpu.trace_start"() <{level = 10 : i32, message = "bqd,bkd->bqk"}> : () -> ()
    %cst_85 = arith.constant dense<0.000000e+00> : vector<2x8x8xf32>
    %240 = tpu.matmul %237, %238, %cst_85 {dimension_numbers = #tpu.dot_dimension_numbers<[2], [2], [1], [1], [0, 0, 0, 1, 1, 1], [0], [0]>} : vector<2x8x8xf32>, vector<2x8x8xf32>, vector<2x8x8xf32> -> vector<2x8x8xf32>
    "tpu.trace_stop"() : () -> ()
    %cst_86 = arith.constant 0.353553385 : f32
    %241 = vector.broadcast %cst_86 : f32 to vector<2x8x8xf32>
    %242 = arith.mulf %240, %241 : vector<2x8x8xf32>
    %243 = arith.addf %242, %2 : vector<2x8x8xf32>
    %cst_87 = arith.constant dense<0xFF800000> : vector<2x8xf32>
    %244 = vector.multi_reduction <maximumf>, %243, %cst_87 [2] : vector<2x8x8xf32> to vector<2x8xf32>
    %245 = vector.shape_cast %244 : vector<2x8xf32> to vector<2x8x1xf32>
    %246 = vector.broadcast %245 : vector<2x8x1xf32> to vector<2x8x8xf32>
    %247 = arith.subf %243, %246 : vector<2x8x8xf32>
    %248 = math.exp %247 : vector<2x8x8xf32>
    %cst_88 = arith.constant dense<0.000000e+00> : vector<2x8xf32>
    %249 = vector.multi_reduction <add>, %248, %cst_88 [2] : vector<2x8x8xf32> to vector<2x8xf32>
    %250 = vector.shape_cast %249 : vector<2x8xf32> to vector<2x8x1xf32>
    %251 = tpu.reciprocal %250 {approx = true} : vector<2x8x1xf32> -> vector<2x8x1xf32>
    %252 = vector.broadcast %251 : vector<2x8x1xf32> to vector<2x8x8xf32>
    %253 = arith.mulf %248, %252 : vector<2x8x8xf32>
    "tpu.trace_start"() <{level = 10 : i32, message = "bqk,bkd->bqd"}> : () -> ()
    %cst_89 = arith.constant dense<0.000000e+00> : vector<2x8x8xf32>
    %254 = tpu.matmul %253, %239, %cst_89 {dimension_numbers = #tpu.dot_dimension_numbers<[2], [1], [1], [2], [0, 0, 0, 1, 1, 2], [0], [0]>} : vector<2x8x8xf32>, vector<2x8x8xf32>, vector<2x8x8xf32> -> vector<2x8x8xf32>
    "tpu.trace_stop"() : () -> ()
    %255 = vector.shape_cast %254 : vector<2x8x8xf32> to vector<16x8xf32>
    %256 = vector.extract_strided_slice %173 {offsets = [8, 0], sizes = [8, 32], strides = [1, 1]} : vector<32x32xf32> to vector<8x32xf32>
    %cst_90 = arith.constant dense<0.000000e+00> : vector<16x32xf32>
    %257 = tpu.matmul %255, %256, %cst_90 {dimension_numbers = #tpu.dot_dimension_numbers<[1], [0], [0], [1], [0, 0, 1, 1], [], []>} : vector<16x8xf32>, vector<8x32xf32>, vector<16x32xf32> -> vector<16x32xf32>
    %258 = arith.addf %236, %257 : vector<16x32xf32>
    %259 = vector.extract_strided_slice %213 {offsets = [0, 0, 16], sizes = [2, 8, 8], strides = [1, 1, 1]} : vector<2x8x96xf32> to vector<2x8x8xf32>
    %260 = vector.extract_strided_slice %213 {offsets = [0, 0, 48], sizes = [2, 8, 8], strides = [1, 1, 1]} : vector<2x8x96xf32> to vector<2x8x8xf32>
    %261 = vector.extract_strided_slice %213 {offsets = [0, 0, 80], sizes = [2, 8, 8], strides = [1, 1, 1]} : vector<2x8x96xf32> to vector<2x8x8xf32>
    "tpu.trace_start"() <{level = 10 : i32, message = "bqd,bkd->bqk"}> : () -> ()
    %cst_91 = arith.constant dense<0.000000e+00> : vector<2x8x8xf32>
    %262 = tpu.matmul %259, %260, %cst_91 {dimension_numbers = #tpu.dot_dimension_numbers<[2], [2], [1], [1], [0, 0, 0, 1, 1, 1], [0], [0]>} : vector<2x8x8xf32>, vector<2x8x8xf32>, vector<2x8x8xf32> -> vector<2x8x8xf32>
    "tpu.trace_stop"() : () -> ()
    %cst_92 = arith.constant 0.353553385 : f32
    %263 = vector.broadcast %cst_92 : f32 to vector<2x8x8xf32>
    %264 = arith.mulf %262, %263 : vector<2x8x8xf32>
    %265 = arith.addf %264, %2 : vector<2x8x8xf32>
    %cst_93 = arith.constant dense<0xFF800000> : vector<2x8xf32>
    %266 = vector.multi_reduction <maximumf>, %265, %cst_93 [2] : vector<2x8x8xf32> to vector<2x8xf32>
    %267 = vector.shape_cast %266 : vector<2x8xf32> to vector<2x8x1xf32>
    %268 = vector.broadcast %267 : vector<2x8x1xf32> to vector<2x8x8xf32>
    %269 = arith.subf %265, %268 : vector<2x8x8xf32>
    %270 = math.exp %269 : vector<2x8x8xf32>
    %cst_94 = arith.constant dense<0.000000e+00> : vector<2x8xf32>
    %271 = vector.multi_reduction <add>, %270, %cst_94 [2] : vector<2x8x8xf32> to vector<2x8xf32>
    %272 = vector.shape_cast %271 : vector<2x8xf32> to vector<2x8x1xf32>
    %273 = tpu.reciprocal %272 {approx = true} : vector<2x8x1xf32> -> vector<2x8x1xf32>
    %274 = vector.broadcast %273 : vector<2x8x1xf32> to vector<2x8x8xf32>
    %275 = arith.mulf %270, %274 : vector<2x8x8xf32>
    "tpu.trace_start"() <{level = 10 : i32, message = "bqk,bkd->bqd"}> : () -> ()
    %cst_95 = arith.constant dense<0.000000e+00> : vector<2x8x8xf32>
    %276 = tpu.matmul %275, %261, %cst_95 {dimension_numbers = #tpu.dot_dimension_numbers<[2], [1], [1], [2], [0, 0, 0, 1, 1, 2], [0], [0]>} : vector<2x8x8xf32>, vector<2x8x8xf32>, vector<2x8x8xf32> -> vector<2x8x8xf32>
    "tpu.trace_stop"() : () -> ()
    %277 = vector.shape_cast %276 : vector<2x8x8xf32> to vector<16x8xf32>
    %278 = vector.extract_strided_slice %173 {offsets = [16, 0], sizes = [8, 32], strides = [1, 1]} : vector<32x32xf32> to vector<8x32xf32>
    %cst_96 = arith.constant dense<0.000000e+00> : vector<16x32xf32>
    %279 = tpu.matmul %277, %278, %cst_96 {dimension_numbers = #tpu.dot_dimension_numbers<[1], [0], [0], [1], [0, 0, 1, 1], [], []>} : vector<16x8xf32>, vector<8x32xf32>, vector<16x32xf32> -> vector<16x32xf32>
    %280 = arith.addf %258, %279 : vector<16x32xf32>
    %281 = vector.extract_strided_slice %213 {offsets = [0, 0, 24], sizes = [2, 8, 8], strides = [1, 1, 1]} : vector<2x8x96xf32> to vector<2x8x8xf32>
    %282 = vector.extract_strided_slice %213 {offsets = [0, 0, 56], sizes = [2, 8, 8], strides = [1, 1, 1]} : vector<2x8x96xf32> to vector<2x8x8xf32>
    %283 = vector.extract_strided_slice %213 {offsets = [0, 0, 88], sizes = [2, 8, 8], strides = [1, 1, 1]} : vector<2x8x96xf32> to vector<2x8x8xf32>
    "tpu.trace_start"() <{level = 10 : i32, message = "bqd,bkd->bqk"}> : () -> ()
    %cst_97 = arith.constant dense<0.000000e+00> : vector<2x8x8xf32>
    %284 = tpu.matmul %281, %282, %cst_97 {dimension_numbers = #tpu.dot_dimension_numbers<[2], [2], [1], [1], [0, 0, 0, 1, 1, 1], [0], [0]>} : vector<2x8x8xf32>, vector<2x8x8xf32>, vector<2x8x8xf32> -> vector<2x8x8xf32>
    "tpu.trace_stop"() : () -> ()
    %cst_98 = arith.constant 0.353553385 : f32
    %285 = vector.broadcast %cst_98 : f32 to vector<2x8x8xf32>
    %286 = arith.mulf %284, %285 : vector<2x8x8xf32>
    %287 = arith.addf %286, %2 : vector<2x8x8xf32>
    %cst_99 = arith.constant dense<0xFF800000> : vector<2x8xf32>
    %288 = vector.multi_reduction <maximumf>, %287, %cst_99 [2] : vector<2x8x8xf32> to vector<2x8xf32>
    %289 = vector.shape_cast %288 : vector<2x8xf32> to vector<2x8x1xf32>
    %290 = vector.broadcast %289 : vector<2x8x1xf32> to vector<2x8x8xf32>
    %291 = arith.subf %287, %290 : vector<2x8x8xf32>
    %292 = math.exp %291 : vector<2x8x8xf32>
    %cst_100 = arith.constant dense<0.000000e+00> : vector<2x8xf32>
    %293 = vector.multi_reduction <add>, %292, %cst_100 [2] : vector<2x8x8xf32> to vector<2x8xf32>
    %294 = vector.shape_cast %293 : vector<2x8xf32> to vector<2x8x1xf32>
    %295 = tpu.reciprocal %294 {approx = true} : vector<2x8x1xf32> -> vector<2x8x1xf32>
    %296 = vector.broadcast %295 : vector<2x8x1xf32> to vector<2x8x8xf32>
    %297 = arith.mulf %292, %296 : vector<2x8x8xf32>
    "tpu.trace_start"() <{level = 10 : i32, message = "bqk,bkd->bqd"}> : () -> ()
    %cst_101 = arith.constant dense<0.000000e+00> : vector<2x8x8xf32>
    %298 = tpu.matmul %297, %283, %cst_101 {dimension_numbers = #tpu.dot_dimension_numbers<[2], [1], [1], [2], [0, 0, 0, 1, 1, 2], [0], [0]>} : vector<2x8x8xf32>, vector<2x8x8xf32>, vector<2x8x8xf32> -> vector<2x8x8xf32>
    "tpu.trace_stop"() : () -> ()
    %299 = vector.shape_cast %298 : vector<2x8x8xf32> to vector<16x8xf32>
    %300 = vector.extract_strided_slice %173 {offsets = [24, 0], sizes = [8, 32], strides = [1, 1]} : vector<32x32xf32> to vector<8x32xf32>
    %cst_102 = arith.constant dense<0.000000e+00> : vector<16x32xf32>
    %301 = tpu.matmul %299, %300, %cst_102 {dimension_numbers = #tpu.dot_dimension_numbers<[1], [0], [0], [1], [0, 0, 1, 1], [], []>} : vector<16x8xf32>, vector<8x32xf32>, vector<16x32xf32> -> vector<16x32xf32>
    %302 = arith.addf %280, %301 : vector<16x32xf32>
    %303 = arith.addf %169, %302 : vector<16x32xf32>
    %304 = vector.broadcast %181 : vector<1x32xf32> to vector<16x32xf32>
    %305 = arith.addf %303, %304 : vector<16x32xf32>
    %cst_103 = arith.constant dense<0.000000e+00> : vector<16xf32>
    %306 = vector.multi_reduction <add>, %305, %cst_103 [1] : vector<16x32xf32> to vector<16xf32>
    %307 = vector.shape_cast %306 : vector<16xf32> to vector<16x1xf32>
    %cst_104 = arith.constant 3.200000e+01 : f32
    %308 = vector.broadcast %cst_104 : f32 to vector<16x1xf32>
    %309 = arith.divf %307, %308 : vector<16x1xf32>
    %310 = vector.broadcast %309 : vector<16x1xf32> to vector<16x32xf32>
    %311 = arith.subf %305, %310 : vector<16x32xf32>
    %312 = arith.mulf %311, %311 : vector<16x32xf32>
    %cst_105 = arith.constant dense<0.000000e+00> : vector<16xf32>
    %313 = vector.multi_reduction <add>, %312, %cst_105 [1] : vector<16x32xf32> to vector<16xf32>
    %314 = vector.shape_cast %313 : vector<16xf32> to vector<16x1xf32>
    %cst_106 = arith.constant 0.0322580636 : f32
    %315 = vector.broadcast %cst_106 : f32 to vector<16x1xf32>
    %316 = arith.mulf %314, %315 : vector<16x1xf32>
    %317 = math.sqrt %316 : vector<16x1xf32>
    %318 = vector.broadcast %309 : vector<16x1xf32> to vector<16x32xf32>
    %319 = arith.subf %305, %318 : vector<16x32xf32>
    %320 = vector.broadcast %186 : vector<1x32xf32> to vector<16x32xf32>
    %321 = arith.mulf %320, %319 : vector<16x32xf32>
    %cst_107 = arith.constant 9.99999997E-7 : f32
    %322 = vector.broadcast %cst_107 : f32 to vector<16x1xf32>
    %323 = arith.addf %317, %322 : vector<16x1xf32>
    %324 = vector.broadcast %323 : vector<16x1xf32> to vector<16x32xf32>
    %325 = arith.divf %321, %324 : vector<16x32xf32>
    %326 = vector.broadcast %187 : vector<1x32xf32> to vector<16x32xf32>
    %327 = arith.addf %325, %326 : vector<16x32xf32>
    %cst_108 = arith.constant dense<0.000000e+00> : vector<16x64xf32>
    %328 = tpu.matmul %327, %175, %cst_108 {dimension_numbers = #tpu.dot_dimension_numbers<[1], [0], [0], [1], [0, 0, 1, 1], [], []>} : vector<16x32xf32>, vector<32x64xf32>, vector<16x64xf32> -> vector<16x64xf32>
    %329 = vector.broadcast %182 : vector<1x64xf32> to vector<16x64xf32>
    %330 = arith.addf %328, %329 : vector<16x64xf32>
    %cst_109 = arith.constant 0.000000e+00 : f32
    %331 = vector.broadcast %cst_109 : f32 to vector<16x64xf32>
    %332 = arith.maximumf %330, %331 : vector<16x64xf32>
    %cst_110 = arith.constant dense<0.000000e+00> : vector<16x32xf32>
    %333 = tpu.matmul %332, %177, %cst_110 {dimension_numbers = #tpu.dot_dimension_numbers<[1], [0], [0], [1], [0, 0, 1, 1], [], []>} : vector<16x64xf32>, vector<64x32xf32>, vector<16x32xf32> -> vector<16x32xf32>
    %334 = arith.addf %305, %333 : vector<16x32xf32>
    %335 = vector.broadcast %183 : vector<1x32xf32> to vector<16x32xf32>
    %336 = arith.addf %334, %335 : vector<16x32xf32>
    %c0_111 = arith.constant 0 : index
    %c0_112 = arith.constant 0 : index
    %337 = vector.load %arg7[%c0_111, %c0_112] : memref<2x32xf32, #tpu.memory_space<vmem>>, vector<1x32xf32>
    %c1_113 = arith.constant 1 : index
    %c0_114 = arith.constant 0 : index
    %338 = vector.load %arg7[%c1_113, %c0_114] : memref<2x32xf32, #tpu.memory_space<vmem>>, vector<1x32xf32>
    %cst_115 = arith.constant dense<0.000000e+00> : vector<16xf32>
    %339 = vector.multi_reduction <add>, %336, %cst_115 [1] : vector<16x32xf32> to vector<16xf32>
    %340 = vector.shape_cast %339 : vector<16xf32> to vector<16x1xf32>
    %cst_116 = arith.constant 3.200000e+01 : f32
    %341 = vector.broadcast %cst_116 : f32 to vector<16x1xf32>
    %342 = arith.divf %340, %341 : vector<16x1xf32>
    %343 = vector.broadcast %342 : vector<16x1xf32> to vector<16x32xf32>
    %344 = arith.subf %336, %343 : vector<16x32xf32>
    %345 = arith.mulf %344, %344 : vector<16x32xf32>
    %cst_117 = arith.constant dense<0.000000e+00> : vector<16xf32>
    %346 = vector.multi_reduction <add>, %345, %cst_117 [1] : vector<16x32xf32> to vector<16xf32>
    %347 = vector.shape_cast %346 : vector<16xf32> to vector<16x1xf32>
    %cst_118 = arith.constant 0.0322580636 : f32
    %348 = vector.broadcast %cst_118 : f32 to vector<16x1xf32>
    %349 = arith.mulf %347, %348 : vector<16x1xf32>
    %350 = math.sqrt %349 : vector<16x1xf32>
    %351 = vector.broadcast %342 : vector<16x1xf32> to vector<16x32xf32>
    %352 = arith.subf %336, %351 : vector<16x32xf32>
    %353 = vector.broadcast %337 : vector<1x32xf32> to vector<16x32xf32>
    %354 = arith.mulf %353, %352 : vector<16x32xf32>
    %cst_119 = arith.constant 9.99999997E-7 : f32
    %355 = vector.broadcast %cst_119 : f32 to vector<16x1xf32>
    %356 = arith.addf %350, %355 : vector<16x1xf32>
    %357 = vector.broadcast %356 : vector<16x1xf32> to vector<16x32xf32>
    %358 = arith.divf %354, %357 : vector<16x32xf32>
    %359 = vector.broadcast %338 : vector<1x32xf32> to vector<16x32xf32>
    %360 = arith.addf %358, %359 : vector<16x32xf32>
    %361 = vector.shape_cast %360 : vector<16x32xf32> to vector<2x8x32xf32>
    %c0_120 = arith.constant 0 : index
    %c0_121 = arith.constant 0 : index
    %c0_122 = arith.constant 0 : index
    %362 = vector.load %arg8[%c0_120, %c0_121, %c0_122] : memref<2x8x32xf32, #tpu.memory_space<vmem>>, vector<2x8x32xf32>
    tpu.vector_store %arg8[%c0_120, %c0_121, %c0_122], %361 {strides = array<i32>} : memref<2x8x32xf32, #tpu.memory_space<vmem>>, vector<2x8x32xf32>,
    return
  }
}

</mosaic_0001>

<llo_original>
// kernel: tpu_custom_call.1
$region0: #{tpu_custom_call.1}
  #allocation0 [shape = 'u32[]', space=smem, size = 0x4, offset = 0x4, fixed_abs, tag = 'smem constant byte address 0x4 - core index']
  #allocation1 [shape = 'u32[144,128]{1,0:T(1,128)}', space=vmem, size = 0x12000, scoped, tag = 'internal scratch']
  %s0 = inlined_call_operand.hbm [shape: f32[2,8,32], index: 0, kind: input, shape index: {}]
  %s1 = inlined_call_operand.hbm [shape: f32[2,8,8], index: 1, kind: input, shape index: {}]
  %s2 = inlined_call_operand.vmem [shape: f32[2,32,96], index: 2, kind: input, shape index: {}]
  %s3 = inlined_call_operand.vmem [shape: f32[2,32,32], index: 3, kind: input, shape index: {}]
  %s4 = inlined_call_operand.vmem [shape: f32[2,32,64], index: 4, kind: input, shape index: {}]
  %s5 = inlined_call_operand.vmem [shape: f32[2,64,32], index: 5, kind: input, shape index: {}]
  %s6 = inlined_call_operand.vmem [shape: f32[2,8,96], index: 6, kind: input, shape index: {}]
  %s7 = inlined_call_operand.vmem [shape: f32[2,32], index: 7, kind: input, shape index: {}]
  %s8 = inlined_call_operand.hbm [shape: f32[2,8,32], index: 8, kind: output, shape index: {}]
  %s9 = sld [smem:[#allocation0]]
  $region50: #{tpu_custom_call.1} parent=0
    _
  %s11 = ssub.s32 1, %s9
  %s12 = scalar_select 0, %s11, %s9
  $region1: #{tpu_custom_call.1} parent=0
    #allocation2 [shape = 'u8[8192]{0}', space=vmem, size = 0x2000, scoped, tag = 'input window, operand 0, single buffered']
    #allocation3 [shape = 's32[1]{0}', space=sflag, size = 0x4, scoped, tag = 'scoped memory for tpu_custom_call.1']
    #allocation4 [shape = 's32[1]{0}', space=sflag, size = 0x4, scoped, tag = 'scoped memory for tpu_custom_call.1']
    #allocation5 [shape = 'u8[8192]{0}', space=vmem, size = 0x2000, scoped, tag = 'input window, operand 1, single buffered']
    #allocation6 [shape = 's32[1]{0}', space=sflag, size = 0x4, scoped, tag = 'scoped memory for tpu_custom_call.1']
    #allocation7 [shape = 'u8[8192]{0}', space=vmem, size = 0x2000, scoped, tag = 'output window, operand 0, single buffered']
    %13 = vsyncpa [#allocation3], 0
    %14 = vsyncpa [#allocation6], 0
    %15 = vsyncpa [#allocation4], 0
    // Predicated region
    $region2: #{tpu_custom_call.1} parent=1 // pred_check
      _
    $region3: #{tpu_custom_call.1} parent=1 // pred_check_branch
      %17 = sbr.rel (0) target = $region5
    $region4: #{tpu_custom_call.1} parent=1 // pred_region
      %s19 = ssub.s32 256, 256
      %20 = vsyncadd [#allocation3], %s19
      %s21 = sshll.u32 [#allocation2], 4
      %s22 = int_to_ptr.vmem [resolvable:$true] %s21
      %27 = dma.hbm_to_vmem [thread:$0]  %s0, 256, %s22, [#allocation3], 128, 128, 8
    $region5: #{tpu_custom_call.1} parent=1 // pred_fallthru
      _
    // Predicated region
    $region6: #{tpu_custom_call.1} parent=1 // pred_check
      _
    $region7: #{tpu_custom_call.1} parent=1 // pred_check_branch
      %29 = sbr.rel (0) target = $region9
    $region8: #{tpu_custom_call.1} parent=1 // pred_region
      %s31 = ssub.s32 256, 256
      %32 = vsyncadd [#allocation6], %s31
      %s33 = sshll.u32 [#allocation5], 4
      %s34 = int_to_ptr.vmem [resolvable:$true] %s33
      %39 = dma.hbm_to_vmem [thread:$0]  %s1, 256, %s34, [#allocation6], 128, 128, 8
    $region9: #{tpu_custom_call.1} parent=1 // pred_fallthru
      _
    // Predicated region
    $region10: #{tpu_custom_call.1} parent=1 // pred_check
      _
    $region11: #{tpu_custom_call.1} parent=1 // pred_check_branch
      %41 = sbr.rel (0) target = $region13
    $region12: #{tpu_custom_call.1} parent=1 // pred_region
      _
    $region13: #{tpu_custom_call.1} parent=1 // pred_fallthru
      _
    // Predicated region
    $region14: #{tpu_custom_call.1} parent=1 // pred_check
      _
    $region15: #{tpu_custom_call.1} parent=1 // pred_check_branch
      %43 = sbr.rel (0) target = $region17
    $region16: #{tpu_custom_call.1} parent=1 // pred_region
      _
    $region17: #{tpu_custom_call.1} parent=1 // pred_fallthru
      _
    // Predicated region
    $region18: #{tpu_custom_call.1} parent=1 // pred_check
      _
    $region19: #{tpu_custom_call.1} parent=1 // pred_check_branch
      %45 = sbr.rel (0) target = $region21
    $region20: #{tpu_custom_call.1} parent=1 // pred_region
      _
    $region21: #{tpu_custom_call.1} parent=1 // pred_fallthru
      _
    // Predicated region
    $region22: #{tpu_custom_call.1} parent=1 // pred_check
      _
    $region23: #{tpu_custom_call.1} parent=1 // pred_check_branch
      %47 = sbr.rel (0) target = $region25
    $region24: #{tpu_custom_call.1} parent=1 // pred_region
      _
    $region25: #{tpu_custom_call.1} parent=1 // pred_fallthru
      _
    // Predicated region
    $region26: #{tpu_custom_call.1} parent=1 // pred_check
      _
    $region27: #{tpu_custom_call.1} parent=1 // pred_check_branch
      %49 = sbr.rel (0) target = $region29
    $region28: #{tpu_custom_call.1} parent=1 // pred_region
      _
    $region29: #{tpu_custom_call.1} parent=1 // pred_fallthru
      _
    // Predicated region
    $region30: #{tpu_custom_call.1} parent=1 // pred_check
      _
    $region31: #{tpu_custom_call.1} parent=1 // pred_check_branch
      %51 = sbr.rel (0) target = $region33
    $region32: #{tpu_custom_call.1} parent=1 // pred_region
      _
    $region33: #{tpu_custom_call.1} parent=1 // pred_fallthru
      _
    // Predicated region
    $region34: #{tpu_custom_call.1} parent=1 // pred_check
      _
    $region35: #{tpu_custom_call.1} parent=1 // pred_check_branch
      %53 = sbr.rel (0) target = $region37
    $region36: #{tpu_custom_call.1} parent=1 // pred_region
      %54 = dma.done [#allocation3], 256
    $region37: #{tpu_custom_call.1} parent=1 // pred_fallthru
      _
    // Predicated region
    $region38: #{tpu_custom_call.1} parent=1 // pred_check
      _
    $region39: #{tpu_custom_call.1} parent=1 // pred_check_branch
      %56 = sbr.rel (0) target = $region41
    $region40: #{tpu_custom_call.1} parent=1 // pred_region
      %57 = dma.done [#allocation6], 256
    $region41: #{tpu_custom_call.1} parent=1 // pred_fallthru
      _
    %v58 = vld [vmem:[#allocation2] sm:$0xff]
    %v59 = vld [vmem:[#allocation2 + $0x8] sm:$0xff]
    %v60 = vld [vmem:[#allocation5] sm:$0xff]
    %v61 = vld [vmem:[#allocation5 + $0x8] sm:$0xff]
    %v62 = vld [vmem:[%s2] sm:$0xff]
    %v63 = vld [vmem:[%s2 + $0x8] sm:$0xff]
    %v64 = vld [vmem:[%s2 + $0x10] sm:$0xff]
    %v65 = vld [vmem:[%s2 + $0x18] sm:$0xff]
    %v66 = vld [vmem:[%s3] sm:$0xff]
    %v67 = vld [vmem:[%s3 + $0x8] sm:$0xff]
    %v68 = vld [vmem:[%s3 + $0x10] sm:$0xff]
    %v69 = vld [vmem:[%s3 + $0x18] sm:$0xff]
    %v70 = vld [vmem:[%s4] sm:$0xff]
    %v71 = vld [vmem:[%s4 + $0x8] sm:$0xff]
    %v72 = vld [vmem:[%s4 + $0x10] sm:$0xff]
    %v73 = vld [vmem:[%s4 + $0x18] sm:$0xff]
    %v74 = vld [vmem:[%s5] sm:$0xff]
    %v75 = vld [vmem:[%s5 + $0x8] sm:$0xff]
    %v76 = vld [vmem:[%s5 + $0x10] sm:$0xff]
    %v77 = vld [vmem:[%s5 + $0x18] sm:$0xff]
    %v78 = vld [vmem:[%s5 + $0x20] sm:$0xff]
    %v79 = vld [vmem:[%s5 + $0x28] sm:$0xff]
    %v80 = vld [vmem:[%s5 + $0x30] sm:$0xff]
    %v81 = vld [vmem:[%s5 + $0x38] sm:$0xff]
    %v82 = vld [vmem:[%s6] sm:$0xff]
    %vm83 = vcmask 261120
    %v84 = vsel %vm83, %v58, 0.0
    %85 = vadd.xlane.f32.xlu0 %v84
    %v86 = vpop.xlane.xlu0 %85
    %v87 = vsel %vm83, %v59, 0.0
    %88 = vadd.xlane.f32.xlu0 %v87
    %v89 = vpop.xlane.xlu0 %88
    %v90 = vrcp.pop 32.0
    %v91 = vmul.f32 %v86, %v90
    %v92 = vmul.f32 %v89, %v90
    %v93 = vsub.f32 %v58, %v91
    %v94 = vsub.f32 %v59, %v92
    %v95 = vmul.f32 %v93, %v93
    %v96 = vmul.f32 %v94, %v94
    %v97 = vsel %vm83, %v95, 0.0
    %98 = vadd.xlane.f32.xlu0 %v97
    %v99 = vpop.xlane.xlu0 %98
    %v100 = vsel %vm83, %v96, 0.0
    %101 = vadd.xlane.f32.xlu0 %v100
    %v102 = vpop.xlane.xlu0 %101
    %v103 = vmul.f32 %v99, 0.032258064
    %v104 = vmul.f32 %v102, 0.032258064
    %v105 = vrsqrt.pop %v103
    %v106 = vmul.f32 %v103, %v105
    %vm107 = vcmp.eq.f32.partialorder %v103, inf
    %v108 = vsel %vm107, %v103, %v106
    %vm109 = vcmp.eq.f32.partialorder %v103, 0.0
    %v110 = vand.u32 %v103, 2147483648
    %v111 = vsel %vm109, %v110, %v108
    %v112 = vrsqrt.pop %v104
    %v113 = vmul.f32 %v104, %v112
    %vm114 = vcmp.eq.f32.partialorder %v104, inf
    %v115 = vsel %vm114, %v104, %v113
    %vm116 = vcmp.eq.f32.partialorder %v104, 0.0
    %v117 = vand.u32 %v104, 2147483648
    %v118 = vsel %vm116, %v117, %v115
    %v119 = vlaneseq
    %v120 = vshrl.u32 %v119, 7
    %v121 = vsub.s32 4, %v120
    %v122 = vrot.slane %v82, %v121
    %v123 = vmul.f32 %v122, %v93
    %v124 = vmul.f32 %v122, %v94
    %v125 = vadd.f32 %v111, 1e-06
    %v126 = vadd.f32 %v118, 1e-06
    %v127 = vrcp.pop %v125
    %v128 = vmul.f32 %v123, %v127
    %v129 = vrcp.pop %v126
    %v130 = vmul.f32 %v124, %v129
    %v131 = vlaneseq
    %v132 = vshrl.u32 %v131, 7
    %v133 = vsub.s32 5, %v132
    %v134 = vrot.slane %v82, %v133
    %v135 = vadd.f32 %v128, %v134
    %v136 = vadd.f32 %v130, %v134
    %v137 = vlaneseq
    %v138 = vshrl.u32 %v137, 7
    %v139 = vsub.s32 0, %v138
    %v140 = vrot.slane %v82, %v139
    %v142 = vsel %vm83, %v135, 0
    %v145 = vsel %vm83, %v136, 0
    %147 = vmatprep.subr.mxu0 0.0
    %148 = vmatpush1.msra.mxu0 %v62
    %149 = vmatprep.subr.mxu0 0.0
    %150 = vmatpush1.msra.mxu0 %v63
    %151 = vmatprep.subr.mxu0 0.0
    %152 = vmatpush1.msra.mxu0 %v64
    %153 = vmatprep.subr.mxu0 0.0
    %154 = vmatpush1.msra.mxu0 %v65
    %155 = vmatprep.subr.mxu0 0.0
    %156 = vmatpush1.msra.mxu0 0.0
    %157 = vmatprep.subr.mxu0 0.0
    %158 = vmatpush1.msra.mxu0 0.0
    %159 = vmatprep.subr.mxu0 0.0
    %160 = vmatpush1.msra.mxu0 0.0
    %161 = vmatprep.subr.mxu0 0.0
    %162 = vmatpush1.msra.mxu0 0.0
    %163 = vmatprep.subr.mxu0 0.0
    %164 = vmatpush1.msra.mxu0 0.0
    %165 = vmatprep.subr.mxu0 0.0
    %166 = vmatpush1.msra.mxu0 0.0
    %167 = vmatprep.subr.mxu0 0.0
    %168 = vmatpush1.msra.mxu0 0.0
    %169 = vmatprep.subr.mxu0 0.0
    %170 = vmatpush1.msra.mxu0 0.0
    %171 = vmatprep.subr.mxu0 0.0
    %172 = vmatpush1.msra.mxu0 0.0
    %173 = vmatprep.subr.mxu0 0.0
    %174 = vmatpush1.msra.mxu0 0.0
    %175 = vmatprep.subr.mxu0 0.0
    %176 = vmatpush1.msra.mxu0 0.0
    %177 = vmatprep.subr.mxu0 0.0
    %178 = vmatpush1.msra.mxu0 0.0
    %179 = vmatprep.subr.mxu0 0.0
    %180 = vmatpush1.msra.mxu0 0.0
    %181 = vmatprep.subr.mxu0 0.0
    %182 = vmatpush1.msra.mxu0 0.0
    %183 = vmatprep.subr.mxu0 0.0
    %184 = vmatpush1.msra.mxu0 0.0
    %185 = vmatprep.subr.mxu0 0.0
    %186 = vmatpush1.msra.mxu0 0.0
    %187 = vmatprep.subr.mxu0 0.0
    %188 = vmatpush1.msra.mxu0 0.0
    %189 = vmatprep.subr.mxu0 0.0
    %190 = vmatpush1.msra.mxu0 0.0
    %191 = vmatprep.subr.mxu0 0.0
    %192 = vmatpush1.msra.mxu0 0.0
    %193 = vmatprep.subr.mxu0 0.0
    %194 = vmatpush1.msra.mxu0 0.0
    %195 = vmatprep.subr.mxu0 0.0
    %196 = vmatpush1.msra.mxu0 0.0
    %197 = vmatprep.subr.mxu0 0.0
    %198 = vmatpush1.msra.mxu0 0.0
    %199 = vmatprep.subr.mxu0 0.0
    %200 = vmatpush1.msra.mxu0 0.0
    %201 = vmatprep.subr.mxu0 0.0
    %202 = vmatpush1.msra.mxu0 0.0
    %203 = vmatprep.subr.mxu0 0.0
    %204 = vmatpush1.msra.mxu0 0.0
    %205 = vmatprep.subr.mxu0 0.0
    %206 = vmatpush1.msra.mxu0 0.0
    %207 = vmatprep.subr.mxu0 0.0
    %208 = vmatpush1.msra.mxu0 0.0
    %209 = vmatprep.subr.mxu0 0.0
    %210 = vmatpush1.msra.mxu0 0.0
    %211 = vmatprep.mubr.f32.mxu0 0.0
    %212 = vmatmul.mubr.f32.gmra.mrb[0].mxu0 %v142
    %v213 = vpop.f32.mrb[0].mxu0
    %v214 = vadd.f32 %v140, %v213
    %v215 = vpop.f32.mrb[0].mxu0
    %216 = vmatprep.mubr.f32.mxu0 0.0
    %217 = vmatmul.mubr.f32.gmra.mrb[0].mxu0 %v145
    %v218 = vpop.f32.mrb[0].mxu0
    %v219 = vadd.f32 %v140, %v218
    %v220 = vpop.f32.mrb[0].mxu0
    %221 = vdwg.mxu0
    %223 = vrot.lane.b32.xlu0 %v214, 96
    %v224 = vpop.permute.xlu0 %223
    %vm225 = vcmask 64512
    %v226 = vsel %vm225, %v214, 0
    %v228 = vsel %vm225, %v224, 0
    %230 = vmatprep.subr.mxu0 0.0
    %231 = vmatpush1.xpose.msra.mxu0 %v228
    %232 = vmatprep.subr.mxu0 0.0
    %233 = vmatpush1.xpose.msra.mxu0 0.0
    %234 = vmatprep.subr.mxu0 0.0
    %235 = vmatpush1.xpose.msra.mxu0 0.0
    %236 = vmatprep.subr.mxu0 0.0
    %237 = vmatpush1.xpose.msra.mxu0 0.0
    %238 = vmatprep.subr.mxu0 0.0
    %239 = vmatpush1.xpose.msra.mxu0 0.0
    %240 = vmatprep.subr.mxu0 0.0
    %241 = vmatpush1.xpose.msra.mxu0 0.0
    %242 = vmatprep.subr.mxu0 0.0
    %243 = vmatpush1.xpose.msra.mxu0 0.0
    %244 = vmatprep.subr.mxu0 0.0
    %245 = vmatpush1.xpose.msra.mxu0 0.0
    %246 = vmatprep.subr.mxu0 0.0
    %247 = vmatpush1.xpose.msra.mxu0 0.0
    %248 = vmatprep.subr.mxu0 0.0
    %249 = vmatpush1.xpose.msra.mxu0 0.0
    %250 = vmatprep.subr.mxu0 0.0
    %251 = vmatpush1.xpose.msra.mxu0 0.0
    %252 = vmatprep.subr.mxu0 0.0
    %253 = vmatpush1.xpose.msra.mxu0 0.0
    %254 = vmatprep.subr.mxu0 0.0
    %255 = vmatpush1.xpose.msra.mxu0 0.0
    %256 = vmatprep.subr.mxu0 0.0
    %257 = vmatpush1.xpose.msra.mxu0 0.0
    %258 = vmatprep.subr.mxu0 0.0
    %259 = vmatpush1.xpose.msra.mxu0 0.0
    %260 = vmatprep.subr.mxu0 0.0
    %261 = vmatpush1.xpose.msra.mxu0 0.0
    %262 = vmatprep.subr.mxu0 0.0
    %263 = vmatpush1.xpose.msra.mxu0 0.0
    %264 = vmatprep.subr.mxu0 0.0
    %265 = vmatpush1.xpose.msra.mxu0 0.0
    %266 = vmatprep.subr.mxu0 0.0
    %267 = vmatpush1.xpose.msra.mxu0 0.0
    %268 = vmatprep.subr.mxu0 0.0
    %269 = vmatpush1.xpose.msra.mxu0 0.0
    %270 = vmatprep.subr.mxu0 0.0
    %271 = vmatpush1.xpose.msra.mxu0 0.0
    %272 = vmatprep.subr.mxu0 0.0
    %273 = vmatpush1.xpose.msra.mxu0 0.0
    %274 = vmatprep.subr.mxu0 0.0
    %275 = vmatpush1.xpose.msra.mxu0 0.0
    %276 = vmatprep.subr.mxu0 0.0
    %277 = vmatpush1.xpose.msra.mxu0 0.0
    %278 = vmatprep.subr.mxu0 0.0
    %279 = vmatpush1.xpose.msra.mxu0 0.0
    %280 = vmatprep.subr.mxu0 0.0
    %281 = vmatpush1.xpose.msra.mxu0 0.0
    %282 = vmatprep.subr.mxu0 0.0
    %283 = vmatpush1.xpose.msra.mxu0 0.0
    %284 = vmatprep.subr.mxu0 0.0
    %285 = vmatpush1.xpose.msra.mxu0 0.0
    %286 = vmatprep.subr.mxu0 0.0
    %287 = vmatpush1.xpose.msra.mxu0 0.0
    %288 = vmatprep.subr.mxu0 0.0
    %289 = vmatpush1.xpose.msra.mxu0 0.0
    %290 = vmatprep.subr.mxu0 0.0
    %291 = vmatpush1.xpose.msra.mxu0 0.0
    %292 = vmatprep.subr.mxu0 0.0
    %293 = vmatpush1.xpose.msra.mxu0 0.0
    %294 = vmatprep.mubr.f32.mxu0 0.0
    %295 = vmatmul.mubr.f32.gmra.mrb[0].mxu0 %v226
    %v296 = vpop.f32.mrb[0].mxu0
    %v297 = vadd.f32 0.0, %v296
    %v298 = vpop.f32.mrb[0].mxu0
    %299 = vdwg.mxu0
    %301 = vrot.lane.b32.xlu0 %v219, 96
    %v302 = vpop.permute.xlu0 %301
    %v303 = vsel %vm225, %v219, 0
    %v305 = vsel %vm225, %v302, 0
    %307 = vmatprep.subr.mxu0 0.0
    %308 = vmatpush1.xpose.msra.mxu0 %v305
    %309 = vmatprep.subr.mxu0 0.0
    %310 = vmatpush1.xpose.msra.mxu0 0.0
    %311 = vmatprep.subr.mxu0 0.0
    %312 = vmatpush1.xpose.msra.mxu0 0.0
    %313 = vmatprep.subr.mxu0 0.0
    %314 = vmatpush1.xpose.msra.mxu0 0.0
    %315 = vmatprep.subr.mxu0 0.0
    %316 = vmatpush1.xpose.msra.mxu0 0.0
    %317 = vmatprep.subr.mxu0 0.0
    %318 = vmatpush1.xpose.msra.mxu0 0.0
    %319 = vmatprep.subr.mxu0 0.0
    %320 = vmatpush1.xpose.msra.mxu0 0.0
    %321 = vmatprep.subr.mxu0 0.0
    %322 = vmatpush1.xpose.msra.mxu0 0.0
    %323 = vmatprep.subr.mxu0 0.0
    %324 = vmatpush1.xpose.msra.mxu0 0.0
    %325 = vmatprep.subr.mxu0 0.0
    %326 = vmatpush1.xpose.msra.mxu0 0.0
    %327 = vmatprep.subr.mxu0 0.0
    %328 = vmatpush1.xpose.msra.mxu0 0.0
    %329 = vmatprep.subr.mxu0 0.0
    %330 = vmatpush1.xpose.msra.mxu0 0.0
    %331 = vmatprep.subr.mxu0 0.0
    %332 = vmatpush1.xpose.msra.mxu0 0.0
    %333 = vmatprep.subr.mxu0 0.0
    %334 = vmatpush1.xpose.msra.mxu0 0.0
    %335 = vmatprep.subr.mxu0 0.0
    %336 = vmatpush1.xpose.msra.mxu0 0.0
    %337 = vmatprep.subr.mxu0 0.0
    %338 = vmatpush1.xpose.msra.mxu0 0.0
    %339 = vmatprep.subr.mxu0 0.0
    %340 = vmatpush1.xpose.msra.mxu0 0.0
    %341 = vmatprep.subr.mxu0 0.0
    %342 = vmatpush1.xpose.msra.mxu0 0.0
    %343 = vmatprep.subr.mxu0 0.0
    %344 = vmatpush1.xpose.msra.mxu0 0.0
    %345 = vmatprep.subr.mxu0 0.0
    %346 = vmatpush1.xpose.msra.mxu0 0.0
    %347 = vmatprep.subr.mxu0 0.0
    %348 = vmatpush1.xpose.msra.mxu0 0.0
    %349 = vmatprep.subr.mxu0 0.0
    %350 = vmatpush1.xpose.msra.mxu0 0.0
    %351 = vmatprep.subr.mxu0 0.0
    %352 = vmatpush1.xpose.msra.mxu0 0.0
    %353 = vmatprep.subr.mxu0 0.0
    %354 = vmatpush1.xpose.msra.mxu0 0.0
    %355 = vmatprep.subr.mxu0 0.0
    %356 = vmatpush1.xpose.msra.mxu0 0.0
    %357 = vmatprep.subr.mxu0 0.0
    %358 = vmatpush1.xpose.msra.mxu0 0.0
    %359 = vmatprep.subr.mxu0 0.0
    %360 = vmatpush1.xpose.msra.mxu0 0.0
    %361 = vmatprep.subr.mxu0 0.0
    %362 = vmatpush1.xpose.msra.mxu0 0.0
    %363 = vmatprep.subr.mxu0 0.0
    %364 = vmatpush1.xpose.msra.mxu0 0.0
    %365 = vmatprep.subr.mxu0 0.0
    %366 = vmatpush1.xpose.msra.mxu0 0.0
    %367 = vmatprep.subr.mxu0 0.0
    %368 = vmatpush1.xpose.msra.mxu0 0.0
    %369 = vmatprep.subr.mxu0 0.0
    %370 = vmatpush1.xpose.msra.mxu0 0.0
    %371 = vmatprep.mubr.f32.mxu0 0.0
    %372 = vmatmul.mubr.f32.gmra.mrb[0].mxu0 %v303
    %v373 = vpop.f32.mrb[0].mxu0
    %v374 = vadd.f32 0.0, %v373
    %v375 = vpop.f32.mrb[0].mxu0
    %376 = vdwg.mxu0
    %v377 = vmul.f32 %v297, 0.35355338
    %v378 = vmul.f32 %v374, 0.35355338
    %v379 = vadd.f32 %v377, %v60
    %v380 = vadd.f32 %v378, %v61
    %v381 = vsel %vm225, %v379, -inf
    %382 = vmax.xlane.f32.xlu0 %v381
    %v383 = vpop.xlane.xlu0 %382
    %v384 = vsel %vm225, %v380, -inf
    %385 = vmax.xlane.f32.xlu0 %v384
    %v386 = vpop.xlane.xlu0 %385
    %v387 = vsub.f32 %v379, %v383
    %v388 = vsub.f32 %v380, %v386
    %v389 = vmul.f32 %v387, 1.442695
    %v390 = vpow.pop %v389
    %v391 = vmul.f32 %v388, 1.442695
    %v392 = vpow.pop %v391
    %v393 = vsel %vm225, %v390, 0.0
    %394 = vadd.xlane.f32.xlu0 %v393
    %v395 = vpop.xlane.xlu0 %394
    %v396 = vsel %vm225, %v392, 0.0
    %397 = vadd.xlane.f32.xlu0 %v396
    %v398 = vpop.xlane.xlu0 %397
    %v399 = vrcp.pop %v395
    %v400 = vrcp.pop %v398
    %v401 = vmul.f32 %v390, %v399
    %v402 = vmul.f32 %v392, %v400
    %403 = vrot.lane.b32.xlu0 %v214, 64
    %v404 = vpop.permute.xlu0 %403
    %v407 = vsel %vm225, %v401, 0
    %409 = vmatprep.subr.mxu0 0.0
    %410 = vmatpush1.msra.mxu0 %v404
    %411 = vmatprep.subr.mxu0 0.0
    %412 = vmatpush1.msra.mxu0 0.0
    %413 = vmatprep.subr.mxu0 0.0
    %414 = vmatpush1.msra.mxu0 0.0
    %415 = vmatprep.subr.mxu0 0.0
    %416 = vmatpush1.msra.mxu0 0.0
    %417 = vmatprep.subr.mxu0 0.0
    %418 = vmatpush1.msra.mxu0 0.0
    %419 = vmatprep.subr.mxu0 0.0
    %420 = vmatpush1.msra.mxu0 0.0
    %421 = vmatprep.subr.mxu0 0.0
    %422 = vmatpush1.msra.mxu0 0.0
    %423 = vmatprep.subr.mxu0 0.0
    %424 = vmatpush1.msra.mxu0 0.0
    %425 = vmatprep.subr.mxu0 0.0
    %426 = vmatpush1.msra.mxu0 0.0
    %427 = vmatprep.subr.mxu0 0.0
    %428 = vmatpush1.msra.mxu0 0.0
    %429 = vmatprep.subr.mxu0 0.0
    %430 = vmatpush1.msra.mxu0 0.0
    %431 = vmatprep.subr.mxu0 0.0
    %432 = vmatpush1.msra.mxu0 0.0
    %433 = vmatprep.subr.mxu0 0.0
    %434 = vmatpush1.msra.mxu0 0.0
    %435 = vmatprep.subr.mxu0 0.0
    %436 = vmatpush1.msra.mxu0 0.0
    %437 = vmatprep.subr.mxu0 0.0
    %438 = vmatpush1.msra.mxu0 0.0
    %439 = vmatprep.subr.mxu0 0.0
    %440 = vmatpush1.msra.mxu0 0.0
    %441 = vmatprep.subr.mxu0 0.0
    %442 = vmatpush1.msra.mxu0 0.0
    %443 = vmatprep.subr.mxu0 0.0
    %444 = vmatpush1.msra.mxu0 0.0
    %445 = vmatprep.subr.mxu0 0.0
    %446 = vmatpush1.msra.mxu0 0.0
    %447 = vmatprep.subr.mxu0 0.0
    %448 = vmatpush1.msra.mxu0 0.0
    %449 = vmatprep.subr.mxu0 0.0
    %450 = vmatpush1.msra.mxu0 0.0
    %451 = vmatprep.subr.mxu0 0.0
    %452 = vmatpush1.msra.mxu0 0.0
    %453 = vmatprep.subr.mxu0 0.0
    %454 = vmatpush1.msra.mxu0 0.0
    %455 = vmatprep.subr.mxu0 0.0
    %456 = vmatpush1.msra.mxu0 0.0
    %457 = vmatprep.subr.mxu0 0.0
    %458 = vmatpush1.msra.mxu0 0.0
    %459 = vmatprep.subr.mxu0 0.0
    %460 = vmatpush1.msra.mxu0 0.0
    %461 = vmatprep.subr.mxu0 0.0
    %462 = vmatpush1.msra.mxu0 0.0
    %463 = vmatprep.subr.mxu0 0.0
    %464 = vmatpush1.msra.mxu0 0.0
    %465 = vmatprep.subr.mxu0 0.0
    %466 = vmatpush1.msra.mxu0 0.0
    %467 = vmatprep.subr.mxu0 0.0
    %468 = vmatpush1.msra.mxu0 0.0
    %469 = vmatprep.subr.mxu0 0.0
    %470 = vmatpush1.msra.mxu0 0.0
    %471 = vmatprep.subr.mxu0 0.0
    %472 = vmatpush1.msra.mxu0 0.0
    %473 = vmatprep.mubr.f32.mxu0 0.0
    %474 = vmatmul.mubr.f32.gmra.mrb[0].mxu0 %v407
    %v475 = vpop.f32.mrb[0].mxu0
    %v476 = vadd.f32 0.0, %v475
    %v477 = vpop.f32.mrb[0].mxu0
    %478 = vdwg.mxu0
    %479 = vrot.lane.b32.xlu0 %v219, 64
    %v480 = vpop.permute.xlu0 %479
    %v483 = vsel %vm225, %v402, 0
    %485 = vmatprep.subr.mxu0 0.0
    %486 = vmatpush1.msra.mxu0 %v480
    %487 = vmatprep.subr.mxu0 0.0
    %488 = vmatpush1.msra.mxu0 0.0
    %489 = vmatprep.subr.mxu0 0.0
    %490 = vmatpush1.msra.mxu0 0.0
    %491 = vmatprep.subr.mxu0 0.0
    %492 = vmatpush1.msra.mxu0 0.0
    %493 = vmatprep.subr.mxu0 0.0
    %494 = vmatpush1.msra.mxu0 0.0
    %495 = vmatprep.subr.mxu0 0.0
    %496 = vmatpush1.msra.mxu0 0.0
    %497 = vmatprep.subr.mxu0 0.0
    %498 = vmatpush1.msra.mxu0 0.0
    %499 = vmatprep.subr.mxu0 0.0
    %500 = vmatpush1.msra.mxu0 0.0
    %501 = vmatprep.subr.mxu0 0.0
    %502 = vmatpush1.msra.mxu0 0.0
    %503 = vmatprep.subr.mxu0 0.0
    %504 = vmatpush1.msra.mxu0 0.0
    %505 = vmatprep.subr.mxu0 0.0
    %506 = vmatpush1.msra.mxu0 0.0
    %507 = vmatprep.subr.mxu0 0.0
    %508 = vmatpush1.msra.mxu0 0.0
    %509 = vmatprep.subr.mxu0 0.0
    %510 = vmatpush1.msra.mxu0 0.0
    %511 = vmatprep.subr.mxu0 0.0
    %512 = vmatpush1.msra.mxu0 0.0
    %513 = vmatprep.subr.mxu0 0.0
    %514 = vmatpush1.msra.mxu0 0.0
    %515 = vmatprep.subr.mxu0 0.0
    %516 = vmatpush1.msra.mxu0 0.0
    %517 = vmatprep.subr.mxu0 0.0
    %518 = vmatpush1.msra.mxu0 0.0
    %519 = vmatprep.subr.mxu0 0.0
    %520 = vmatpush1.msra.mxu0 0.0
    %521 = vmatprep.subr.mxu0 0.0
    %522 = vmatpush1.msra.mxu0 0.0
    %523 = vmatprep.subr.mxu0 0.0
    %524 = vmatpush1.msra.mxu0 0.0
    %525 = vmatprep.subr.mxu0 0.0
    %526 = vmatpush1.msra.mxu0 0.0
    %527 = vmatprep.subr.mxu0 0.0
    %528 = vmatpush1.msra.mxu0 0.0
    %529 = vmatprep.subr.mxu0 0.0
    %530 = vmatpush1.msra.mxu0 0.0
    %531 = vmatprep.subr.mxu0 0.0
    %532 = vmatpush1.msra.mxu0 0.0
    %533 = vmatprep.subr.mxu0 0.0
    %534 = vmatpush1.msra.mxu0 0.0
    %535 = vmatprep.subr.mxu0 0.0
    %536 = vmatpush1.msra.mxu0 0.0
    %537 = vmatprep.subr.mxu0 0.0
    %538 = vmatpush1.msra.mxu0 0.0
    %539 = vmatprep.subr.mxu0 0.0
    %540 = vmatpush1.msra.mxu0 0.0
    %541 = vmatprep.subr.mxu0 0.0
    %542 = vmatpush1.msra.mxu0 0.0
    %543 = vmatprep.subr.mxu0 0.0
    %544 = vmatpush1.msra.mxu0 0.0
    %545 = vmatprep.subr.mxu0 0.0
    %546 = vmatpush1.msra.mxu0 0.0
    %547 = vmatprep.subr.mxu0 0.0
    %548 = vmatpush1.msra.mxu0 0.0
    %549 = vmatprep.mubr.f32.mxu0 0.0
    %550 = vmatmul.mubr.f32.gmra.mrb[0].mxu0 %v483
    %v551 = vpop.f32.mrb[0].mxu0
    %v552 = vadd.f32 0.0, %v551
    %v553 = vpop.f32.mrb[0].mxu0
    %554 = vdwg.mxu0
    %555 = vrot.lane.b32.xlu0 %v214, 120
    %v556 = vpop.permute.xlu0 %555
    %557 = vrot.lane.b32.xlu0 %v214, 88
    %v558 = vpop.permute.xlu0 %557
    %v559 = vsel %vm225, %v556, 0
    %v561 = vsel %vm225, %v558, 0
    %563 = vmatprep.subr.mxu0 0.0
    %564 = vmatpush1.xpose.msra.mxu0 %v561
    %565 = vmatprep.subr.mxu0 0.0
    %566 = vmatpush1.xpose.msra.mxu0 0.0
    %567 = vmatprep.subr.mxu0 0.0
    %568 = vmatpush1.xpose.msra.mxu0 0.0
    %569 = vmatprep.subr.mxu0 0.0
    %570 = vmatpush1.xpose.msra.mxu0 0.0
    %571 = vmatprep.subr.mxu0 0.0
    %572 = vmatpush1.xpose.msra.mxu0 0.0
    %573 = vmatprep.subr.mxu0 0.0
    %574 = vmatpush1.xpose.msra.mxu0 0.0
    %575 = vmatprep.subr.mxu0 0.0
    %576 = vmatpush1.xpose.msra.mxu0 0.0
    %577 = vmatprep.subr.mxu0 0.0
    %578 = vmatpush1.xpose.msra.mxu0 0.0
    %579 = vmatprep.subr.mxu0 0.0
    %580 = vmatpush1.xpose.msra.mxu0 0.0
    %581 = vmatprep.subr.mxu0 0.0
    %582 = vmatpush1.xpose.msra.mxu0 0.0
    %583 = vmatprep.subr.mxu0 0.0
    %584 = vmatpush1.xpose.msra.mxu0 0.0
    %585 = vmatprep.subr.mxu0 0.0
    %586 = vmatpush1.xpose.msra.mxu0 0.0
    %587 = vmatprep.subr.mxu0 0.0
    %588 = vmatpush1.xpose.msra.mxu0 0.0
    %589 = vmatprep.subr.mxu0 0.0
    %590 = vmatpush1.xpose.msra.mxu0 0.0
    %591 = vmatprep.subr.mxu0 0.0
    %592 = vmatpush1.xpose.msra.mxu0 0.0
    %593 = vmatprep.subr.mxu0 0.0
    %594 = vmatpush1.xpose.msra.mxu0 0.0
    %595 = vmatprep.subr.mxu0 0.0
    %596 = vmatpush1.xpose.msra.mxu0 0.0
    %597 = vmatprep.subr.mxu0 0.0
    %598 = vmatpush1.xpose.msra.mxu0 0.0
    %599 = vmatprep.subr.mxu0 0.0
    %600 = vmatpush1.xpose.msra.mxu0 0.0
    %601 = vmatprep.subr.mxu0 0.0
    %602 = vmatpush1.xpose.msra.mxu0 0.0
    %603 = vmatprep.subr.mxu0 0.0
    %604 = vmatpush1.xpose.msra.mxu0 0.0
    %605 = vmatprep.subr.mxu0 0.0
    %606 = vmatpush1.xpose.msra.mxu0 0.0
    %607 = vmatprep.subr.mxu0 0.0
    %608 = vmatpush1.xpose.msra.mxu0 0.0
    %609 = vmatprep.subr.mxu0 0.0
    %610 = vmatpush1.xpose.msra.mxu0 0.0
    %611 = vmatprep.subr.mxu0 0.0
    %612 = vmatpush1.xpose.msra.mxu0 0.0
    %613 = vmatprep.subr.mxu0 0.0
    %614 = vmatpush1.xpose.msra.mxu0 0.0
    %615 = vmatprep.subr.mxu0 0.0
    %616 = vmatpush1.xpose.msra.mxu0 0.0
    %617 = vmatprep.subr.mxu0 0.0
    %618 = vmatpush1.xpose.msra.mxu0 0.0
    %619 = vmatprep.subr.mxu0 0.0
    %620 = vmatpush1.xpose.msra.mxu0 0.0
    %621 = vmatprep.subr.mxu0 0.0
    %622 = vmatpush1.xpose.msra.mxu0 0.0
    %623 = vmatprep.subr.mxu0 0.0
    %624 = vmatpush1.xpose.msra.mxu0 0.0
    %625 = vmatprep.subr.mxu0 0.0
    %626 = vmatpush1.xpose.msra.mxu0 0.0
    %627 = vmatprep.mubr.f32.mxu0 0.0
    %628 = vmatmul.mubr.f32.gmra.mrb[0].mxu0 %v559
    %v629 = vpop.f32.mrb[0].mxu0
    %v630 = vadd.f32 0.0, %v629
    %v631 = vpop.f32.mrb[0].mxu0
    %632 = vdwg.mxu0
    %633 = vrot.lane.b32.xlu0 %v219, 120
    %v634 = vpop.permute.xlu0 %633
    %635 = vrot.lane.b32.xlu0 %v219, 88
    %v636 = vpop.permute.xlu0 %635
    %v637 = vsel %vm225, %v634, 0
    %v639 = vsel %vm225, %v636, 0
    %641 = vmatprep.subr.mxu0 0.0
    %642 = vmatpush1.xpose.msra.mxu0 %v639
    %643 = vmatprep.subr.mxu0 0.0
    %644 = vmatpush1.xpose.msra.mxu0 0.0
    %645 = vmatprep.subr.mxu0 0.0
    %646 = vmatpush1.xpose.msra.mxu0 0.0
    %647 = vmatprep.subr.mxu0 0.0
    %648 = vmatpush1.xpose.msra.mxu0 0.0
    %649 = vmatprep.subr.mxu0 0.0
    %650 = vmatpush1.xpose.msra.mxu0 0.0
    %651 = vmatprep.subr.mxu0 0.0
    %652 = vmatpush1.xpose.msra.mxu0 0.0
    %653 = vmatprep.subr.mxu0 0.0
    %654 = vmatpush1.xpose.msra.mxu0 0.0
    %655 = vmatprep.subr.mxu0 0.0
    %656 = vmatpush1.xpose.msra.mxu0 0.0
    %657 = vmatprep.subr.mxu0 0.0
    %658 = vmatpush1.xpose.msra.mxu0 0.0
    %659 = vmatprep.subr.mxu0 0.0
    %660 = vmatpush1.xpose.msra.mxu0 0.0
    %661 = vmatprep.subr.mxu0 0.0
    %662 = vmatpush1.xpose.msra.mxu0 0.0
    %663 = vmatprep.subr.mxu0 0.0
    %664 = vmatpush1.xpose.msra.mxu0 0.0
    %665 = vmatprep.subr.mxu0 0.0
    %666 = vmatpush1.xpose.msra.mxu0 0.0
    %667 = vmatprep.subr.mxu0 0.0
    %668 = vmatpush1.xpose.msra.mxu0 0.0
    %669 = vmatprep.subr.mxu0 0.0
    %670 = vmatpush1.xpose.msra.mxu0 0.0
    %671 = vmatprep.subr.mxu0 0.0
    %672 = vmatpush1.xpose.msra.mxu0 0.0
    %673 = vmatprep.subr.mxu0 0.0
    %674 = vmatpush1.xpose.msra.mxu0 0.0
    %675 = vmatprep.subr.mxu0 0.0
    %676 = vmatpush1.xpose.msra.mxu0 0.0
    %677 = vmatprep.subr.mxu0 0.0
    %678 = vmatpush1.xpose.msra.mxu0 0.0
    %679 = vmatprep.subr.mxu0 0.0
    %680 = vmatpush1.xpose.msra.mxu0 0.0
    %681 = vmatprep.subr.mxu0 0.0
    %682 = vmatpush1.xpose.msra.mxu0 0.0
    %683 = vmatprep.subr.mxu0 0.0
    %684 = vmatpush1.xpose.msra.mxu0 0.0
    %685 = vmatprep.subr.mxu0 0.0
    %686 = vmatpush1.xpose.msra.mxu0 0.0
    %687 = vmatprep.subr.mxu0 0.0
    %688 = vmatpush1.xpose.msra.mxu0 0.0
    %689 = vmatprep.subr.mxu0 0.0
    %690 = vmatpush1.xpose.msra.mxu0 0.0
    %691 = vmatprep.subr.mxu0 0.0
    %692 = vmatpush1.xpose.msra.mxu0 0.0
    %693 = vmatprep.subr.mxu0 0.0
    %694 = vmatpush1.xpose.msra.mxu0 0.0
    %695 = vmatprep.subr.mxu0 0.0
    %696 = vmatpush1.xpose.msra.mxu0 0.0
    %697 = vmatprep.subr.mxu0 0.0
    %698 = vmatpush1.xpose.msra.mxu0 0.0
    %699 = vmatprep.subr.mxu0 0.0
    %700 = vmatpush1.xpose.msra.mxu0 0.0
    %701 = vmatprep.subr.mxu0 0.0
    %702 = vmatpush1.xpose.msra.mxu0 0.0
    %703 = vmatprep.subr.mxu0 0.0
    %704 = vmatpush1.xpose.msra.mxu0 0.0
    %705 = vmatprep.mubr.f32.mxu0 0.0
    %706 = vmatmul.mubr.f32.gmra.mrb[0].mxu0 %v637
    %v707 = vpop.f32.mrb[0].mxu0
    %v708 = vadd.f32 0.0, %v707
    %v709 = vpop.f32.mrb[0].mxu0
    %710 = vdwg.mxu0
    %v711 = vmul.f32 %v630, 0.35355338
    %v712 = vmul.f32 %v708, 0.35355338
    %v713 = vadd.f32 %v711, %v60
    %v714 = vadd.f32 %v712, %v61
    %v715 = vsel %vm225, %v713, -inf
    %716 = vmax.xlane.f32.xlu0 %v715
    %v717 = vpop.xlane.xlu0 %716
    %v718 = vsel %vm225, %v714, -inf
    %719 = vmax.xlane.f32.xlu0 %v718
    %v720 = vpop.xlane.xlu0 %719
    %v721 = vsub.f32 %v713, %v717
    %v722 = vsub.f32 %v714, %v720
    %v723 = vmul.f32 %v721, 1.442695
    %v724 = vpow.pop %v723
    %v725 = vmul.f32 %v722, 1.442695
    %v726 = vpow.pop %v725
    %v727 = vsel %vm225, %v724, 0.0
    %728 = vadd.xlane.f32.xlu0 %v727
    %v729 = vpop.xlane.xlu0 %728
    %v730 = vsel %vm225, %v726, 0.0
    %731 = vadd.xlane.f32.xlu0 %v730
    %v732 = vpop.xlane.xlu0 %731
    %v733 = vrcp.pop %v729
    %v734 = vrcp.pop %v732
    %v735 = vmul.f32 %v724, %v733
    %v736 = vmul.f32 %v726, %v734
    %737 = vrot.lane.b32.xlu0 %v214, 56
    %v738 = vpop.permute.xlu0 %737
    %v741 = vsel %vm225, %v735, 0
    %743 = vmatprep.subr.mxu0 0.0
    %744 = vmatpush1.msra.mxu0 %v738
    %745 = vmatprep.subr.mxu0 0.0
    %746 = vmatpush1.msra.mxu0 0.0
    %747 = vmatprep.subr.mxu0 0.0
    %748 = vmatpush1.msra.mxu0 0.0
    %749 = vmatprep.subr.mxu0 0.0
    %750 = vmatpush1.msra.mxu0 0.0
    %751 = vmatprep.subr.mxu0 0.0
    %752 = vmatpush1.msra.mxu0 0.0
    %753 = vmatprep.subr.mxu0 0.0
    %754 = vmatpush1.msra.mxu0 0.0
    %755 = vmatprep.subr.mxu0 0.0
    %756 = vmatpush1.msra.mxu0 0.0
    %757 = vmatprep.subr.mxu0 0.0
    %758 = vmatpush1.msra.mxu0 0.0
    %759 = vmatprep.subr.mxu0 0.0
    %760 = vmatpush1.msra.mxu0 0.0
    %761 = vmatprep.subr.mxu0 0.0
    %762 = vmatpush1.msra.mxu0 0.0
    %763 = vmatprep.subr.mxu0 0.0
    %764 = vmatpush1.msra.mxu0 0.0
    %765 = vmatprep.subr.mxu0 0.0
    %766 = vmatpush1.msra.mxu0 0.0
    %767 = vmatprep.subr.mxu0 0.0
    %768 = vmatpush1.msra.mxu0 0.0
    %769 = vmatprep.subr.mxu0 0.0
    %770 = vmatpush1.msra.mxu0 0.0
    %771 = vmatprep.subr.mxu0 0.0
    %772 = vmatpush1.msra.mxu0 0.0
    %773 = vmatprep.subr.mxu0 0.0
    %774 = vmatpush1.msra.mxu0 0.0
    %775 = vmatprep.subr.mxu0 0.0
    %776 = vmatpush1.msra.mxu0 0.0
    %777 = vmatprep.subr.mxu0 0.0
    %778 = vmatpush1.msra.mxu0 0.0
    %779 = vmatprep.subr.mxu0 0.0
    %780 = vmatpush1.msra.mxu0 0.0
    %781 = vmatprep.subr.mxu0 0.0
    %782 = vmatpush1.msra.mxu0 0.0
    %783 = vmatprep.subr.mxu0 0.0
    %784 = vmatpush1.msra.mxu0 0.0
    %785 = vmatprep.subr.mxu0 0.0
    %786 = vmatpush1.msra.mxu0 0.0
    %787 = vmatprep.subr.mxu0 0.0
    %788 = vmatpush1.msra.mxu0 0.0
    %789 = vmatprep.subr.mxu0 0.0
    %790 = vmatpush1.msra.mxu0 0.0
    %791 = vmatprep.subr.mxu0 0.0
    %792 = vmatpush1.msra.mxu0 0.0
    %793 = vmatprep.subr.mxu0 0.0
    %794 = vmatpush1.msra.mxu0 0.0
    %795 = vmatprep.subr.mxu0 0.0
    %796 = vmatpush1.msra.mxu0 0.0
    %797 = vmatprep.subr.mxu0 0.0
    %798 = vmatpush1.msra.mxu0 0.0
    %799 = vmatprep.subr.mxu0 0.0
    %800 = vmatpush1.msra.mxu0 0.0
    %801 = vmatprep.subr.mxu0 0.0
    %802 = vmatpush1.msra.mxu0 0.0
    %803 = vmatprep.subr.mxu0 0.0
    %804 = vmatpush1.msra.mxu0 0.0
    %805 = vmatprep.subr.mxu0 0.0
    %806 = vmatpush1.msra.mxu0 0.0
    %807 = vmatprep.mubr.f32.mxu0 0.0
    %808 = vmatmul.mubr.f32.gmra.mrb[0].mxu0 %v741
    %v809 = vpop.f32.mrb[0].mxu0
    %v810 = vadd.f32 0.0, %v809
    %v811 = vpop.f32.mrb[0].mxu0
    %812 = vdwg.mxu0
    %813 = vrot.lane.b32.xlu0 %v219, 56
    %v814 = vpop.permute.xlu0 %813
    %v817 = vsel %vm225, %v736, 0
    %819 = vmatprep.subr.mxu0 0.0
    %820 = vmatpush1.msra.mxu0 %v814
    %821 = vmatprep.subr.mxu0 0.0
    %822 = vmatpush1.msra.mxu0 0.0
    %823 = vmatprep.subr.mxu0 0.0
    %824 = vmatpush1.msra.mxu0 0.0
    %825 = vmatprep.subr.mxu0 0.0
    %826 = vmatpush1.msra.mxu0 0.0
    %827 = vmatprep.subr.mxu0 0.0
    %828 = vmatpush1.msra.mxu0 0.0
    %829 = vmatprep.subr.mxu0 0.0
    %830 = vmatpush1.msra.mxu0 0.0
    %831 = vmatprep.subr.mxu0 0.0
    %832 = vmatpush1.msra.mxu0 0.0
    %833 = vmatprep.subr.mxu0 0.0
    %834 = vmatpush1.msra.mxu0 0.0
    %835 = vmatprep.subr.mxu0 0.0
    %836 = vmatpush1.msra.mxu0 0.0
    %837 = vmatprep.subr.mxu0 0.0
    %838 = vmatpush1.msra.mxu0 0.0
    %839 = vmatprep.subr.mxu0 0.0
    %840 = vmatpush1.msra.mxu0 0.0
    %841 = vmatprep.subr.mxu0 0.0
    %842 = vmatpush1.msra.mxu0 0.0
    %843 = vmatprep.subr.mxu0 0.0
    %844 = vmatpush1.msra.mxu0 0.0
    %845 = vmatprep.subr.mxu0 0.0
    %846 = vmatpush1.msra.mxu0 0.0
    %847 = vmatprep.subr.mxu0 0.0
    %848 = vmatpush1.msra.mxu0 0.0
    %849 = vmatprep.subr.mxu0 0.0
    %850 = vmatpush1.msra.mxu0 0.0
    %851 = vmatprep.subr.mxu0 0.0
    %852 = vmatpush1.msra.mxu0 0.0
    %853 = vmatprep.subr.mxu0 0.0
    %854 = vmatpush1.msra.mxu0 0.0
    %855 = vmatprep.subr.mxu0 0.0
    %856 = vmatpush1.msra.mxu0 0.0
    %857 = vmatprep.subr.mxu0 0.0
    %858 = vmatpush1.msra.mxu0 0.0
    %859 = vmatprep.subr.mxu0 0.0
    %860 = vmatpush1.msra.mxu0 0.0
    %861 = vmatprep.subr.mxu0 0.0
    %862 = vmatpush1.msra.mxu0 0.0
    %863 = vmatprep.subr.mxu0 0.0
    %864 = vmatpush1.msra.mxu0 0.0
    %865 = vmatprep.subr.mxu0 0.0
    %866 = vmatpush1.msra.mxu0 0.0
    %867 = vmatprep.subr.mxu0 0.0
    %868 = vmatpush1.msra.mxu0 0.0
    %869 = vmatprep.subr.mxu0 0.0
    %870 = vmatpush1.msra.mxu0 0.0
    %871 = vmatprep.subr.mxu0 0.0
    %872 = vmatpush1.msra.mxu0 0.0
    %873 = vmatprep.subr.mxu0 0.0
    %874 = vmatpush1.msra.mxu0 0.0
    %875 = vmatprep.subr.mxu0 0.0
    %876 = vmatpush1.msra.mxu0 0.0
    %877 = vmatprep.subr.mxu0 0.0
    %878 = vmatpush1.msra.mxu0 0.0
    %879 = vmatprep.subr.mxu0 0.0
    %880 = vmatpush1.msra.mxu0 0.0
    %881 = vmatprep.subr.mxu0 0.0
    %882 = vmatpush1.msra.mxu0 0.0
    %883 = vmatprep.mubr.f32.mxu0 0.0
    %884 = vmatmul.mubr.f32.gmra.mrb[0].mxu0 %v817
    %v885 = vpop.f32.mrb[0].mxu0
    %v886 = vadd.f32 0.0, %v885
    %v887 = vpop.f32.mrb[0].mxu0
    %888 = vdwg.mxu0
    %v890 = vsel %vm225, %v810, 0
    %v893 = vsel %vm225, %v886, 0
    %895 = vmatprep.subr.mxu0 0.0
    %896 = vmatpush1.msra.mxu0 %v67
    %897 = vmatprep.subr.mxu0 0.0
    %898 = vmatpush1.msra.mxu0 0.0
    %899 = vmatprep.subr.mxu0 0.0
    %900 = vmatpush1.msra.mxu0 0.0
    %901 = vmatprep.subr.mxu0 0.0
    %902 = vmatpush1.msra.mxu0 0.0
    %903 = vmatprep.subr.mxu0 0.0
    %904 = vmatpush1.msra.mxu0 0.0
    %905 = vmatprep.subr.mxu0 0.0
    %906 = vmatpush1.msra.mxu0 0.0
    %907 = vmatprep.subr.mxu0 0.0
    %908 = vmatpush1.msra.mxu0 0.0
    %909 = vmatprep.subr.mxu0 0.0
    %910 = vmatpush1.msra.mxu0 0.0
    %911 = vmatprep.subr.mxu0 0.0
    %912 = vmatpush1.msra.mxu0 0.0
    %913 = vmatprep.subr.mxu0 0.0
    %914 = vmatpush1.msra.mxu0 0.0
    %915 = vmatprep.subr.mxu0 0.0
    %916 = vmatpush1.msra.mxu0 0.0
    %917 = vmatprep.subr.mxu0 0.0
    %918 = vmatpush1.msra.mxu0 0.0
    %919 = vmatprep.subr.mxu0 0.0
    %920 = vmatpush1.msra.mxu0 0.0
    %921 = vmatprep.subr.mxu0 0.0
    %922 = vmatpush1.msra.mxu0 0.0
    %923 = vmatprep.subr.mxu0 0.0
    %924 = vmatpush1.msra.mxu0 0.0
    %925 = vmatprep.subr.mxu0 0.0
    %926 = vmatpush1.msra.mxu0 0.0
    %927 = vmatprep.subr.mxu0 0.0
    %928 = vmatpush1.msra.mxu0 0.0
    %929 = vmatprep.subr.mxu0 0.0
    %930 = vmatpush1.msra.mxu0 0.0
    %931 = vmatprep.subr.mxu0 0.0
    %932 = vmatpush1.msra.mxu0 0.0
    %933 = vmatprep.subr.mxu0 0.0
    %934 = vmatpush1.msra.mxu0 0.0
    %935 = vmatprep.subr.mxu0 0.0
    %936 = vmatpush1.msra.mxu0 0.0
    %937 = vmatprep.subr.mxu0 0.0
    %938 = vmatpush1.msra.mxu0 0.0
    %939 = vmatprep.subr.mxu0 0.0
    %940 = vmatpush1.msra.mxu0 0.0
    %941 = vmatprep.subr.mxu0 0.0
    %942 = vmatpush1.msra.mxu0 0.0
    %943 = vmatprep.subr.mxu0 0.0
    %944 = vmatpush1.msra.mxu0 0.0
    %945 = vmatprep.subr.mxu0 0.0
    %946 = vmatpush1.msra.mxu0 0.0
    %947 = vmatprep.subr.mxu0 0.0
    %948 = vmatpush1.msra.mxu0 0.0
    %949 = vmatprep.subr.mxu0 0.0
    %950 = vmatpush1.msra.mxu0 0.0
    %951 = vmatprep.subr.mxu0 0.0
    %952 = vmatpush1.msra.mxu0 0.0
    %953 = vmatprep.subr.mxu0 0.0
    %954 = vmatpush1.msra.mxu0 0.0
    %955 = vmatprep.subr.mxu0 0.0
    %956 = vmatpush1.msra.mxu0 0.0
    %957 = vmatprep.subr.mxu0 0.0
    %958 = vmatpush1.msra.mxu0 0.0
    %959 = vmatprep.mubr.f32.mxu0 0.0
    %960 = vmatmul.mubr.f32.gmra.mrb[0].mxu0 %v890
    %v961 = vpop.f32.mrb[0].mxu0
    %v962 = vadd.f32 0.0, %v961
    %v963 = vpop.f32.mrb[0].mxu0
    %964 = vmatprep.mubr.f32.mxu0 0.0
    %965 = vmatmul.mubr.f32.gmra.mrb[0].mxu0 %v893
    %v966 = vpop.f32.mrb[0].mxu0
    %v967 = vadd.f32 0.0, %v966
    %v968 = vpop.f32.mrb[0].mxu0
    %969 = vdwg.mxu0
    %v971 = vsel %vm225, %v476, 0
    %v974 = vsel %vm225, %v552, 0
    %976 = vmatprep.subr.mxu0 0.0
    %977 = vmatpush1.msra.mxu0 %v66
    %978 = vmatprep.subr.mxu0 0.0
    %979 = vmatpush1.msra.mxu0 0.0
    %980 = vmatprep.subr.mxu0 0.0
    %981 = vmatpush1.msra.mxu0 0.0
    %982 = vmatprep.subr.mxu0 0.0
    %983 = vmatpush1.msra.mxu0 0.0
    %984 = vmatprep.subr.mxu0 0.0
    %985 = vmatpush1.msra.mxu0 0.0
    %986 = vmatprep.subr.mxu0 0.0
    %987 = vmatpush1.msra.mxu0 0.0
    %988 = vmatprep.subr.mxu0 0.0
    %989 = vmatpush1.msra.mxu0 0.0
    %990 = vmatprep.subr.mxu0 0.0
    %991 = vmatpush1.msra.mxu0 0.0
    %992 = vmatprep.subr.mxu0 0.0
    %993 = vmatpush1.msra.mxu0 0.0
    %994 = vmatprep.subr.mxu0 0.0
    %995 = vmatpush1.msra.mxu0 0.0
    %996 = vmatprep.subr.mxu0 0.0
    %997 = vmatpush1.msra.mxu0 0.0
    %998 = vmatprep.subr.mxu0 0.0
    %999 = vmatpush1.msra.mxu0 0.0
    %1000 = vmatprep.subr.mxu0 0.0
    %1001 = vmatpush1.msra.mxu0 0.0
    %1002 = vmatprep.subr.mxu0 0.0
    %1003 = vmatpush1.msra.mxu0 0.0
    %1004 = vmatprep.subr.mxu0 0.0
    %1005 = vmatpush1.msra.mxu0 0.0
    %1006 = vmatprep.subr.mxu0 0.0
    %1007 = vmatpush1.msra.mxu0 0.0
    %1008 = vmatprep.subr.mxu0 0.0
    %1009 = vmatpush1.msra.mxu0 0.0
    %1010 = vmatprep.subr.mxu0 0.0
    %1011 = vmatpush1.msra.mxu0 0.0
    %1012 = vmatprep.subr.mxu0 0.0
    %1013 = vmatpush1.msra.mxu0 0.0
    %1014 = vmatprep.subr.mxu0 0.0
    %1015 = vmatpush1.msra.mxu0 0.0
    %1016 = vmatprep.subr.mxu0 0.0
    %1017 = vmatpush1.msra.mxu0 0.0
    %1018 = vmatprep.subr.mxu0 0.0
    %1019 = vmatpush1.msra.mxu0 0.0
    %1020 = vmatprep.subr.mxu0 0.0
    %1021 = vmatpush1.msra.mxu0 0.0
    %1022 = vmatprep.subr.mxu0 0.0
    %1023 = vmatpush1.msra.mxu0 0.0
    %1024 = vmatprep.subr.mxu0 0.0
    %1025 = vmatpush1.msra.mxu0 0.0
    %1026 = vmatprep.subr.mxu0 0.0
    %1027 = vmatpush1.msra.mxu0 0.0
    %1028 = vmatprep.subr.mxu0 0.0
    %1029 = vmatpush1.msra.mxu0 0.0
    %1030 = vmatprep.subr.mxu0 0.0
    %1031 = vmatpush1.msra.mxu0 0.0
    %1032 = vmatprep.subr.mxu0 0.0
    %1033 = vmatpush1.msra.mxu0 0.0
    %1034 = vmatprep.subr.mxu0 0.0
    %1035 = vmatpush1.msra.mxu0 0.0
    %1036 = vmatprep.subr.mxu0 0.0
    %1037 = vmatpush1.msra.mxu0 0.0
    %1038 = vmatprep.subr.mxu0 0.0
    %1039 = vmatpush1.msra.mxu0 0.0
    %1040 = vmatprep.mubr.f32.mxu0 0.0
    %1041 = vmatmul.mubr.f32.gmra.mrb[0].mxu0 %v971
    %v1042 = vpop.f32.mrb[0].mxu0
    %v1043 = vadd.f32 %v962, %v1042
    %v1044 = vpop.f32.mrb[0].mxu0
    %1045 = vmatprep.mubr.f32.mxu0 0.0
    %1046 = vmatmul.mubr.f32.gmra.mrb[0].mxu0 %v974
    %v1047 = vpop.f32.mrb[0].mxu0
    %v1048 = vadd.f32 %v967, %v1047
    %v1049 = vpop.f32.mrb[0].mxu0
    %1050 = vdwg.mxu0
    %1051 = vrot.lane.b32.xlu0 %v214, 112
    %v1052 = vpop.permute.xlu0 %1051
    %1053 = vrot.lane.b32.xlu0 %v214, 80
    %v1054 = vpop.permute.xlu0 %1053
    %v1055 = vsel %vm225, %v1052, 0
    %v1057 = vsel %vm225, %v1054, 0
    %1059 = vmatprep.subr.mxu0 0.0
    %1060 = vmatpush1.xpose.msra.mxu0 %v1057
    %1061 = vmatprep.subr.mxu0 0.0
    %1062 = vmatpush1.xpose.msra.mxu0 0.0
    %1063 = vmatprep.subr.mxu0 0.0
    %1064 = vmatpush1.xpose.msra.mxu0 0.0
    %1065 = vmatprep.subr.mxu0 0.0
    %1066 = vmatpush1.xpose.msra.mxu0 0.0
    %1067 = vmatprep.subr.mxu0 0.0
    %1068 = vmatpush1.xpose.msra.mxu0 0.0
    %1069 = vmatprep.subr.mxu0 0.0
    %1070 = vmatpush1.xpose.msra.mxu0 0.0
    %1071 = vmatprep.subr.mxu0 0.0
    %1072 = vmatpush1.xpose.msra.mxu0 0.0
    %1073 = vmatprep.subr.mxu0 0.0
    %1074 = vmatpush1.xpose.msra.mxu0 0.0
    %1075 = vmatprep.subr.mxu0 0.0
    %1076 = vmatpush1.xpose.msra.mxu0 0.0
    %1077 = vmatprep.subr.mxu0 0.0
    %1078 = vmatpush1.xpose.msra.mxu0 0.0
    %1079 = vmatprep.subr.mxu0 0.0
    %1080 = vmatpush1.xpose.msra.mxu0 0.0
    %1081 = vmatprep.subr.mxu0 0.0
    %1082 = vmatpush1.xpose.msra.mxu0 0.0
    %1083 = vmatprep.subr.mxu0 0.0
    %1084 = vmatpush1.xpose.msra.mxu0 0.0
    %1085 = vmatprep.subr.mxu0 0.0
    %1086 = vmatpush1.xpose.msra.mxu0 0.0
    %1087 = vmatprep.subr.mxu0 0.0
    %1088 = vmatpush1.xpose.msra.mxu0 0.0
    %1089 = vmatprep.subr.mxu0 0.0
    %1090 = vmatpush1.xpose.msra.mxu0 0.0
    %1091 = vmatprep.subr.mxu0 0.0
    %1092 = vmatpush1.xpose.msra.mxu0 0.0
    %1093 = vmatprep.subr.mxu0 0.0
    %1094 = vmatpush1.xpose.msra.mxu0 0.0
    %1095 = vmatprep.subr.mxu0 0.0
    %1096 = vmatpush1.xpose.msra.mxu0 0.0
    %1097 = vmatprep.subr.mxu0 0.0
    %1098 = vmatpush1.xpose.msra.mxu0 0.0
    %1099 = vmatprep.subr.mxu0 0.0
    %1100 = vmatpush1.xpose.msra.mxu0 0.0
    %1101 = vmatprep.subr.mxu0 0.0
    %1102 = vmatpush1.xpose.msra.mxu0 0.0
    %1103 = vmatprep.subr.mxu0 0.0
    %1104 = vmatpush1.xpose.msra.mxu0 0.0
    %1105 = vmatprep.subr.mxu0 0.0
    %1106 = vmatpush1.xpose.msra.mxu0 0.0
    %1107 = vmatprep.subr.mxu0 0.0
    %1108 = vmatpush1.xpose.msra.mxu0 0.0
    %1109 = vmatprep.subr.mxu0 0.0
    %1110 = vmatpush1.xpose.msra.mxu0 0.0
    %1111 = vmatprep.subr.mxu0 0.0
    %1112 = vmatpush1.xpose.msra.mxu0 0.0
    %1113 = vmatprep.subr.mxu0 0.0
    %1114 = vmatpush1.xpose.msra.mxu0 0.0
    %1115 = vmatprep.subr.mxu0 0.0
    %1116 = vmatpush1.xpose.msra.mxu0 0.0
    %1117 = vmatprep.subr.mxu0 0.0
    %1118 = vmatpush1.xpose.msra.mxu0 0.0
    %1119 = vmatprep.subr.mxu0 0.0
    %1120 = vmatpush1.xpose.msra.mxu0 0.0
    %1121 = vmatprep.subr.mxu0 0.0
    %1122 = vmatpush1.xpose.msra.mxu0 0.0
    %1123 = vmatprep.mubr.f32.mxu0 0.0
    %1124 = vmatmul.mubr.f32.gmra.mrb[0].mxu0 %v1055
    %v1125 = vpop.f32.mrb[0].mxu0
    %v1126 = vadd.f32 0.0, %v1125
    %v1127 = vpop.f32.mrb[0].mxu0
    %1128 = vdwg.mxu0
    %1129 = vrot.lane.b32.xlu0 %v219, 112
    %v1130 = vpop.permute.xlu0 %1129
    %1131 = vrot.lane.b32.xlu0 %v219, 80
    %v1132 = vpop.permute.xlu0 %1131
    %v1133 = vsel %vm225, %v1130, 0
    %v1135 = vsel %vm225, %v1132, 0
    %1137 = vmatprep.subr.mxu0 0.0
    %1138 = vmatpush1.xpose.msra.mxu0 %v1135
    %1139 = vmatprep.subr.mxu0 0.0
    %1140 = vmatpush1.xpose.msra.mxu0 0.0
    %1141 = vmatprep.subr.mxu0 0.0
    %1142 = vmatpush1.xpose.msra.mxu0 0.0
    %1143 = vmatprep.subr.mxu0 0.0
    %1144 = vmatpush1.xpose.msra.mxu0 0.0
    %1145 = vmatprep.subr.mxu0 0.0
    %1146 = vmatpush1.xpose.msra.mxu0 0.0
    %1147 = vmatprep.subr.mxu0 0.0
    %1148 = vmatpush1.xpose.msra.mxu0 0.0
    %1149 = vmatprep.subr.mxu0 0.0
    %1150 = vmatpush1.xpose.msra.mxu0 0.0
    %1151 = vmatprep.subr.mxu0 0.0
    %1152 = vmatpush1.xpose.msra.mxu0 0.0
    %1153 = vmatprep.subr.mxu0 0.0
    %1154 = vmatpush1.xpose.msra.mxu0 0.0
    %1155 = vmatprep.subr.mxu0 0.0
    %1156 = vmatpush1.xpose.msra.mxu0 0.0
    %1157 = vmatprep.subr.mxu0 0.0
    %1158 = vmatpush1.xpose.msra.mxu0 0.0
    %1159 = vmatprep.subr.mxu0 0.0
    %1160 = vmatpush1.xpose.msra.mxu0 0.0
    %1161 = vmatprep.subr.mxu0 0.0
    %1162 = vmatpush1.xpose.msra.mxu0 0.0
    %1163 = vmatprep.subr.mxu0 0.0
    %1164 = vmatpush1.xpose.msra.mxu0 0.0
    %1165 = vmatprep.subr.mxu0 0.0
    %1166 = vmatpush1.xpose.msra.mxu0 0.0
    %1167 = vmatprep.subr.mxu0 0.0
    %1168 = vmatpush1.xpose.msra.mxu0 0.0
    %1169 = vmatprep.subr.mxu0 0.0
    %1170 = vmatpush1.xpose.msra.mxu0 0.0
    %1171 = vmatprep.subr.mxu0 0.0
    %1172 = vmatpush1.xpose.msra.mxu0 0.0
    %1173 = vmatprep.subr.mxu0 0.0
    %1174 = vmatpush1.xpose.msra.mxu0 0.0
    %1175 = vmatprep.subr.mxu0 0.0
    %1176 = vmatpush1.xpose.msra.mxu0 0.0
    %1177 = vmatprep.subr.mxu0 0.0
    %1178 = vmatpush1.xpose.msra.mxu0 0.0
    %1179 = vmatprep.subr.mxu0 0.0
    %1180 = vmatpush1.xpose.msra.mxu0 0.0
    %1181 = vmatprep.subr.mxu0 0.0
    %1182 = vmatpush1.xpose.msra.mxu0 0.0
    %1183 = vmatprep.subr.mxu0 0.0
    %1184 = vmatpush1.xpose.msra.mxu0 0.0
    %1185 = vmatprep.subr.mxu0 0.0
    %1186 = vmatpush1.xpose.msra.mxu0 0.0
    %1187 = vmatprep.subr.mxu0 0.0
    %1188 = vmatpush1.xpose.msra.mxu0 0.0
    %1189 = vmatprep.subr.mxu0 0.0
    %1190 = vmatpush1.xpose.msra.mxu0 0.0
    %1191 = vmatprep.subr.mxu0 0.0
    %1192 = vmatpush1.xpose.msra.mxu0 0.0
    %1193 = vmatprep.subr.mxu0 0.0
    %1194 = vmatpush1.xpose.msra.mxu0 0.0
    %1195 = vmatprep.subr.mxu0 0.0
    %1196 = vmatpush1.xpose.msra.mxu0 0.0
    %1197 = vmatprep.subr.mxu0 0.0
    %1198 = vmatpush1.xpose.msra.mxu0 0.0
    %1199 = vmatprep.subr.mxu0 0.0
    %1200 = vmatpush1.xpose.msra.mxu0 0.0
    %1201 = vmatprep.mubr.f32.mxu0 0.0
    %1202 = vmatmul.mubr.f32.gmra.mrb[0].mxu0 %v1133
    %v1203 = vpop.f32.mrb[0].mxu0
    %v1204 = vadd.f32 0.0, %v1203
    %v1205 = vpop.f32.mrb[0].mxu0
    %1206 = vdwg.mxu0
    %v1207 = vmul.f32 %v1126, 0.35355338
    %v1208 = vmul.f32 %v1204, 0.35355338
    %v1209 = vadd.f32 %v1207, %v60
    %v1210 = vadd.f32 %v1208, %v61
    %v1211 = vsel %vm225, %v1209, -inf
    %1212 = vmax.xlane.f32.xlu0 %v1211
    %v1213 = vpop.xlane.xlu0 %1212
    %v1214 = vsel %vm225, %v1210, -inf
    %1215 = vmax.xlane.f32.xlu0 %v1214
    %v1216 = vpop.xlane.xlu0 %1215
    %v1217 = vsub.f32 %v1209, %v1213
    %v1218 = vsub.f32 %v1210, %v1216
    %v1219 = vmul.f32 %v1217, 1.442695
    %v1220 = vpow.pop %v1219
    %v1221 = vmul.f32 %v1218, 1.442695
    %v1222 = vpow.pop %v1221
    %v1223 = vsel %vm225, %v1220, 0.0
    %1224 = vadd.xlane.f32.xlu0 %v1223
    %v1225 = vpop.xlane.xlu0 %1224
    %v1226 = vsel %vm225, %v1222, 0.0
    %1227 = vadd.xlane.f32.xlu0 %v1226
    %v1228 = vpop.xlane.xlu0 %1227
    %v1229 = vrcp.pop %v1225
    %v1230 = vrcp.pop %v1228
    %v1231 = vmul.f32 %v1220, %v1229
    %v1232 = vmul.f32 %v1222, %v1230
    %1233 = vrot.lane.b32.xlu0 %v214, 48
    %v1234 = vpop.permute.xlu0 %1233
    %v1237 = vsel %vm225, %v1231, 0
    %1239 = vmatprep.subr.mxu0 0.0
    %1240 = vmatpush1.msra.mxu0 %v1234
    %1241 = vmatprep.subr.mxu0 0.0
    %1242 = vmatpush1.msra.mxu0 0.0
    %1243 = vmatprep.subr.mxu0 0.0
    %1244 = vmatpush1.msra.mxu0 0.0
    %1245 = vmatprep.subr.mxu0 0.0
    %1246 = vmatpush1.msra.mxu0 0.0
    %1247 = vmatprep.subr.mxu0 0.0
    %1248 = vmatpush1.msra.mxu0 0.0
    %1249 = vmatprep.subr.mxu0 0.0
    %1250 = vmatpush1.msra.mxu0 0.0
    %1251 = vmatprep.subr.mxu0 0.0
    %1252 = vmatpush1.msra.mxu0 0.0
    %1253 = vmatprep.subr.mxu0 0.0
    %1254 = vmatpush1.msra.mxu0 0.0
    %1255 = vmatprep.subr.mxu0 0.0
    %1256 = vmatpush1.msra.mxu0 0.0
    %1257 = vmatprep.subr.mxu0 0.0
    %1258 = vmatpush1.msra.mxu0 0.0
    %1259 = vmatprep.subr.mxu0 0.0
    %1260 = vmatpush1.msra.mxu0 0.0
    %1261 = vmatprep.subr.mxu0 0.0
    %1262 = vmatpush1.msra.mxu0 0.0
    %1263 = vmatprep.subr.mxu0 0.0
    %1264 = vmatpush1.msra.mxu0 0.0
    %1265 = vmatprep.subr.mxu0 0.0
    %1266 = vmatpush1.msra.mxu0 0.0
    %1267 = vmatprep.subr.mxu0 0.0
    %1268 = vmatpush1.msra.mxu0 0.0
    %1269 = vmatprep.subr.mxu0 0.0
    %1270 = vmatpush1.msra.mxu0 0.0
    %1271 = vmatprep.subr.mxu0 0.0
    %1272 = vmatpush1.msra.mxu0 0.0
    %1273 = vmatprep.subr.mxu0 0.0
    %1274 = vmatpush1.msra.mxu0 0.0
    %1275 = vmatprep.subr.mxu0 0.0
    %1276 = vmatpush1.msra.mxu0 0.0
    %1277 = vmatprep.subr.mxu0 0.0
    %1278 = vmatpush1.msra.mxu0 0.0
    %1279 = vmatprep.subr.mxu0 0.0
    %1280 = vmatpush1.msra.mxu0 0.0
    %1281 = vmatprep.subr.mxu0 0.0
    %1282 = vmatpush1.msra.mxu0 0.0
    %1283 = vmatprep.subr.mxu0 0.0
    %1284 = vmatpush1.msra.mxu0 0.0
    %1285 = vmatprep.subr.mxu0 0.0
    %1286 = vmatpush1.msra.mxu0 0.0
    %1287 = vmatprep.subr.mxu0 0.0
    %1288 = vmatpush1.msra.mxu0 0.0
    %1289 = vmatprep.subr.mxu0 0.0
    %1290 = vmatpush1.msra.mxu0 0.0
    %1291 = vmatprep.subr.mxu0 0.0
    %1292 = vmatpush1.msra.mxu0 0.0
    %1293 = vmatprep.subr.mxu0 0.0
    %1294 = vmatpush1.msra.mxu0 0.0
    %1295 = vmatprep.subr.mxu0 0.0
    %1296 = vmatpush1.msra.mxu0 0.0
    %1297 = vmatprep.subr.mxu0 0.0
    %1298 = vmatpush1.msra.mxu0 0.0
    %1299 = vmatprep.subr.mxu0 0.0
    %1300 = vmatpush1.msra.mxu0 0.0
    %1301 = vmatprep.subr.mxu0 0.0
    %1302 = vmatpush1.msra.mxu0 0.0
    %1303 = vmatprep.mubr.f32.mxu0 0.0
    %1304 = vmatmul.mubr.f32.gmra.mrb[0].mxu0 %v1237
    %v1305 = vpop.f32.mrb[0].mxu0
    %v1306 = vadd.f32 0.0, %v1305
    %v1307 = vpop.f32.mrb[0].mxu0
    %1308 = vdwg.mxu0
    %1309 = vrot.lane.b32.xlu0 %v219, 48
    %v1310 = vpop.permute.xlu0 %1309
    %v1313 = vsel %vm225, %v1232, 0
    %1315 = vmatprep.subr.mxu0 0.0
    %1316 = vmatpush1.msra.mxu0 %v1310
    %1317 = vmatprep.subr.mxu0 0.0
    %1318 = vmatpush1.msra.mxu0 0.0
    %1319 = vmatprep.subr.mxu0 0.0
    %1320 = vmatpush1.msra.mxu0 0.0
    %1321 = vmatprep.subr.mxu0 0.0
    %1322 = vmatpush1.msra.mxu0 0.0
    %1323 = vmatprep.subr.mxu0 0.0
    %1324 = vmatpush1.msra.mxu0 0.0
    %1325 = vmatprep.subr.mxu0 0.0
    %1326 = vmatpush1.msra.mxu0 0.0
    %1327 = vmatprep.subr.mxu0 0.0
    %1328 = vmatpush1.msra.mxu0 0.0
    %1329 = vmatprep.subr.mxu0 0.0
    %1330 = vmatpush1.msra.mxu0 0.0
    %1331 = vmatprep.subr.mxu0 0.0
    %1332 = vmatpush1.msra.mxu0 0.0
    %1333 = vmatprep.subr.mxu0 0.0
    %1334 = vmatpush1.msra.mxu0 0.0
    %1335 = vmatprep.subr.mxu0 0.0
    %1336 = vmatpush1.msra.mxu0 0.0
    %1337 = vmatprep.subr.mxu0 0.0
    %1338 = vmatpush1.msra.mxu0 0.0
    %1339 = vmatprep.subr.mxu0 0.0
    %1340 = vmatpush1.msra.mxu0 0.0
    %1341 = vmatprep.subr.mxu0 0.0
    %1342 = vmatpush1.msra.mxu0 0.0
    %1343 = vmatprep.subr.mxu0 0.0
    %1344 = vmatpush1.msra.mxu0 0.0
    %1345 = vmatprep.subr.mxu0 0.0
    %1346 = vmatpush1.msra.mxu0 0.0
    %1347 = vmatprep.subr.mxu0 0.0
    %1348 = vmatpush1.msra.mxu0 0.0
    %1349 = vmatprep.subr.mxu0 0.0
    %1350 = vmatpush1.msra.mxu0 0.0
    %1351 = vmatprep.subr.mxu0 0.0
    %1352 = vmatpush1.msra.mxu0 0.0
    %1353 = vmatprep.subr.mxu0 0.0
    %1354 = vmatpush1.msra.mxu0 0.0
    %1355 = vmatprep.subr.mxu0 0.0
    %1356 = vmatpush1.msra.mxu0 0.0
    %1357 = vmatprep.subr.mxu0 0.0
    %1358 = vmatpush1.msra.mxu0 0.0
    %1359 = vmatprep.subr.mxu0 0.0
    %1360 = vmatpush1.msra.mxu0 0.0
    %1361 = vmatprep.subr.mxu0 0.0
    %1362 = vmatpush1.msra.mxu0 0.0
    %1363 = vmatprep.subr.mxu0 0.0
    %1364 = vmatpush1.msra.mxu0 0.0
    %1365 = vmatprep.subr.mxu0 0.0
    %1366 = vmatpush1.msra.mxu0 0.0
    %1367 = vmatprep.subr.mxu0 0.0
    %1368 = vmatpush1.msra.mxu0 0.0
    %1369 = vmatprep.subr.mxu0 0.0
    %1370 = vmatpush1.msra.mxu0 0.0
    %1371 = vmatprep.subr.mxu0 0.0
    %1372 = vmatpush1.msra.mxu0 0.0
    %1373 = vmatprep.subr.mxu0 0.0
    %1374 = vmatpush1.msra.mxu0 0.0
    %1375 = vmatprep.subr.mxu0 0.0
    %1376 = vmatpush1.msra.mxu0 0.0
    %1377 = vmatprep.subr.mxu0 0.0
    %1378 = vmatpush1.msra.mxu0 0.0
    %1379 = vmatprep.mubr.f32.mxu0 0.0
    %1380 = vmatmul.mubr.f32.gmra.mrb[0].mxu0 %v1313
    %v1381 = vpop.f32.mrb[0].mxu0
    %v1382 = vadd.f32 0.0, %v1381
    %v1383 = vpop.f32.mrb[0].mxu0
    %1384 = vdwg.mxu0
    %v1386 = vsel %vm225, %v1306, 0
    %v1389 = vsel %vm225, %v1382, 0
    %1391 = vmatprep.subr.mxu0 0.0
    %1392 = vmatpush1.msra.mxu0 %v68
    %1393 = vmatprep.subr.mxu0 0.0
    %1394 = vmatpush1.msra.mxu0 0.0
    %1395 = vmatprep.subr.mxu0 0.0
    %1396 = vmatpush1.msra.mxu0 0.0
    %1397 = vmatprep.subr.mxu0 0.0
    %1398 = vmatpush1.msra.mxu0 0.0
    %1399 = vmatprep.subr.mxu0 0.0
    %1400 = vmatpush1.msra.mxu0 0.0
    %1401 = vmatprep.subr.mxu0 0.0
    %1402 = vmatpush1.msra.mxu0 0.0
    %1403 = vmatprep.subr.mxu0 0.0
    %1404 = vmatpush1.msra.mxu0 0.0
    %1405 = vmatprep.subr.mxu0 0.0
    %1406 = vmatpush1.msra.mxu0 0.0
    %1407 = vmatprep.subr.mxu0 0.0
    %1408 = vmatpush1.msra.mxu0 0.0
    %1409 = vmatprep.subr.mxu0 0.0
    %1410 = vmatpush1.msra.mxu0 0.0
    %1411 = vmatprep.subr.mxu0 0.0
    %1412 = vmatpush1.msra.mxu0 0.0
    %1413 = vmatprep.subr.mxu0 0.0
    %1414 = vmatpush1.msra.mxu0 0.0
    %1415 = vmatprep.subr.mxu0 0.0
    %1416 = vmatpush1.msra.mxu0 0.0
    %1417 = vmatprep.subr.mxu0 0.0
    %1418 = vmatpush1.msra.mxu0 0.0
    %1419 = vmatprep.subr.mxu0 0.0
    %1420 = vmatpush1.msra.mxu0 0.0
    %1421 = vmatprep.subr.mxu0 0.0
    %1422 = vmatpush1.msra.mxu0 0.0
    %1423 = vmatprep.subr.mxu0 0.0
    %1424 = vmatpush1.msra.mxu0 0.0
    %1425 = vmatprep.subr.mxu0 0.0
    %1426 = vmatpush1.msra.mxu0 0.0
    %1427 = vmatprep.subr.mxu0 0.0
    %1428 = vmatpush1.msra.mxu0 0.0
    %1429 = vmatprep.subr.mxu0 0.0
    %1430 = vmatpush1.msra.mxu0 0.0
    %1431 = vmatprep.subr.mxu0 0.0
    %1432 = vmatpush1.msra.mxu0 0.0
    %1433 = vmatprep.subr.mxu0 0.0
    %1434 = vmatpush1.msra.mxu0 0.0
    %1435 = vmatprep.subr.mxu0 0.0
    %1436 = vmatpush1.msra.mxu0 0.0
    %1437 = vmatprep.subr.mxu0 0.0
    %1438 = vmatpush1.msra.mxu0 0.0
    %1439 = vmatprep.subr.mxu0 0.0
    %1440 = vmatpush1.msra.mxu0 0.0
    %1441 = vmatprep.subr.mxu0 0.0
    %1442 = vmatpush1.msra.mxu0 0.0
    %1443 = vmatprep.subr.mxu0 0.0
    %1444 = vmatpush1.msra.mxu0 0.0
    %1445 = vmatprep.subr.mxu0 0.0
    %1446 = vmatpush1.msra.mxu0 0.0
    %1447 = vmatprep.subr.mxu0 0.0
    %1448 = vmatpush1.msra.mxu0 0.0
    %1449 = vmatprep.subr.mxu0 0.0
    %1450 = vmatpush1.msra.mxu0 0.0
    %1451 = vmatprep.subr.mxu0 0.0
    %1452 = vmatpush1.msra.mxu0 0.0
    %1453 = vmatprep.subr.mxu0 0.0
    %1454 = vmatpush1.msra.mxu0 0.0
    %1455 = vmatprep.mubr.f32.mxu0 0.0
    %1456 = vmatmul.mubr.f32.gmra.mrb[0].mxu0 %v1386
    %v1457 = vpop.f32.mrb[0].mxu0
    %v1458 = vadd.f32 0.0, %v1457
    %v1459 = vpop.f32.mrb[0].mxu0
    %1460 = vmatprep.mubr.f32.mxu0 0.0
    %1461 = vmatmul.mubr.f32.gmra.mrb[0].mxu0 %v1389
    %v1462 = vpop.f32.mrb[0].mxu0
    %v1463 = vadd.f32 0.0, %v1462
    %v1464 = vpop.f32.mrb[0].mxu0
    %1465 = vdwg.mxu0
    %v1466 = vadd.f32 %v1043, %v1458
    %v1467 = vadd.f32 %v1048, %v1463
    %1468 = vrot.lane.b32.xlu0 %v214, 104
    %v1469 = vpop.permute.xlu0 %1468
    %1470 = vrot.lane.b32.xlu0 %v214, 72
    %v1471 = vpop.permute.xlu0 %1470
    %v1472 = vsel %vm225, %v1469, 0
    %v1474 = vsel %vm225, %v1471, 0
    %1476 = vmatprep.subr.mxu0 0.0
    %1477 = vmatpush1.xpose.msra.mxu0 %v1474
    %1478 = vmatprep.subr.mxu0 0.0
    %1479 = vmatpush1.xpose.msra.mxu0 0.0
    %1480 = vmatprep.subr.mxu0 0.0
    %1481 = vmatpush1.xpose.msra.mxu0 0.0
    %1482 = vmatprep.subr.mxu0 0.0
    %1483 = vmatpush1.xpose.msra.mxu0 0.0
    %1484 = vmatprep.subr.mxu0 0.0
    %1485 = vmatpush1.xpose.msra.mxu0 0.0
    %1486 = vmatprep.subr.mxu0 0.0
    %1487 = vmatpush1.xpose.msra.mxu0 0.0
    %1488 = vmatprep.subr.mxu0 0.0
    %1489 = vmatpush1.xpose.msra.mxu0 0.0
    %1490 = vmatprep.subr.mxu0 0.0
    %1491 = vmatpush1.xpose.msra.mxu0 0.0
    %1492 = vmatprep.subr.mxu0 0.0
    %1493 = vmatpush1.xpose.msra.mxu0 0.0
    %1494 = vmatprep.subr.mxu0 0.0
    %1495 = vmatpush1.xpose.msra.mxu0 0.0
    %1496 = vmatprep.subr.mxu0 0.0
    %1497 = vmatpush1.xpose.msra.mxu0 0.0
    %1498 = vmatprep.subr.mxu0 0.0
    %1499 = vmatpush1.xpose.msra.mxu0 0.0
    %1500 = vmatprep.subr.mxu0 0.0
    %1501 = vmatpush1.xpose.msra.mxu0 0.0
    %1502 = vmatprep.subr.mxu0 0.0
    %1503 = vmatpush1.xpose.msra.mxu0 0.0
    %1504 = vmatprep.subr.mxu0 0.0
    %1505 = vmatpush1.xpose.msra.mxu0 0.0
    %1506 = vmatprep.subr.mxu0 0.0
    %1507 = vmatpush1.xpose.msra.mxu0 0.0
    %1508 = vmatprep.subr.mxu0 0.0
    %1509 = vmatpush1.xpose.msra.mxu0 0.0
    %1510 = vmatprep.subr.mxu0 0.0
    %1511 = vmatpush1.xpose.msra.mxu0 0.0
    %1512 = vmatprep.subr.mxu0 0.0
    %1513 = vmatpush1.xpose.msra.mxu0 0.0
    %1514 = vmatprep.subr.mxu0 0.0
    %1515 = vmatpush1.xpose.msra.mxu0 0.0
    %1516 = vmatprep.subr.mxu0 0.0
    %1517 = vmatpush1.xpose.msra.mxu0 0.0
    %1518 = vmatprep.subr.mxu0 0.0
    %1519 = vmatpush1.xpose.msra.mxu0 0.0
    %1520 = vmatprep.subr.mxu0 0.0
    %1521 = vmatpush1.xpose.msra.mxu0 0.0
    %1522 = vmatprep.subr.mxu0 0.0
    %1523 = vmatpush1.xpose.msra.mxu0 0.0
    %1524 = vmatprep.subr.mxu0 0.0
    %1525 = vmatpush1.xpose.msra.mxu0 0.0
    %1526 = vmatprep.subr.mxu0 0.0
    %1527 = vmatpush1.xpose.msra.mxu0 0.0
    %1528 = vmatprep.subr.mxu0 0.0
    %1529 = vmatpush1.xpose.msra.mxu0 0.0
    %1530 = vmatprep.subr.mxu0 0.0
    %1531 = vmatpush1.xpose.msra.mxu0 0.0
    %1532 = vmatprep.subr.mxu0 0.0
    %1533 = vmatpush1.xpose.msra.mxu0 0.0
    %1534 = vmatprep.subr.mxu0 0.0
    %1535 = vmatpush1.xpose.msra.mxu0 0.0
    %1536 = vmatprep.subr.mxu0 0.0
    %1537 = vmatpush1.xpose.msra.mxu0 0.0
    %1538 = vmatprep.subr.mxu0 0.0
    %1539 = vmatpush1.xpose.msra.mxu0 0.0
    %1540 = vmatprep.mubr.f32.mxu0 0.0
    %1541 = vmatmul.mubr.f32.gmra.mrb[0].mxu0 %v1472
    %v1542 = vpop.f32.mrb[0].mxu0
    %v1543 = vadd.f32 0.0, %v1542
    %v1544 = vpop.f32.mrb[0].mxu0
    %1545 = vdwg.mxu0
    %1546 = vrot.lane.b32.xlu0 %v219, 104
    %v1547 = vpop.permute.xlu0 %1546
    %1548 = vrot.lane.b32.xlu0 %v219, 72
    %v1549 = vpop.permute.xlu0 %1548
    %v1550 = vsel %vm225, %v1547, 0
    %v1552 = vsel %vm225, %v1549, 0
    %1554 = vmatprep.subr.mxu0 0.0
    %1555 = vmatpush1.xpose.msra.mxu0 %v1552
    %1556 = vmatprep.subr.mxu0 0.0
    %1557 = vmatpush1.xpose.msra.mxu0 0.0
    %1558 = vmatprep.subr.mxu0 0.0
    %1559 = vmatpush1.xpose.msra.mxu0 0.0
    %1560 = vmatprep.subr.mxu0 0.0
    %1561 = vmatpush1.xpose.msra.mxu0 0.0
    %1562 = vmatprep.subr.mxu0 0.0
    %1563 = vmatpush1.xpose.msra.mxu0 0.0
    %1564 = vmatprep.subr.mxu0 0.0
    %1565 = vmatpush1.xpose.msra.mxu0 0.0
    %1566 = vmatprep.subr.mxu0 0.0
    %1567 = vmatpush1.xpose.msra.mxu0 0.0
    %1568 = vmatprep.subr.mxu0 0.0
    %1569 = vmatpush1.xpose.msra.mxu0 0.0
    %1570 = vmatprep.subr.mxu0 0.0
    %1571 = vmatpush1.xpose.msra.mxu0 0.0
    %1572 = vmatprep.subr.mxu0 0.0
    %1573 = vmatpush1.xpose.msra.mxu0 0.0
    %1574 = vmatprep.subr.mxu0 0.0
    %1575 = vmatpush1.xpose.msra.mxu0 0.0
    %1576 = vmatprep.subr.mxu0 0.0
    %1577 = vmatpush1.xpose.msra.mxu0 0.0
    %1578 = vmatprep.subr.mxu0 0.0
    %1579 = vmatpush1.xpose.msra.mxu0 0.0
    %1580 = vmatprep.subr.mxu0 0.0
    %1581 = vmatpush1.xpose.msra.mxu0 0.0
    %1582 = vmatprep.subr.mxu0 0.0
    %1583 = vmatpush1.xpose.msra.mxu0 0.0
    %1584 = vmatprep.subr.mxu0 0.0
    %1585 = vmatpush1.xpose.msra.mxu0 0.0
    %1586 = vmatprep.subr.mxu0 0.0
    %1587 = vmatpush1.xpose.msra.mxu0 0.0
    %1588 = vmatprep.subr.mxu0 0.0
    %1589 = vmatpush1.xpose.msra.mxu0 0.0
    %1590 = vmatprep.subr.mxu0 0.0
    %1591 = vmatpush1.xpose.msra.mxu0 0.0
    %1592 = vmatprep.subr.mxu0 0.0
    %1593 = vmatpush1.xpose.msra.mxu0 0.0
    %1594 = vmatprep.subr.mxu0 0.0
    %1595 = vmatpush1.xpose.msra.mxu0 0.0
    %1596 = vmatprep.subr.mxu0 0.0
    %1597 = vmatpush1.xpose.msra.mxu0 0.0
    %1598 = vmatprep.subr.mxu0 0.0
    %1599 = vmatpush1.xpose.msra.mxu0 0.0
    %1600 = vmatprep.subr.mxu0 0.0
    %1601 = vmatpush1.xpose.msra.mxu0 0.0
    %1602 = vmatprep.subr.mxu0 0.0
    %1603 = vmatpush1.xpose.msra.mxu0 0.0
    %1604 = vmatprep.subr.mxu0 0.0
    %1605 = vmatpush1.xpose.msra.mxu0 0.0
    %1606 = vmatprep.subr.mxu0 0.0
    %1607 = vmatpush1.xpose.msra.mxu0 0.0
    %1608 = vmatprep.subr.mxu0 0.0
    %1609 = vmatpush1.xpose.msra.mxu0 0.0
    %1610 = vmatprep.subr.mxu0 0.0
    %1611 = vmatpush1.xpose.msra.mxu0 0.0
    %1612 = vmatprep.subr.mxu0 0.0
    %1613 = vmatpush1.xpose.msra.mxu0 0.0
    %1614 = vmatprep.subr.mxu0 0.0
    %1615 = vmatpush1.xpose.msra.mxu0 0.0
    %1616 = vmatprep.subr.mxu0 0.0
    %1617 = vmatpush1.xpose.msra.mxu0 0.0
    %1618 = vmatprep.mubr.f32.mxu0 0.0
    %1619 = vmatmul.mubr.f32.gmra.mrb[0].mxu0 %v1550
    %v1620 = vpop.f32.mrb[0].mxu0
    %v1621 = vadd.f32 0.0, %v1620
    %v1622 = vpop.f32.mrb[0].mxu0
    %1623 = vdwg.mxu0
    %v1624 = vmul.f32 %v1543, 0.35355338
    %v1625 = vmul.f32 %v1621, 0.35355338
    %v1626 = vadd.f32 %v1624, %v60
    %v1627 = vadd.f32 %v1625, %v61
    %v1628 = vsel %vm225, %v1626, -inf
    %1629 = vmax.xlane.f32.xlu0 %v1628
    %v1630 = vpop.xlane.xlu0 %1629
    %v1631 = vsel %vm225, %v1627, -inf
    %1632 = vmax.xlane.f32.xlu0 %v1631
    %v1633 = vpop.xlane.xlu0 %1632
    %v1634 = vsub.f32 %v1626, %v1630
    %v1635 = vsub.f32 %v1627, %v1633
    %v1636 = vmul.f32 %v1634, 1.442695
    %v1637 = vpow.pop %v1636
    %v1638 = vmul.f32 %v1635, 1.442695
    %v1639 = vpow.pop %v1638
    %v1640 = vsel %vm225, %v1637, 0.0
    %1641 = vadd.xlane.f32.xlu0 %v1640
    %v1642 = vpop.xlane.xlu0 %1641
    %v1643 = vsel %vm225, %v1639, 0.0
    %1644 = vadd.xlane.f32.xlu0 %v1643
    %v1645 = vpop.xlane.xlu0 %1644
    %v1646 = vrcp.pop %v1642
    %v1647 = vrcp.pop %v1645
    %v1648 = vmul.f32 %v1637, %v1646
    %v1649 = vmul.f32 %v1639, %v1647
    %1650 = vrot.lane.b32.xlu0 %v214, 40
    %v1651 = vpop.permute.xlu0 %1650
    %v1654 = vsel %vm225, %v1648, 0
    %1656 = vmatprep.subr.mxu0 0.0
    %1657 = vmatpush1.msra.mxu0 %v1651
    %1658 = vmatprep.subr.mxu0 0.0
    %1659 = vmatpush1.msra.mxu0 0.0
    %1660 = vmatprep.subr.mxu0 0.0
    %1661 = vmatpush1.msra.mxu0 0.0
    %1662 = vmatprep.subr.mxu0 0.0
    %1663 = vmatpush1.msra.mxu0 0.0
    %1664 = vmatprep.subr.mxu0 0.0
    %1665 = vmatpush1.msra.mxu0 0.0
    %1666 = vmatprep.subr.mxu0 0.0
    %1667 = vmatpush1.msra.mxu0 0.0
    %1668 = vmatprep.subr.mxu0 0.0
    %1669 = vmatpush1.msra.mxu0 0.0
    %1670 = vmatprep.subr.mxu0 0.0
    %1671 = vmatpush1.msra.mxu0 0.0
    %1672 = vmatprep.subr.mxu0 0.0
    %1673 = vmatpush1.msra.mxu0 0.0
    %1674 = vmatprep.subr.mxu0 0.0
    %1675 = vmatpush1.msra.mxu0 0.0
    %1676 = vmatprep.subr.mxu0 0.0
    %1677 = vmatpush1.msra.mxu0 0.0
    %1678 = vmatprep.subr.mxu0 0.0
    %1679 = vmatpush1.msra.mxu0 0.0
    %1680 = vmatprep.subr.mxu0 0.0
    %1681 = vmatpush1.msra.mxu0 0.0
    %1682 = vmatprep.subr.mxu0 0.0
    %1683 = vmatpush1.msra.mxu0 0.0
    %1684 = vmatprep.subr.mxu0 0.0
    %1685 = vmatpush1.msra.mxu0 0.0
    %1686 = vmatprep.subr.mxu0 0.0
    %1687 = vmatpush1.msra.mxu0 0.0
    %1688 = vmatprep.subr.mxu0 0.0
    %1689 = vmatpush1.msra.mxu0 0.0
    %1690 = vmatprep.subr.mxu0 0.0
    %1691 = vmatpush1.msra.mxu0 0.0
    %1692 = vmatprep.subr.mxu0 0.0
    %1693 = vmatpush1.msra.mxu0 0.0
    %1694 = vmatprep.subr.mxu0 0.0
    %1695 = vmatpush1.msra.mxu0 0.0
    %1696 = vmatprep.subr.mxu0 0.0
    %1697 = vmatpush1.msra.mxu0 0.0
    %1698 = vmatprep.subr.mxu0 0.0
    %1699 = vmatpush1.msra.mxu0 0.0
    %1700 = vmatprep.subr.mxu0 0.0
    %1701 = vmatpush1.msra.mxu0 0.0
    %1702 = vmatprep.subr.mxu0 0.0
    %1703 = vmatpush1.msra.mxu0 0.0
    %1704 = vmatprep.subr.mxu0 0.0
    %1705 = vmatpush1.msra.mxu0 0.0
    %1706 = vmatprep.subr.mxu0 0.0
    %1707 = vmatpush1.msra.mxu0 0.0
    %1708 = vmatprep.subr.mxu0 0.0
    %1709 = vmatpush1.msra.mxu0 0.0
    %1710 = vmatprep.subr.mxu0 0.0
    %1711 = vmatpush1.msra.mxu0 0.0
    %1712 = vmatprep.subr.mxu0 0.0
    %1713 = vmatpush1.msra.mxu0 0.0
    %1714 = vmatprep.subr.mxu0 0.0
    %1715 = vmatpush1.msra.mxu0 0.0
    %1716 = vmatprep.subr.mxu0 0.0
    %1717 = vmatpush1.msra.mxu0 0.0
    %1718 = vmatprep.subr.mxu0 0.0
    %1719 = vmatpush1.msra.mxu0 0.0
    %1720 = vmatprep.mubr.f32.mxu0 0.0
    %1721 = vmatmul.mubr.f32.gmra.mrb[0].mxu0 %v1654
    %v1722 = vpop.f32.mrb[0].mxu0
    %v1723 = vadd.f32 0.0, %v1722
    %v1724 = vpop.f32.mrb[0].mxu0
    %1725 = vdwg.mxu0
    %1726 = vrot.lane.b32.xlu0 %v219, 40
    %v1727 = vpop.permute.xlu0 %1726
    %v1730 = vsel %vm225, %v1649, 0
    %1732 = vmatprep.subr.mxu0 0.0
    %1733 = vmatpush1.msra.mxu0 %v1727
    %1734 = vmatprep.subr.mxu0 0.0
    %1735 = vmatpush1.msra.mxu0 0.0
    %1736 = vmatprep.subr.mxu0 0.0
    %1737 = vmatpush1.msra.mxu0 0.0
    %1738 = vmatprep.subr.mxu0 0.0
    %1739 = vmatpush1.msra.mxu0 0.0
    %1740 = vmatprep.subr.mxu0 0.0
    %1741 = vmatpush1.msra.mxu0 0.0
    %1742 = vmatprep.subr.mxu0 0.0
    %1743 = vmatpush1.msra.mxu0 0.0
    %1744 = vmatprep.subr.mxu0 0.0
    %1745 = vmatpush1.msra.mxu0 0.0
    %1746 = vmatprep.subr.mxu0 0.0
    %1747 = vmatpush1.msra.mxu0 0.0
    %1748 = vmatprep.subr.mxu0 0.0
    %1749 = vmatpush1.msra.mxu0 0.0
    %1750 = vmatprep.subr.mxu0 0.0
    %1751 = vmatpush1.msra.mxu0 0.0
    %1752 = vmatprep.subr.mxu0 0.0
    %1753 = vmatpush1.msra.mxu0 0.0
    %1754 = vmatprep.subr.mxu0 0.0
    %1755 = vmatpush1.msra.mxu0 0.0
    %1756 = vmatprep.subr.mxu0 0.0
    %1757 = vmatpush1.msra.mxu0 0.0
    %1758 = vmatprep.subr.mxu0 0.0
    %1759 = vmatpush1.msra.mxu0 0.0
    %1760 = vmatprep.subr.mxu0 0.0
    %1761 = vmatpush1.msra.mxu0 0.0
    %1762 = vmatprep.subr.mxu0 0.0
    %1763 = vmatpush1.msra.mxu0 0.0
    %1764 = vmatprep.subr.mxu0 0.0
    %1765 = vmatpush1.msra.mxu0 0.0
    %1766 = vmatprep.subr.mxu0 0.0
    %1767 = vmatpush1.msra.mxu0 0.0
    %1768 = vmatprep.subr.mxu0 0.0
    %1769 = vmatpush1.msra.mxu0 0.0
    %1770 = vmatprep.subr.mxu0 0.0
    %1771 = vmatpush1.msra.mxu0 0.0
    %1772 = vmatprep.subr.mxu0 0.0
    %1773 = vmatpush1.msra.mxu0 0.0
    %1774 = vmatprep.subr.mxu0 0.0
    %1775 = vmatpush1.msra.mxu0 0.0
    %1776 = vmatprep.subr.mxu0 0.0
    %1777 = vmatpush1.msra.mxu0 0.0
    %1778 = vmatprep.subr.mxu0 0.0
    %1779 = vmatpush1.msra.mxu0 0.0
    %1780 = vmatprep.subr.mxu0 0.0
    %1781 = vmatpush1.msra.mxu0 0.0
    %1782 = vmatprep.subr.mxu0 0.0
    %1783 = vmatpush1.msra.mxu0 0.0
    %1784 = vmatprep.subr.mxu0 0.0
    %1785 = vmatpush1.msra.mxu0 0.0
    %1786 = vmatprep.subr.mxu0 0.0
    %1787 = vmatpush1.msra.mxu0 0.0
    %1788 = vmatprep.subr.mxu0 0.0
    %1789 = vmatpush1.msra.mxu0 0.0
    %1790 = vmatprep.subr.mxu0 0.0
    %1791 = vmatpush1.msra.mxu0 0.0
    %1792 = vmatprep.subr.mxu0 0.0
    %1793 = vmatpush1.msra.mxu0 0.0
    %1794 = vmatprep.subr.mxu0 0.0
    %1795 = vmatpush1.msra.mxu0 0.0
    %1796 = vmatprep.mubr.f32.mxu0 0.0
    %1797 = vmatmul.mubr.f32.gmra.mrb[0].mxu0 %v1730
    %v1798 = vpop.f32.mrb[0].mxu0
    %v1799 = vadd.f32 0.0, %v1798
    %v1800 = vpop.f32.mrb[0].mxu0
    %1801 = vdwg.mxu0
    %v1803 = vsel %vm225, %v1723, 0
    %v1806 = vsel %vm225, %v1799, 0
    %1808 = vmatprep.subr.mxu0 0.0
    %1809 = vmatpush1.msra.mxu0 %v69
    %1810 = vmatprep.subr.mxu0 0.0
    %1811 = vmatpush1.msra.mxu0 0.0
    %1812 = vmatprep.subr.mxu0 0.0
    %1813 = vmatpush1.msra.mxu0 0.0
    %1814 = vmatprep.subr.mxu0 0.0
    %1815 = vmatpush1.msra.mxu0 0.0
    %1816 = vmatprep.subr.mxu0 0.0
    %1817 = vmatpush1.msra.mxu0 0.0
    %1818 = vmatprep.subr.mxu0 0.0
    %1819 = vmatpush1.msra.mxu0 0.0
    %1820 = vmatprep.subr.mxu0 0.0
    %1821 = vmatpush1.msra.mxu0 0.0
    %1822 = vmatprep.subr.mxu0 0.0
    %1823 = vmatpush1.msra.mxu0 0.0
    %1824 = vmatprep.subr.mxu0 0.0
    %1825 = vmatpush1.msra.mxu0 0.0
    %1826 = vmatprep.subr.mxu0 0.0
    %1827 = vmatpush1.msra.mxu0 0.0
    %1828 = vmatprep.subr.mxu0 0.0
    %1829 = vmatpush1.msra.mxu0 0.0
    %1830 = vmatprep.subr.mxu0 0.0
    %1831 = vmatpush1.msra.mxu0 0.0
    %1832 = vmatprep.subr.mxu0 0.0
    %1833 = vmatpush1.msra.mxu0 0.0
    %1834 = vmatprep.subr.mxu0 0.0
    %1835 = vmatpush1.msra.mxu0 0.0
    %1836 = vmatprep.subr.mxu0 0.0
    %1837 = vmatpush1.msra.mxu0 0.0
    %1838 = vmatprep.subr.mxu0 0.0
    %1839 = vmatpush1.msra.mxu0 0.0
    %1840 = vmatprep.subr.mxu0 0.0
    %1841 = vmatpush1.msra.mxu0 0.0
    %1842 = vmatprep.subr.mxu0 0.0
    %1843 = vmatpush1.msra.mxu0 0.0
    %1844 = vmatprep.subr.mxu0 0.0
    %1845 = vmatpush1.msra.mxu0 0.0
    %1846 = vmatprep.subr.mxu0 0.0
    %1847 = vmatpush1.msra.mxu0 0.0
    %1848 = vmatprep.subr.mxu0 0.0
    %1849 = vmatpush1.msra.mxu0 0.0
    %1850 = vmatprep.subr.mxu0 0.0
    %1851 = vmatpush1.msra.mxu0 0.0
    %1852 = vmatprep.subr.mxu0 0.0
    %1853 = vmatpush1.msra.mxu0 0.0
    %1854 = vmatprep.subr.mxu0 0.0
    %1855 = vmatpush1.msra.mxu0 0.0
    %1856 = vmatprep.subr.mxu0 0.0
    %1857 = vmatpush1.msra.mxu0 0.0
    %1858 = vmatprep.subr.mxu0 0.0
    %1859 = vmatpush1.msra.mxu0 0.0
    %1860 = vmatprep.subr.mxu0 0.0
    %1861 = vmatpush1.msra.mxu0 0.0
    %1862 = vmatprep.subr.mxu0 0.0
    %1863 = vmatpush1.msra.mxu0 0.0
    %1864 = vmatprep.subr.mxu0 0.0
    %1865 = vmatpush1.msra.mxu0 0.0
    %1866 = vmatprep.subr.mxu0 0.0
    %1867 = vmatpush1.msra.mxu0 0.0
    %1868 = vmatprep.subr.mxu0 0.0
    %1869 = vmatpush1.msra.mxu0 0.0
    %1870 = vmatprep.subr.mxu0 0.0
    %1871 = vmatpush1.msra.mxu0 0.0
    %1872 = vmatprep.mubr.f32.mxu0 0.0
    %1873 = vmatmul.mubr.f32.gmra.mrb[0].mxu0 %v1803
    %v1874 = vpop.f32.mrb[0].mxu0
    %v1875 = vadd.f32 0.0, %v1874
    %v1876 = vpop.f32.mrb[0].mxu0
    %1877 = vmatprep.mubr.f32.mxu0 0.0
    %1878 = vmatmul.mubr.f32.gmra.mrb[0].mxu0 %v1806
    %v1879 = vpop.f32.mrb[0].mxu0
    %v1880 = vadd.f32 0.0, %v1879
    %v1881 = vpop.f32.mrb[0].mxu0
    %1882 = vdwg.mxu0
    %v1883 = vadd.f32 %v1466, %v1875
    %v1884 = vadd.f32 %v1467, %v1880
    %v1885 = vadd.f32 %v58, %v1883
    %v1886 = vadd.f32 %v59, %v1884
    %v1887 = vlaneseq
    %v1888 = vshrl.u32 %v1887, 7
    %v1889 = vsub.s32 1, %v1888
    %v1890 = vrot.slane %v82, %v1889
    %v1891 = vadd.f32 %v1885, %v1890
    %v1892 = vadd.f32 %v1886, %v1890
    %v1893 = vsel %vm83, %v1891, 0.0
    %1894 = vadd.xlane.f32.xlu0 %v1893
    %v1895 = vpop.xlane.xlu0 %1894
    %v1896 = vsel %vm83, %v1892, 0.0
    %1897 = vadd.xlane.f32.xlu0 %v1896
    %v1898 = vpop.xlane.xlu0 %1897
    %v1899 = vmul.f32 %v1895, %v90
    %v1900 = vmul.f32 %v1898, %v90
    %v1901 = vsub.f32 %v1891, %v1899
    %v1902 = vsub.f32 %v1892, %v1900
    %v1903 = vmul.f32 %v1901, %v1901
    %v1904 = vmul.f32 %v1902, %v1902
    %v1905 = vsel %vm83, %v1903, 0.0
    %1906 = vadd.xlane.f32.xlu0 %v1905
    %v1907 = vpop.xlane.xlu0 %1906
    %v1908 = vsel %vm83, %v1904, 0.0
    %1909 = vadd.xlane.f32.xlu0 %v1908
    %v1910 = vpop.xlane.xlu0 %1909
    %v1911 = vmul.f32 %v1907, 0.032258064
    %v1912 = vmul.f32 %v1910, 0.032258064
    %v1913 = vrsqrt.pop %v1911
    %v1914 = vmul.f32 %v1911, %v1913
    %vm1915 = vcmp.eq.f32.partialorder %v1911, inf
    %v1916 = vsel %vm1915, %v1911, %v1914
    %vm1917 = vcmp.eq.f32.partialorder %v1911, 0.0
    %v1918 = vand.u32 %v1911, 2147483648
    %v1919 = vsel %vm1917, %v1918, %v1916
    %v1920 = vrsqrt.pop %v1912
    %v1921 = vmul.f32 %v1912, %v1920
    %vm1922 = vcmp.eq.f32.partialorder %v1912, inf
    %v1923 = vsel %vm1922, %v1912, %v1921
    %vm1924 = vcmp.eq.f32.partialorder %v1912, 0.0
    %v1925 = vand.u32 %v1912, 2147483648
    %v1926 = vsel %vm1924, %v1925, %v1923
    %v1927 = vlaneseq
    %v1928 = vshrl.u32 %v1927, 7
    %v1929 = vsub.s32 6, %v1928
    %v1930 = vrot.slane %v82, %v1929
    %v1931 = vmul.f32 %v1930, %v1901
    %v1932 = vmul.f32 %v1930, %v1902
    %v1933 = vadd.f32 %v1919, 1e-06
    %v1934 = vadd.f32 %v1926, 1e-06
    %v1935 = vrcp.pop %v1933
    %v1936 = vmul.f32 %v1931, %v1935
    %v1937 = vrcp.pop %v1934
    %v1938 = vmul.f32 %v1932, %v1937
    %v1939 = vlaneseq
    %v1940 = vshrl.u32 %v1939, 7
    %v1941 = vsub.s32 7, %v1940
    %v1942 = vrot.slane %v82, %v1941
    %v1943 = vadd.f32 %v1936, %v1942
    %v1944 = vadd.f32 %v1938, %v1942
    %v1945 = vlaneseq
    %v1946 = vshrl.u32 %v1945, 7
    %v1947 = vsub.s32 2, %v1946
    %v1948 = vrot.slane %v82, %v1947
    %v1950 = vsel %vm83, %v1943, 0
    %v1953 = vsel %vm83, %v1944, 0
    %1955 = vmatprep.subr.mxu0 0.0
    %1956 = vmatpush1.msra.mxu0 %v70
    %1957 = vmatprep.subr.mxu0 0.0
    %1958 = vmatpush1.msra.mxu0 %v71
    %1959 = vmatprep.subr.mxu0 0.0
    %1960 = vmatpush1.msra.mxu0 %v72
    %1961 = vmatprep.subr.mxu0 0.0
    %1962 = vmatpush1.msra.mxu0 %v73
    %1963 = vmatprep.subr.mxu0 0.0
    %1964 = vmatpush1.msra.mxu0 0.0
    %1965 = vmatprep.subr.mxu0 0.0
    %1966 = vmatpush1.msra.mxu0 0.0
    %1967 = vmatprep.subr.mxu0 0.0
    %1968 = vmatpush1.msra.mxu0 0.0
    %1969 = vmatprep.subr.mxu0 0.0
    %1970 = vmatpush1.msra.mxu0 0.0
    %1971 = vmatprep.subr.mxu0 0.0
    %1972 = vmatpush1.msra.mxu0 0.0
    %1973 = vmatprep.subr.mxu0 0.0
    %1974 = vmatpush1.msra.mxu0 0.0
    %1975 = vmatprep.subr.mxu0 0.0
    %1976 = vmatpush1.msra.mxu0 0.0
    %1977 = vmatprep.subr.mxu0 0.0
    %1978 = vmatpush1.msra.mxu0 0.0
    %1979 = vmatprep.subr.mxu0 0.0
    %1980 = vmatpush1.msra.mxu0 0.0
    %1981 = vmatprep.subr.mxu0 0.0
    %1982 = vmatpush1.msra.mxu0 0.0
    %1983 = vmatprep.subr.mxu0 0.0
    %1984 = vmatpush1.msra.mxu0 0.0
    %1985 = vmatprep.subr.mxu0 0.0
    %1986 = vmatpush1.msra.mxu0 0.0
    %1987 = vmatprep.subr.mxu0 0.0
    %1988 = vmatpush1.msra.mxu0 0.0
    %1989 = vmatprep.subr.mxu0 0.0
    %1990 = vmatpush1.msra.mxu0 0.0
    %1991 = vmatprep.subr.mxu0 0.0
    %1992 = vmatpush1.msra.mxu0 0.0
    %1993 = vmatprep.subr.mxu0 0.0
    %1994 = vmatpush1.msra.mxu0 0.0
    %1995 = vmatprep.subr.mxu0 0.0
    %1996 = vmatpush1.msra.mxu0 0.0
    %1997 = vmatprep.subr.mxu0 0.0
    %1998 = vmatpush1.msra.mxu0 0.0
    %1999 = vmatprep.subr.mxu0 0.0
    %2000 = vmatpush1.msra.mxu0 0.0
    %2001 = vmatprep.subr.mxu0 0.0
    %2002 = vmatpush1.msra.mxu0 0.0
    %2003 = vmatprep.subr.mxu0 0.0
    %2004 = vmatpush1.msra.mxu0 0.0
    %2005 = vmatprep.subr.mxu0 0.0
    %2006 = vmatpush1.msra.mxu0 0.0
    %2007 = vmatprep.subr.mxu0 0.0
    %2008 = vmatpush1.msra.mxu0 0.0
    %2009 = vmatprep.subr.mxu0 0.0
    %2010 = vmatpush1.msra.mxu0 0.0
    %2011 = vmatprep.subr.mxu0 0.0
    %2012 = vmatpush1.msra.mxu0 0.0
    %2013 = vmatprep.subr.mxu0 0.0
    %2014 = vmatpush1.msra.mxu0 0.0
    %2015 = vmatprep.subr.mxu0 0.0
    %2016 = vmatpush1.msra.mxu0 0.0
    %2017 = vmatprep.subr.mxu0 0.0
    %2018 = vmatpush1.msra.mxu0 0.0
    %2019 = vmatprep.mubr.f32.mxu0 0.0
    %2020 = vmatmul.mubr.f32.gmra.mrb[0].mxu0 %v1950
    %v2021 = vpop.f32.mrb[0].mxu0
    %v2022 = vadd.f32 %v1948, %v2021
    %v2023 = vpop.f32.mrb[0].mxu0
    %2024 = vmatprep.mubr.f32.mxu0 0.0
    %2025 = vmatmul.mubr.f32.gmra.mrb[0].mxu0 %v1953
    %v2026 = vpop.f32.mrb[0].mxu0
    %v2027 = vadd.f32 %v1948, %v2026
    %v2028 = vpop.f32.mrb[0].mxu0
    %2029 = vdwg.mxu0
    %v2030 = vmax.f32 %v2022, 0.0
    %v2031 = vmax.f32 %v2027, 0.0
    %vm2032 = vcmask 523264
    %v2034 = vsel %vm2032, %v2030, 0
    %v2037 = vsel %vm2032, %v2031, 0
    %2039 = vmatprep.subr.mxu0 0.0
    %2040 = vmatpush1.msra.mxu0 %v74
    %2041 = vmatprep.subr.mxu0 0.0
    %2042 = vmatpush1.msra.mxu0 %v75
    %2043 = vmatprep.subr.mxu0 0.0
    %2044 = vmatpush1.msra.mxu0 %v76
    %2045 = vmatprep.subr.mxu0 0.0
    %2046 = vmatpush1.msra.mxu0 %v77
    %2047 = vmatprep.subr.mxu0 0.0
    %2048 = vmatpush1.msra.mxu0 %v78
    %2049 = vmatprep.subr.mxu0 0.0
    %2050 = vmatpush1.msra.mxu0 %v79
    %2051 = vmatprep.subr.mxu0 0.0
    %2052 = vmatpush1.msra.mxu0 %v80
    %2053 = vmatprep.subr.mxu0 0.0
    %2054 = vmatpush1.msra.mxu0 %v81
    %2055 = vmatprep.subr.mxu0 0.0
    %2056 = vmatpush1.msra.mxu0 0.0
    %2057 = vmatprep.subr.mxu0 0.0
    %2058 = vmatpush1.msra.mxu0 0.0
    %2059 = vmatprep.subr.mxu0 0.0
    %2060 = vmatpush1.msra.mxu0 0.0
    %2061 = vmatprep.subr.mxu0 0.0
    %2062 = vmatpush1.msra.mxu0 0.0
    %2063 = vmatprep.subr.mxu0 0.0
    %2064 = vmatpush1.msra.mxu0 0.0
    %2065 = vmatprep.subr.mxu0 0.0
    %2066 = vmatpush1.msra.mxu0 0.0
    %2067 = vmatprep.subr.mxu0 0.0
    %2068 = vmatpush1.msra.mxu0 0.0
    %2069 = vmatprep.subr.mxu0 0.0
    %2070 = vmatpush1.msra.mxu0 0.0
    %2071 = vmatprep.subr.mxu0 0.0
    %2072 = vmatpush1.msra.mxu0 0.0
    %2073 = vmatprep.subr.mxu0 0.0
    %2074 = vmatpush1.msra.mxu0 0.0
    %2075 = vmatprep.subr.mxu0 0.0
    %2076 = vmatpush1.msra.mxu0 0.0
    %2077 = vmatprep.subr.mxu0 0.0
    %2078 = vmatpush1.msra.mxu0 0.0
    %2079 = vmatprep.subr.mxu0 0.0
    %2080 = vmatpush1.msra.mxu0 0.0
    %2081 = vmatprep.subr.mxu0 0.0
    %2082 = vmatpush1.msra.mxu0 0.0
    %2083 = vmatprep.subr.mxu0 0.0
    %2084 = vmatpush1.msra.mxu0 0.0
    %2085 = vmatprep.subr.mxu0 0.0
    %2086 = vmatpush1.msra.mxu0 0.0
    %2087 = vmatprep.subr.mxu0 0.0
    %2088 = vmatpush1.msra.mxu0 0.0
    %2089 = vmatprep.subr.mxu0 0.0
    %2090 = vmatpush1.msra.mxu0 0.0
    %2091 = vmatprep.subr.mxu0 0.0
    %2092 = vmatpush1.msra.mxu0 0.0
    %2093 = vmatprep.subr.mxu0 0.0
    %2094 = vmatpush1.msra.mxu0 0.0
    %2095 = vmatprep.subr.mxu0 0.0
    %2096 = vmatpush1.msra.mxu0 0.0
    %2097 = vmatprep.subr.mxu0 0.0
    %2098 = vmatpush1.msra.mxu0 0.0
    %2099 = vmatprep.subr.mxu0 0.0
    %2100 = vmatpush1.msra.mxu0 0.0
    %2101 = vmatprep.subr.mxu0 0.0
    %2102 = vmatpush1.msra.mxu0 0.0
    %2103 = vmatprep.mubr.f32.mxu0 0.0
    %2104 = vmatmul.mubr.f32.gmra.mrb[0].mxu0 %v2034
    %v2105 = vpop.f32.mrb[0].mxu0
    %v2106 = vadd.f32 0.0, %v2105
    %v2107 = vpop.f32.mrb[0].mxu0
    %2108 = vmatprep.mubr.f32.mxu0 0.0
    %2109 = vmatmul.mubr.f32.gmra.mrb[0].mxu0 %v2037
    %v2110 = vpop.f32.mrb[0].mxu0
    %v2111 = vadd.f32 0.0, %v2110
    %v2112 = vpop.f32.mrb[0].mxu0
    %2113 = vdwg.mxu0
    %v2114 = vadd.f32 %v1891, %v2106
    %v2115 = vadd.f32 %v1892, %v2111
    %v2116 = vlaneseq
    %v2117 = vshrl.u32 %v2116, 7
    %v2118 = vsub.s32 3, %v2117
    %v2119 = vrot.slane %v82, %v2118
    %v2120 = vadd.f32 %v2114, %v2119
    %v2121 = vadd.f32 %v2115, %v2119
    %s2122 = scalar_lea.vmem %s2, 32
    %v2123 = vld [vmem:[%s2122] sm:$0xff]
    %v2124 = vld [vmem:[%s2122 + $0x8] sm:$0xff]
    %v2125 = vld [vmem:[%s2122 + $0x10] sm:$0xff]
    %v2126 = vld [vmem:[%s2122 + $0x18] sm:$0xff]
    %s2127 = scalar_lea.vmem %s3, 32
    %v2128 = vld [vmem:[%s2127] sm:$0xff]
    %v2129 = vld [vmem:[%s2127 + $0x8] sm:$0xff]
    %v2130 = vld [vmem:[%s2127 + $0x10] sm:$0xff]
    %v2131 = vld [vmem:[%s2127 + $0x18] sm:$0xff]
    %s2132 = scalar_lea.vmem %s4, 32
    %v2133 = vld [vmem:[%s2132] sm:$0xff]
    %v2134 = vld [vmem:[%s2132 + $0x8] sm:$0xff]
    %v2135 = vld [vmem:[%s2132 + $0x10] sm:$0xff]
    %v2136 = vld [vmem:[%s2132 + $0x18] sm:$0xff]
    %s2137 = scalar_lea.vmem %s5, 64
    %v2138 = vld [vmem:[%s2137] sm:$0xff]
    %v2139 = vld [vmem:[%s2137 + $0x8] sm:$0xff]
    %v2140 = vld [vmem:[%s2137 + $0x10] sm:$0xff]
    %v2141 = vld [vmem:[%s2137 + $0x18] sm:$0xff]
    %v2142 = vld [vmem:[%s2137 + $0x20] sm:$0xff]
    %v2143 = vld [vmem:[%s2137 + $0x28] sm:$0xff]
    %v2144 = vld [vmem:[%s2137 + $0x30] sm:$0xff]
    %v2145 = vld [vmem:[%s2137 + $0x38] sm:$0xff]
    %s2146 = scalar_lea.vmem %s6, 8
    %v2147 = vld [vmem:[%s2146] sm:$0xff]
    %v2148 = vsel %vm83, %v2120, 0.0
    %2149 = vadd.xlane.f32.xlu0 %v2148
    %v2150 = vpop.xlane.xlu0 %2149
    %v2151 = vsel %vm83, %v2121, 0.0
    %2152 = vadd.xlane.f32.xlu0 %v2151
    %v2153 = vpop.xlane.xlu0 %2152
    %v2154 = vmul.f32 %v2150, %v90
    %v2155 = vmul.f32 %v2153, %v90
    %v2156 = vsub.f32 %v2120, %v2154
    %v2157 = vsub.f32 %v2121, %v2155
    %v2158 = vmul.f32 %v2156, %v2156
    %v2159 = vmul.f32 %v2157, %v2157
    %v2160 = vsel %vm83, %v2158, 0.0
    %2161 = vadd.xlane.f32.xlu0 %v2160
    %v2162 = vpop.xlane.xlu0 %2161
    %v2163 = vsel %vm83, %v2159, 0.0
    %2164 = vadd.xlane.f32.xlu0 %v2163
    %v2165 = vpop.xlane.xlu0 %2164
    %v2166 = vmul.f32 %v2162, 0.032258064
    %v2167 = vmul.f32 %v2165, 0.032258064
    %v2168 = vrsqrt.pop %v2166
    %v2169 = vmul.f32 %v2166, %v2168
    %vm2170 = vcmp.eq.f32.partialorder %v2166, inf
    %v2171 = vsel %vm2170, %v2166, %v2169
    %vm2172 = vcmp.eq.f32.partialorder %v2166, 0.0
    %v2173 = vand.u32 %v2166, 2147483648
    %v2174 = vsel %vm2172, %v2173, %v2171
    %v2175 = vrsqrt.pop %v2167
    %v2176 = vmul.f32 %v2167, %v2175
    %vm2177 = vcmp.eq.f32.partialorder %v2167, inf
    %v2178 = vsel %vm2177, %v2167, %v2176
    %vm2179 = vcmp.eq.f32.partialorder %v2167, 0.0
    %v2180 = vand.u32 %v2167, 2147483648
    %v2181 = vsel %vm2179, %v2180, %v2178
    %v2182 = vlaneseq
    %v2183 = vshrl.u32 %v2182, 7
    %v2184 = vsub.s32 4, %v2183
    %v2185 = vrot.slane %v2147, %v2184
    %v2186 = vmul.f32 %v2185, %v2156
    %v2187 = vmul.f32 %v2185, %v2157
    %v2188 = vadd.f32 %v2174, 1e-06
    %v2189 = vadd.f32 %v2181, 1e-06
    %v2190 = vrcp.pop %v2188
    %v2191 = vmul.f32 %v2186, %v2190
    %v2192 = vrcp.pop %v2189
    %v2193 = vmul.f32 %v2187, %v2192
    %v2194 = vlaneseq
    %v2195 = vshrl.u32 %v2194, 7
    %v2196 = vsub.s32 5, %v2195
    %v2197 = vrot.slane %v2147, %v2196
    %v2198 = vadd.f32 %v2191, %v2197
    %v2199 = vadd.f32 %v2193, %v2197
    %v2200 = vlaneseq
    %v2201 = vshrl.u32 %v2200, 7
    %v2202 = vsub.s32 0, %v2201
    %v2203 = vrot.slane %v2147, %v2202
    %v2205 = vsel %vm83, %v2198, 0
    %v2208 = vsel %vm83, %v2199, 0
    %2210 = vmatprep.subr.mxu0 0.0
    %2211 = vmatpush1.msra.mxu0 %v2123
    %2212 = vmatprep.subr.mxu0 0.0
    %2213 = vmatpush1.msra.mxu0 %v2124
    %2214 = vmatprep.subr.mxu0 0.0
    %2215 = vmatpush1.msra.mxu0 %v2125
    %2216 = vmatprep.subr.mxu0 0.0
    %2217 = vmatpush1.msra.mxu0 %v2126
    %2218 = vmatprep.subr.mxu0 0.0
    %2219 = vmatpush1.msra.mxu0 0.0
    %2220 = vmatprep.subr.mxu0 0.0
    %2221 = vmatpush1.msra.mxu0 0.0
    %2222 = vmatprep.subr.mxu0 0.0
    %2223 = vmatpush1.msra.mxu0 0.0
    %2224 = vmatprep.subr.mxu0 0.0
    %2225 = vmatpush1.msra.mxu0 0.0
    %2226 = vmatprep.subr.mxu0 0.0
    %2227 = vmatpush1.msra.mxu0 0.0
    %2228 = vmatprep.subr.mxu0 0.0
    %2229 = vmatpush1.msra.mxu0 0.0
    %2230 = vmatprep.subr.mxu0 0.0
    %2231 = vmatpush1.msra.mxu0 0.0
    %2232 = vmatprep.subr.mxu0 0.0
    %2233 = vmatpush1.msra.mxu0 0.0
    %2234 = vmatprep.subr.mxu0 0.0
    %2235 = vmatpush1.msra.mxu0 0.0
    %2236 = vmatprep.subr.mxu0 0.0
    %2237 = vmatpush1.msra.mxu0 0.0
    %2238 = vmatprep.subr.mxu0 0.0
    %2239 = vmatpush1.msra.mxu0 0.0
    %2240 = vmatprep.subr.mxu0 0.0
    %2241 = vmatpush1.msra.mxu0 0.0
    %2242 = vmatprep.subr.mxu0 0.0
    %2243 = vmatpush1.msra.mxu0 0.0
    %2244 = vmatprep.subr.mxu0 0.0
    %2245 = vmatpush1.msra.mxu0 0.0
    %2246 = vmatprep.subr.mxu0 0.0
    %2247 = vmatpush1.msra.mxu0 0.0
    %2248 = vmatprep.subr.mxu0 0.0
    %2249 = vmatpush1.msra.mxu0 0.0
    %2250 = vmatprep.subr.mxu0 0.0
    %2251 = vmatpush1.msra.mxu0 0.0
    %2252 = vmatprep.subr.mxu0 0.0
    %2253 = vmatpush1.msra.mxu0 0.0
    %2254 = vmatprep.subr.mxu0 0.0
    %2255 = vmatpush1.msra.mxu0 0.0
    %2256 = vmatprep.subr.mxu0 0.0
    %2257 = vmatpush1.msra.mxu0 0.0
    %2258 = vmatprep.subr.mxu0 0.0
    %2259 = vmatpush1.msra.mxu0 0.0
    %2260 = vmatprep.subr.mxu0 0.0
    %2261 = vmatpush1.msra.mxu0 0.0
    %2262 = vmatprep.subr.mxu0 0.0
    %2263 = vmatpush1.msra.mxu0 0.0
    %2264 = vmatprep.subr.mxu0 0.0
    %2265 = vmatpush1.msra.mxu0 0.0
    %2266 = vmatprep.subr.mxu0 0.0
    %2267 = vmatpush1.msra.mxu0 0.0
    %2268 = vmatprep.subr.mxu0 0.0
    %2269 = vmatpush1.msra.mxu0 0.0
    %2270 = vmatprep.subr.mxu0 0.0
    %2271 = vmatpush1.msra.mxu0 0.0
    %2272 = vmatprep.subr.mxu0 0.0
    %2273 = vmatpush1.msra.mxu0 0.0
    %2274 = vmatprep.mubr.f32.mxu0 0.0
    %2275 = vmatmul.mubr.f32.gmra.mrb[0].mxu0 %v2205
    %v2276 = vpop.f32.mrb[0].mxu0
    %v2277 = vadd.f32 %v2203, %v2276
    %v2278 = vpop.f32.mrb[0].mxu0
    %2279 = vmatprep.mubr.f32.mxu0 0.0
    %2280 = vmatmul.mubr.f32.gmra.mrb[0].mxu0 %v2208
    %v2281 = vpop.f32.mrb[0].mxu0
    %v2282 = vadd.f32 %v2203, %v2281
    %v2283 = vpop.f32.mrb[0].mxu0
    %2284 = vdwg.mxu0
    %2286 = vrot.lane.b32.xlu0 %v2277, 96
    %v2287 = vpop.permute.xlu0 %2286
    %v2288 = vsel %vm225, %v2277, 0
    %v2290 = vsel %vm225, %v2287, 0
    %2292 = vmatprep.subr.mxu0 0.0
    %2293 = vmatpush1.xpose.msra.mxu0 %v2290
    %2294 = vmatprep.subr.mxu0 0.0
    %2295 = vmatpush1.xpose.msra.mxu0 0.0
    %2296 = vmatprep.subr.mxu0 0.0
    %2297 = vmatpush1.xpose.msra.mxu0 0.0
    %2298 = vmatprep.subr.mxu0 0.0
    %2299 = vmatpush1.xpose.msra.mxu0 0.0
    %2300 = vmatprep.subr.mxu0 0.0
    %2301 = vmatpush1.xpose.msra.mxu0 0.0
    %2302 = vmatprep.subr.mxu0 0.0
    %2303 = vmatpush1.xpose.msra.mxu0 0.0
    %2304 = vmatprep.subr.mxu0 0.0
    %2305 = vmatpush1.xpose.msra.mxu0 0.0
    %2306 = vmatprep.subr.mxu0 0.0
    %2307 = vmatpush1.xpose.msra.mxu0 0.0
    %2308 = vmatprep.subr.mxu0 0.0
    %2309 = vmatpush1.xpose.msra.mxu0 0.0
    %2310 = vmatprep.subr.mxu0 0.0
    %2311 = vmatpush1.xpose.msra.mxu0 0.0
    %2312 = vmatprep.subr.mxu0 0.0
    %2313 = vmatpush1.xpose.msra.mxu0 0.0
    %2314 = vmatprep.subr.mxu0 0.0
    %2315 = vmatpush1.xpose.msra.mxu0 0.0
    %2316 = vmatprep.subr.mxu0 0.0
    %2317 = vmatpush1.xpose.msra.mxu0 0.0
    %2318 = vmatprep.subr.mxu0 0.0
    %2319 = vmatpush1.xpose.msra.mxu0 0.0
    %2320 = vmatprep.subr.mxu0 0.0
    %2321 = vmatpush1.xpose.msra.mxu0 0.0
    %2322 = vmatprep.subr.mxu0 0.0
    %2323 = vmatpush1.xpose.msra.mxu0 0.0
    %2324 = vmatprep.subr.mxu0 0.0
    %2325 = vmatpush1.xpose.msra.mxu0 0.0
    %2326 = vmatprep.subr.mxu0 0.0
    %2327 = vmatpush1.xpose.msra.mxu0 0.0
    %2328 = vmatprep.subr.mxu0 0.0
    %2329 = vmatpush1.xpose.msra.mxu0 0.0
    %2330 = vmatprep.subr.mxu0 0.0
    %2331 = vmatpush1.xpose.msra.mxu0 0.0
    %2332 = vmatprep.subr.mxu0 0.0
    %2333 = vmatpush1.xpose.msra.mxu0 0.0
    %2334 = vmatprep.subr.mxu0 0.0
    %2335 = vmatpush1.xpose.msra.mxu0 0.0
    %2336 = vmatprep.subr.mxu0 0.0
    %2337 = vmatpush1.xpose.msra.mxu0 0.0
    %2338 = vmatprep.subr.mxu0 0.0
    %2339 = vmatpush1.xpose.msra.mxu0 0.0
    %2340 = vmatprep.subr.mxu0 0.0
    %2341 = vmatpush1.xpose.msra.mxu0 0.0
    %2342 = vmatprep.subr.mxu0 0.0
    %2343 = vmatpush1.xpose.msra.mxu0 0.0
    %2344 = vmatprep.subr.mxu0 0.0
    %2345 = vmatpush1.xpose.msra.mxu0 0.0
    %2346 = vmatprep.subr.mxu0 0.0
    %2347 = vmatpush1.xpose.msra.mxu0 0.0
    %2348 = vmatprep.subr.mxu0 0.0
    %2349 = vmatpush1.xpose.msra.mxu0 0.0
    %2350 = vmatprep.subr.mxu0 0.0
    %2351 = vmatpush1.xpose.msra.mxu0 0.0
    %2352 = vmatprep.subr.mxu0 0.0
    %2353 = vmatpush1.xpose.msra.mxu0 0.0
    %2354 = vmatprep.subr.mxu0 0.0
    %2355 = vmatpush1.xpose.msra.mxu0 0.0
    %2356 = vmatprep.mubr.f32.mxu0 0.0
    %2357 = vmatmul.mubr.f32.gmra.mrb[0].mxu0 %v2288
    %v2358 = vpop.f32.mrb[0].mxu0
    %v2359 = vadd.f32 0.0, %v2358
    %v2360 = vpop.f32.mrb[0].mxu0
    %2361 = vdwg.mxu0
    %2363 = vrot.lane.b32.xlu0 %v2282, 96
    %v2364 = vpop.permute.xlu0 %2363
    %v2365 = vsel %vm225, %v2282, 0
    %v2367 = vsel %vm225, %v2364, 0
    %2369 = vmatprep.subr.mxu0 0.0
    %2370 = vmatpush1.xpose.msra.mxu0 %v2367
    %2371 = vmatprep.subr.mxu0 0.0
    %2372 = vmatpush1.xpose.msra.mxu0 0.0
    %2373 = vmatprep.subr.mxu0 0.0
    %2374 = vmatpush1.xpose.msra.mxu0 0.0
    %2375 = vmatprep.subr.mxu0 0.0
    %2376 = vmatpush1.xpose.msra.mxu0 0.0
    %2377 = vmatprep.subr.mxu0 0.0
    %2378 = vmatpush1.xpose.msra.mxu0 0.0
    %2379 = vmatprep.subr.mxu0 0.0
    %2380 = vmatpush1.xpose.msra.mxu0 0.0
    %2381 = vmatprep.subr.mxu0 0.0
    %2382 = vmatpush1.xpose.msra.mxu0 0.0
    %2383 = vmatprep.subr.mxu0 0.0
    %2384 = vmatpush1.xpose.msra.mxu0 0.0
    %2385 = vmatprep.subr.mxu0 0.0
    %2386 = vmatpush1.xpose.msra.mxu0 0.0
    %2387 = vmatprep.subr.mxu0 0.0
    %2388 = vmatpush1.xpose.msra.mxu0 0.0
    %2389 = vmatprep.subr.mxu0 0.0
    %2390 = vmatpush1.xpose.msra.mxu0 0.0
    %2391 = vmatprep.subr.mxu0 0.0
    %2392 = vmatpush1.xpose.msra.mxu0 0.0
    %2393 = vmatprep.subr.mxu0 0.0
    %2394 = vmatpush1.xpose.msra.mxu0 0.0
    %2395 = vmatprep.subr.mxu0 0.0
    %2396 = vmatpush1.xpose.msra.mxu0 0.0
    %2397 = vmatprep.subr.mxu0 0.0
    %2398 = vmatpush1.xpose.msra.mxu0 0.0
    %2399 = vmatprep.subr.mxu0 0.0
    %2400 = vmatpush1.xpose.msra.mxu0 0.0
    %2401 = vmatprep.subr.mxu0 0.0
    %2402 = vmatpush1.xpose.msra.mxu0 0.0
    %2403 = vmatprep.subr.mxu0 0.0
    %2404 = vmatpush1.xpose.msra.mxu0 0.0
    %2405 = vmatprep.subr.mxu0 0.0
    %2406 = vmatpush1.xpose.msra.mxu0 0.0
    %2407 = vmatprep.subr.mxu0 0.0
    %2408 = vmatpush1.xpose.msra.mxu0 0.0
    %2409 = vmatprep.subr.mxu0 0.0
    %2410 = vmatpush1.xpose.msra.mxu0 0.0
    %2411 = vmatprep.subr.mxu0 0.0
    %2412 = vmatpush1.xpose.msra.mxu0 0.0
    %2413 = vmatprep.subr.mxu0 0.0
    %2414 = vmatpush1.xpose.msra.mxu0 0.0
    %2415 = vmatprep.subr.mxu0 0.0
    %2416 = vmatpush1.xpose.msra.mxu0 0.0
    %2417 = vmatprep.subr.mxu0 0.0
    %2418 = vmatpush1.xpose.msra.mxu0 0.0
    %2419 = vmatprep.subr.mxu0 0.0
    %2420 = vmatpush1.xpose.msra.mxu0 0.0
    %2421 = vmatprep.subr.mxu0 0.0
    %2422 = vmatpush1.xpose.msra.mxu0 0.0
    %2423 = vmatprep.subr.mxu0 0.0
    %2424 = vmatpush1.xpose.msra.mxu0 0.0
    %2425 = vmatprep.subr.mxu0 0.0
    %2426 = vmatpush1.xpose.msra.mxu0 0.0
    %2427 = vmatprep.subr.mxu0 0.0
    %2428 = vmatpush1.xpose.msra.mxu0 0.0
    %2429 = vmatprep.subr.mxu0 0.0
    %2430 = vmatpush1.xpose.msra.mxu0 0.0
    %2431 = vmatprep.subr.mxu0 0.0
    %2432 = vmatpush1.xpose.msra.mxu0 0.0
    %2433 = vmatprep.mubr.f32.mxu0 0.0
    %2434 = vmatmul.mubr.f32.gmra.mrb[0].mxu0 %v2365
    %v2435 = vpop.f32.mrb[0].mxu0
    %v2436 = vadd.f32 0.0, %v2435
    %v2437 = vpop.f32.mrb[0].mxu0
    %2438 = vdwg.mxu0
    %v2439 = vmul.f32 %v2359, 0.35355338
    %v2440 = vmul.f32 %v2436, 0.35355338
    %v2441 = vadd.f32 %v2439, %v60
    %v2442 = vadd.f32 %v2440, %v61
    %v2443 = vsel %vm225, %v2441, -inf
    %2444 = vmax.xlane.f32.xlu0 %v2443
    %v2445 = vpop.xlane.xlu0 %2444
    %v2446 = vsel %vm225, %v2442, -inf
    %2447 = vmax.xlane.f32.xlu0 %v2446
    %v2448 = vpop.xlane.xlu0 %2447
    %v2449 = vsub.f32 %v2441, %v2445
    %v2450 = vsub.f32 %v2442, %v2448
    %v2451 = vmul.f32 %v2449, 1.442695
    %v2452 = vpow.pop %v2451
    %v2453 = vmul.f32 %v2450, 1.442695
    %v2454 = vpow.pop %v2453
    %v2455 = vsel %vm225, %v2452, 0.0
    %2456 = vadd.xlane.f32.xlu0 %v2455
    %v2457 = vpop.xlane.xlu0 %2456
    %v2458 = vsel %vm225, %v2454, 0.0
    %2459 = vadd.xlane.f32.xlu0 %v2458
    %v2460 = vpop.xlane.xlu0 %2459
    %v2461 = vrcp.pop %v2457
    %v2462 = vrcp.pop %v2460
    %v2463 = vmul.f32 %v2452, %v2461
    %v2464 = vmul.f32 %v2454, %v2462
    %2465 = vrot.lane.b32.xlu0 %v2277, 64
    %v2466 = vpop.permute.xlu0 %2465
    %v2469 = vsel %vm225, %v2463, 0
    %2471 = vmatprep.subr.mxu0 0.0
    %2472 = vmatpush1.msra.mxu0 %v2466
    %2473 = vmatprep.subr.mxu0 0.0
    %2474 = vmatpush1.msra.mxu0 0.0
    %2475 = vmatprep.subr.mxu0 0.0
    %2476 = vmatpush1.msra.mxu0 0.0
    %2477 = vmatprep.subr.mxu0 0.0
    %2478 = vmatpush1.msra.mxu0 0.0
    %2479 = vmatprep.subr.mxu0 0.0
    %2480 = vmatpush1.msra.mxu0 0.0
    %2481 = vmatprep.subr.mxu0 0.0
    %2482 = vmatpush1.msra.mxu0 0.0
    %2483 = vmatprep.subr.mxu0 0.0
    %2484 = vmatpush1.msra.mxu0 0.0
    %2485 = vmatprep.subr.mxu0 0.0
    %2486 = vmatpush1.msra.mxu0 0.0
    %2487 = vmatprep.subr.mxu0 0.0
    %2488 = vmatpush1.msra.mxu0 0.0
    %2489 = vmatprep.subr.mxu0 0.0
    %2490 = vmatpush1.msra.mxu0 0.0
    %2491 = vmatprep.subr.mxu0 0.0
    %2492 = vmatpush1.msra.mxu0 0.0
    %2493 = vmatprep.subr.mxu0 0.0
    %2494 = vmatpush1.msra.mxu0 0.0
    %2495 = vmatprep.subr.mxu0 0.0
    %2496 = vmatpush1.msra.mxu0 0.0
    %2497 = vmatprep.subr.mxu0 0.0
    %2498 = vmatpush1.msra.mxu0 0.0
    %2499 = vmatprep.subr.mxu0 0.0
    %2500 = vmatpush1.msra.mxu0 0.0
    %2501 = vmatprep.subr.mxu0 0.0
    %2502 = vmatpush1.msra.mxu0 0.0
    %2503 = vmatprep.subr.mxu0 0.0
    %2504 = vmatpush1.msra.mxu0 0.0
    %2505 = vmatprep.subr.mxu0 0.0
    %2506 = vmatpush1.msra.mxu0 0.0
    %2507 = vmatprep.subr.mxu0 0.0
    %2508 = vmatpush1.msra.mxu0 0.0
    %2509 = vmatprep.subr.mxu0 0.0
    %2510 = vmatpush1.msra.mxu0 0.0
    %2511 = vmatprep.subr.mxu0 0.0
    %2512 = vmatpush1.msra.mxu0 0.0
    %2513 = vmatprep.subr.mxu0 0.0
    %2514 = vmatpush1.msra.mxu0 0.0
    %2515 = vmatprep.subr.mxu0 0.0
    %2516 = vmatpush1.msra.mxu0 0.0
    %2517 = vmatprep.subr.mxu0 0.0
    %2518 = vmatpush1.msra.mxu0 0.0
    %2519 = vmatprep.subr.mxu0 0.0
    %2520 = vmatpush1.msra.mxu0 0.0
    %2521 = vmatprep.subr.mxu0 0.0
    %2522 = vmatpush1.msra.mxu0 0.0
    %2523 = vmatprep.subr.mxu0 0.0
    %2524 = vmatpush1.msra.mxu0 0.0
    %2525 = vmatprep.subr.mxu0 0.0
    %2526 = vmatpush1.msra.mxu0 0.0
    %2527 = vmatprep.subr.mxu0 0.0
    %2528 = vmatpush1.msra.mxu0 0.0
    %2529 = vmatprep.subr.mxu0 0.0
    %2530 = vmatpush1.msra.mxu0 0.0
    %2531 = vmatprep.subr.mxu0 0.0
    %2532 = vmatpush1.msra.mxu0 0.0
    %2533 = vmatprep.subr.mxu0 0.0
    %2534 = vmatpush1.msra.mxu0 0.0
    %2535 = vmatprep.mubr.f32.mxu0 0.0
    %2536 = vmatmul.mubr.f32.gmra.mrb[0].mxu0 %v2469
    %v2537 = vpop.f32.mrb[0].mxu0
    %v2538 = vadd.f32 0.0, %v2537
    %v2539 = vpop.f32.mrb[0].mxu0
    %2540 = vdwg.mxu0
    %2541 = vrot.lane.b32.xlu0 %v2282, 64
    %v2542 = vpop.permute.xlu0 %2541
    %v2545 = vsel %vm225, %v2464, 0
    %2547 = vmatprep.subr.mxu0 0.0
    %2548 = vmatpush1.msra.mxu0 %v2542
    %2549 = vmatprep.subr.mxu0 0.0
    %2550 = vmatpush1.msra.mxu0 0.0
    %2551 = vmatprep.subr.mxu0 0.0
    %2552 = vmatpush1.msra.mxu0 0.0
    %2553 = vmatprep.subr.mxu0 0.0
    %2554 = vmatpush1.msra.mxu0 0.0
    %2555 = vmatprep.subr.mxu0 0.0
    %2556 = vmatpush1.msra.mxu0 0.0
    %2557 = vmatprep.subr.mxu0 0.0
    %2558 = vmatpush1.msra.mxu0 0.0
    %2559 = vmatprep.subr.mxu0 0.0
    %2560 = vmatpush1.msra.mxu0 0.0
    %2561 = vmatprep.subr.mxu0 0.0
    %2562 = vmatpush1.msra.mxu0 0.0
    %2563 = vmatprep.subr.mxu0 0.0
    %2564 = vmatpush1.msra.mxu0 0.0
    %2565 = vmatprep.subr.mxu0 0.0
    %2566 = vmatpush1.msra.mxu0 0.0
    %2567 = vmatprep.subr.mxu0 0.0
    %2568 = vmatpush1.msra.mxu0 0.0
    %2569 = vmatprep.subr.mxu0 0.0
    %2570 = vmatpush1.msra.mxu0 0.0
    %2571 = vmatprep.subr.mxu0 0.0
    %2572 = vmatpush1.msra.mxu0 0.0
    %2573 = vmatprep.subr.mxu0 0.0
    %2574 = vmatpush1.msra.mxu0 0.0
    %2575 = vmatprep.subr.mxu0 0.0
    %2576 = vmatpush1.msra.mxu0 0.0
    %2577 = vmatprep.subr.mxu0 0.0
    %2578 = vmatpush1.msra.mxu0 0.0
    %2579 = vmatprep.subr.mxu0 0.0
    %2580 = vmatpush1.msra.mxu0 0.0
    %2581 = vmatprep.subr.mxu0 0.0
    %2582 = vmatpush1.msra.mxu0 0.0
    %2583 = vmatprep.subr.mxu0 0.0
    %2584 = vmatpush1.msra.mxu0 0.0
    %2585 = vmatprep.subr.mxu0 0.0
    %2586 = vmatpush1.msra.mxu0 0.0
    %2587 = vmatprep.subr.mxu0 0.0
    %2588 = vmatpush1.msra.mxu0 0.0
    %2589 = vmatprep.subr.mxu0 0.0
    %2590 = vmatpush1.msra.mxu0 0.0
    %2591 = vmatprep.subr.mxu0 0.0
    %2592 = vmatpush1.msra.mxu0 0.0
    %2593 = vmatprep.subr.mxu0 0.0
    %2594 = vmatpush1.msra.mxu0 0.0
    %2595 = vmatprep.subr.mxu0 0.0
    %2596 = vmatpush1.msra.mxu0 0.0
    %2597 = vmatprep.subr.mxu0 0.0
    %2598 = vmatpush1.msra.mxu0 0.0
    %2599 = vmatprep.subr.mxu0 0.0
    %2600 = vmatpush1.msra.mxu0 0.0
    %2601 = vmatprep.subr.mxu0 0.0
    %2602 = vmatpush1.msra.mxu0 0.0
    %2603 = vmatprep.subr.mxu0 0.0
    %2604 = vmatpush1.msra.mxu0 0.0
    %2605 = vmatprep.subr.mxu0 0.0
    %2606 = vmatpush1.msra.mxu0 0.0
    %2607 = vmatprep.subr.mxu0 0.0
    %2608 = vmatpush1.msra.mxu0 0.0
    %2609 = vmatprep.subr.mxu0 0.0
    %2610 = vmatpush1.msra.mxu0 0.0
    %2611 = vmatprep.mubr.f32.mxu0 0.0
    %2612 = vmatmul.mubr.f32.gmra.mrb[0].mxu0 %v2545
    %v2613 = vpop.f32.mrb[0].mxu0
    %v2614 = vadd.f32 0.0, %v2613
    %v2615 = vpop.f32.mrb[0].mxu0
    %2616 = vdwg.mxu0
    %2617 = vrot.lane.b32.xlu0 %v2277, 120
    %v2618 = vpop.permute.xlu0 %2617
    %2619 = vrot.lane.b32.xlu0 %v2277, 88
    %v2620 = vpop.permute.xlu0 %2619
    %v2621 = vsel %vm225, %v2618, 0
    %v2623 = vsel %vm225, %v2620, 0
    %2625 = vmatprep.subr.mxu0 0.0
    %2626 = vmatpush1.xpose.msra.mxu0 %v2623
    %2627 = vmatprep.subr.mxu0 0.0
    %2628 = vmatpush1.xpose.msra.mxu0 0.0
    %2629 = vmatprep.subr.mxu0 0.0
    %2630 = vmatpush1.xpose.msra.mxu0 0.0
    %2631 = vmatprep.subr.mxu0 0.0
    %2632 = vmatpush1.xpose.msra.mxu0 0.0
    %2633 = vmatprep.subr.mxu0 0.0
    %2634 = vmatpush1.xpose.msra.mxu0 0.0
    %2635 = vmatprep.subr.mxu0 0.0
    %2636 = vmatpush1.xpose.msra.mxu0 0.0
    %2637 = vmatprep.subr.mxu0 0.0
    %2638 = vmatpush1.xpose.msra.mxu0 0.0
    %2639 = vmatprep.subr.mxu0 0.0
    %2640 = vmatpush1.xpose.msra.mxu0 0.0
    %2641 = vmatprep.subr.mxu0 0.0
    %2642 = vmatpush1.xpose.msra.mxu0 0.0
    %2643 = vmatprep.subr.mxu0 0.0
    %2644 = vmatpush1.xpose.msra.mxu0 0.0
    %2645 = vmatprep.subr.mxu0 0.0
    %2646 = vmatpush1.xpose.msra.mxu0 0.0
    %2647 = vmatprep.subr.mxu0 0.0
    %2648 = vmatpush1.xpose.msra.mxu0 0.0
    %2649 = vmatprep.subr.mxu0 0.0
    %2650 = vmatpush1.xpose.msra.mxu0 0.0
    %2651 = vmatprep.subr.mxu0 0.0
    %2652 = vmatpush1.xpose.msra.mxu0 0.0
    %2653 = vmatprep.subr.mxu0 0.0
    %2654 = vmatpush1.xpose.msra.mxu0 0.0
    %2655 = vmatprep.subr.mxu0 0.0
    %2656 = vmatpush1.xpose.msra.mxu0 0.0
    %2657 = vmatprep.subr.mxu0 0.0
    %2658 = vmatpush1.xpose.msra.mxu0 0.0
    %2659 = vmatprep.subr.mxu0 0.0
    %2660 = vmatpush1.xpose.msra.mxu0 0.0
    %2661 = vmatprep.subr.mxu0 0.0
    %2662 = vmatpush1.xpose.msra.mxu0 0.0
    %2663 = vmatprep.subr.mxu0 0.0
    %2664 = vmatpush1.xpose.msra.mxu0 0.0
    %2665 = vmatprep.subr.mxu0 0.0
    %2666 = vmatpush1.xpose.msra.mxu0 0.0
    %2667 = vmatprep.subr.mxu0 0.0
    %2668 = vmatpush1.xpose.msra.mxu0 0.0
    %2669 = vmatprep.subr.mxu0 0.0
    %2670 = vmatpush1.xpose.msra.mxu0 0.0
    %2671 = vmatprep.subr.mxu0 0.0
    %2672 = vmatpush1.xpose.msra.mxu0 0.0
    %2673 = vmatprep.subr.mxu0 0.0
    %2674 = vmatpush1.xpose.msra.mxu0 0.0
    %2675 = vmatprep.subr.mxu0 0.0
    %2676 = vmatpush1.xpose.msra.mxu0 0.0
    %2677 = vmatprep.subr.mxu0 0.0
    %2678 = vmatpush1.xpose.msra.mxu0 0.0
    %2679 = vmatprep.subr.mxu0 0.0
    %2680 = vmatpush1.xpose.msra.mxu0 0.0
    %2681 = vmatprep.subr.mxu0 0.0
    %2682 = vmatpush1.xpose.msra.mxu0 0.0
    %2683 = vmatprep.subr.mxu0 0.0
    %2684 = vmatpush1.xpose.msra.mxu0 0.0
    %2685 = vmatprep.subr.mxu0 0.0
    %2686 = vmatpush1.xpose.msra.mxu0 0.0
    %2687 = vmatprep.subr.mxu0 0.0
    %2688 = vmatpush1.xpose.msra.mxu0 0.0
    %2689 = vmatprep.mubr.f32.mxu0 0.0
    %2690 = vmatmul.mubr.f32.gmra.mrb[0].mxu0 %v2621
    %v2691 = vpop.f32.mrb[0].mxu0
    %v2692 = vadd.f32 0.0, %v2691
    %v2693 = vpop.f32.mrb[0].mxu0
    %2694 = vdwg.mxu0
    %2695 = vrot.lane.b32.xlu0 %v2282, 120
    %v2696 = vpop.permute.xlu0 %2695
    %2697 = vrot.lane.b32.xlu0 %v2282, 88
    %v2698 = vpop.permute.xlu0 %2697
    %v2699 = vsel %vm225, %v2696, 0
    %v2701 = vsel %vm225, %v2698, 0
    %2703 = vmatprep.subr.mxu0 0.0
    %2704 = vmatpush1.xpose.msra.mxu0 %v2701
    %2705 = vmatprep.subr.mxu0 0.0
    %2706 = vmatpush1.xpose.msra.mxu0 0.0
    %2707 = vmatprep.subr.mxu0 0.0
    %2708 = vmatpush1.xpose.msra.mxu0 0.0
    %2709 = vmatprep.subr.mxu0 0.0
    %2710 = vmatpush1.xpose.msra.mxu0 0.0
    %2711 = vmatprep.subr.mxu0 0.0
    %2712 = vmatpush1.xpose.msra.mxu0 0.0
    %2713 = vmatprep.subr.mxu0 0.0
    %2714 = vmatpush1.xpose.msra.mxu0 0.0
    %2715 = vmatprep.subr.mxu0 0.0
    %2716 = vmatpush1.xpose.msra.mxu0 0.0
    %2717 = vmatprep.subr.mxu0 0.0
    %2718 = vmatpush1.xpose.msra.mxu0 0.0
    %2719 = vmatprep.subr.mxu0 0.0
    %2720 = vmatpush1.xpose.msra.mxu0 0.0
    %2721 = vmatprep.subr.mxu0 0.0
    %2722 = vmatpush1.xpose.msra.mxu0 0.0
    %2723 = vmatprep.subr.mxu0 0.0
    %2724 = vmatpush1.xpose.msra.mxu0 0.0
    %2725 = vmatprep.subr.mxu0 0.0
    %2726 = vmatpush1.xpose.msra.mxu0 0.0
    %2727 = vmatprep.subr.mxu0 0.0
    %2728 = vmatpush1.xpose.msra.mxu0 0.0
    %2729 = vmatprep.subr.mxu0 0.0
    %2730 = vmatpush1.xpose.msra.mxu0 0.0
    %2731 = vmatprep.subr.mxu0 0.0
    %2732 = vmatpush1.xpose.msra.mxu0 0.0
    %2733 = vmatprep.subr.mxu0 0.0
    %2734 = vmatpush1.xpose.msra.mxu0 0.0
    %2735 = vmatprep.subr.mxu0 0.0
    %2736 = vmatpush1.xpose.msra.mxu0 0.0
    %2737 = vmatprep.subr.mxu0 0.0
    %2738 = vmatpush1.xpose.msra.mxu0 0.0
    %2739 = vmatprep.subr.mxu0 0.0
    %2740 = vmatpush1.xpose.msra.mxu0 0.0
    %2741 = vmatprep.subr.mxu0 0.0
    %2742 = vmatpush1.xpose.msra.mxu0 0.0
    %2743 = vmatprep.subr.mxu0 0.0
    %2744 = vmatpush1.xpose.msra.mxu0 0.0
    %2745 = vmatprep.subr.mxu0 0.0
    %2746 = vmatpush1.xpose.msra.mxu0 0.0
    %2747 = vmatprep.subr.mxu0 0.0
    %2748 = vmatpush1.xpose.msra.mxu0 0.0
    %2749 = vmatprep.subr.mxu0 0.0
    %2750 = vmatpush1.xpose.msra.mxu0 0.0
    %2751 = vmatprep.subr.mxu0 0.0
    %2752 = vmatpush1.xpose.msra.mxu0 0.0
    %2753 = vmatprep.subr.mxu0 0.0
    %2754 = vmatpush1.xpose.msra.mxu0 0.0
    %2755 = vmatprep.subr.mxu0 0.0
    %2756 = vmatpush1.xpose.msra.mxu0 0.0
    %2757 = vmatprep.subr.mxu0 0.0
    %2758 = vmatpush1.xpose.msra.mxu0 0.0
    %2759 = vmatprep.subr.mxu0 0.0
    %2760 = vmatpush1.xpose.msra.mxu0 0.0
    %2761 = vmatprep.subr.mxu0 0.0
    %2762 = vmatpush1.xpose.msra.mxu0 0.0
    %2763 = vmatprep.subr.mxu0 0.0
    %2764 = vmatpush1.xpose.msra.mxu0 0.0
    %2765 = vmatprep.subr.mxu0 0.0
    %2766 = vmatpush1.xpose.msra.mxu0 0.0
    %2767 = vmatprep.mubr.f32.mxu0 0.0
    %2768 = vmatmul.mubr.f32.gmra.mrb[0].mxu0 %v2699
    %v2769 = vpop.f32.mrb[0].mxu0
    %v2770 = vadd.f32 0.0, %v2769
    %v2771 = vpop.f32.mrb[0].mxu0
    %2772 = vdwg.mxu0
    %v2773 = vmul.f32 %v2692, 0.35355338
    %v2774 = vmul.f32 %v2770, 0.35355338
    %v2775 = vadd.f32 %v2773, %v60
    %v2776 = vadd.f32 %v2774, %v61
    %v2777 = vsel %vm225, %v2775, -inf
    %2778 = vmax.xlane.f32.xlu0 %v2777
    %v2779 = vpop.xlane.xlu0 %2778
    %v2780 = vsel %vm225, %v2776, -inf
    %2781 = vmax.xlane.f32.xlu0 %v2780
    %v2782 = vpop.xlane.xlu0 %2781
    %v2783 = vsub.f32 %v2775, %v2779
    %v2784 = vsub.f32 %v2776, %v2782
    %v2785 = vmul.f32 %v2783, 1.442695
    %v2786 = vpow.pop %v2785
    %v2787 = vmul.f32 %v2784, 1.442695
    %v2788 = vpow.pop %v2787
    %v2789 = vsel %vm225, %v2786, 0.0
    %2790 = vadd.xlane.f32.xlu0 %v2789
    %v2791 = vpop.xlane.xlu0 %2790
    %v2792 = vsel %vm225, %v2788, 0.0
    %2793 = vadd.xlane.f32.xlu0 %v2792
    %v2794 = vpop.xlane.xlu0 %2793
    %v2795 = vrcp.pop %v2791
    %v2796 = vrcp.pop %v2794
    %v2797 = vmul.f32 %v2786, %v2795
    %v2798 = vmul.f32 %v2788, %v2796
    %2799 = vrot.lane.b32.xlu0 %v2277, 56
    %v2800 = vpop.permute.xlu0 %2799
    %v2803 = vsel %vm225, %v2797, 0
    %2805 = vmatprep.subr.mxu0 0.0
    %2806 = vmatpush1.msra.mxu0 %v2800
    %2807 = vmatprep.subr.mxu0 0.0
    %2808 = vmatpush1.msra.mxu0 0.0
    %2809 = vmatprep.subr.mxu0 0.0
    %2810 = vmatpush1.msra.mxu0 0.0
    %2811 = vmatprep.subr.mxu0 0.0
    %2812 = vmatpush1.msra.mxu0 0.0
    %2813 = vmatprep.subr.mxu0 0.0
    %2814 = vmatpush1.msra.mxu0 0.0
    %2815 = vmatprep.subr.mxu0 0.0
    %2816 = vmatpush1.msra.mxu0 0.0
    %2817 = vmatprep.subr.mxu0 0.0
    %2818 = vmatpush1.msra.mxu0 0.0
    %2819 = vmatprep.subr.mxu0 0.0
    %2820 = vmatpush1.msra.mxu0 0.0
    %2821 = vmatprep.subr.mxu0 0.0
    %2822 = vmatpush1.msra.mxu0 0.0
    %2823 = vmatprep.subr.mxu0 0.0
    %2824 = vmatpush1.msra.mxu0 0.0
    %2825 = vmatprep.subr.mxu0 0.0
    %2826 = vmatpush1.msra.mxu0 0.0
    %2827 = vmatprep.subr.mxu0 0.0
    %2828 = vmatpush1.msra.mxu0 0.0
    %2829 = vmatprep.subr.mxu0 0.0
    %2830 = vmatpush1.msra.mxu0 0.0
    %2831 = vmatprep.subr.mxu0 0.0
    %2832 = vmatpush1.msra.mxu0 0.0
    %2833 = vmatprep.subr.mxu0 0.0
    %2834 = vmatpush1.msra.mxu0 0.0
    %2835 = vmatprep.subr.mxu0 0.0
    %2836 = vmatpush1.msra.mxu0 0.0
    %2837 = vmatprep.subr.mxu0 0.0
    %2838 = vmatpush1.msra.mxu0 0.0
    %2839 = vmatprep.subr.mxu0 0.0
    %2840 = vmatpush1.msra.mxu0 0.0
    %2841 = vmatprep.subr.mxu0 0.0
    %2842 = vmatpush1.msra.mxu0 0.0
    %2843 = vmatprep.subr.mxu0 0.0
    %2844 = vmatpush1.msra.mxu0 0.0
    %2845 = vmatprep.subr.mxu0 0.0
    %2846 = vmatpush1.msra.mxu0 0.0
    %2847 = vmatprep.subr.mxu0 0.0
    %2848 = vmatpush1.msra.mxu0 0.0
    %2849 = vmatprep.subr.mxu0 0.0
    %2850 = vmatpush1.msra.mxu0 0.0
    %2851 = vmatprep.subr.mxu0 0.0
    %2852 = vmatpush1.msra.mxu0 0.0
    %2853 = vmatprep.subr.mxu0 0.0
    %2854 = vmatpush1.msra.mxu0 0.0
    %2855 = vmatprep.subr.mxu0 0.0
    %2856 = vmatpush1.msra.mxu0 0.0
    %2857 = vmatprep.subr.mxu0 0.0
    %2858 = vmatpush1.msra.mxu0 0.0
    %2859 = vmatprep.subr.mxu0 0.0
    %2860 = vmatpush1.msra.mxu0 0.0
    %2861 = vmatprep.subr.mxu0 0.0
    %2862 = vmatpush1.msra.mxu0 0.0
    %2863 = vmatprep.subr.mxu0 0.0
    %2864 = vmatpush1.msra.mxu0 0.0
    %2865 = vmatprep.subr.mxu0 0.0
    %2866 = vmatpush1.msra.mxu0 0.0
    %2867 = vmatprep.subr.mxu0 0.0
    %2868 = vmatpush1.msra.mxu0 0.0
    %2869 = vmatprep.mubr.f32.mxu0 0.0
    %2870 = vmatmul.mubr.f32.gmra.mrb[0].mxu0 %v2803
    %v2871 = vpop.f32.mrb[0].mxu0
    %v2872 = vadd.f32 0.0, %v2871
    %v2873 = vpop.f32.mrb[0].mxu0
    %2874 = vdwg.mxu0
    %2875 = vrot.lane.b32.xlu0 %v2282, 56
    %v2876 = vpop.permute.xlu0 %2875
    %v2879 = vsel %vm225, %v2798, 0
    %2881 = vmatprep.subr.mxu0 0.0
    %2882 = vmatpush1.msra.mxu0 %v2876
    %2883 = vmatprep.subr.mxu0 0.0
    %2884 = vmatpush1.msra.mxu0 0.0
    %2885 = vmatprep.subr.mxu0 0.0
    %2886 = vmatpush1.msra.mxu0 0.0
    %2887 = vmatprep.subr.mxu0 0.0
    %2888 = vmatpush1.msra.mxu0 0.0
    %2889 = vmatprep.subr.mxu0 0.0
    %2890 = vmatpush1.msra.mxu0 0.0
    %2891 = vmatprep.subr.mxu0 0.0
    %2892 = vmatpush1.msra.mxu0 0.0
    %2893 = vmatprep.subr.mxu0 0.0
    %2894 = vmatpush1.msra.mxu0 0.0
    %2895 = vmatprep.subr.mxu0 0.0
    %2896 = vmatpush1.msra.mxu0 0.0
    %2897 = vmatprep.subr.mxu0 0.0
    %2898 = vmatpush1.msra.mxu0 0.0
    %2899 = vmatprep.subr.mxu0 0.0
    %2900 = vmatpush1.msra.mxu0 0.0
    %2901 = vmatprep.subr.mxu0 0.0
    %2902 = vmatpush1.msra.mxu0 0.0
    %2903 = vmatprep.subr.mxu0 0.0
    %2904 = vmatpush1.msra.mxu0 0.0
    %2905 = vmatprep.subr.mxu0 0.0
    %2906 = vmatpush1.msra.mxu0 0.0
    %2907 = vmatprep.subr.mxu0 0.0
    %2908 = vmatpush1.msra.mxu0 0.0
    %2909 = vmatprep.subr.mxu0 0.0
    %2910 = vmatpush1.msra.mxu0 0.0
    %2911 = vmatprep.subr.mxu0 0.0
    %2912 = vmatpush1.msra.mxu0 0.0
    %2913 = vmatprep.subr.mxu0 0.0
    %2914 = vmatpush1.msra.mxu0 0.0
    %2915 = vmatprep.subr.mxu0 0.0
    %2916 = vmatpush1.msra.mxu0 0.0
    %2917 = vmatprep.subr.mxu0 0.0
    %2918 = vmatpush1.msra.mxu0 0.0
    %2919 = vmatprep.subr.mxu0 0.0
    %2920 = vmatpush1.msra.mxu0 0.0
    %2921 = vmatprep.subr.mxu0 0.0
    %2922 = vmatpush1.msra.mxu0 0.0
    %2923 = vmatprep.subr.mxu0 0.0
    %2924 = vmatpush1.msra.mxu0 0.0
    %2925 = vmatprep.subr.mxu0 0.0
    %2926 = vmatpush1.msra.mxu0 0.0
    %2927 = vmatprep.subr.mxu0 0.0
    %2928 = vmatpush1.msra.mxu0 0.0
    %2929 = vmatprep.subr.mxu0 0.0
    %2930 = vmatpush1.msra.mxu0 0.0
    %2931 = vmatprep.subr.mxu0 0.0
    %2932 = vmatpush1.msra.mxu0 0.0
    %2933 = vmatprep.subr.mxu0 0.0
    %2934 = vmatpush1.msra.mxu0 0.0
    %2935 = vmatprep.subr.mxu0 0.0
    %2936 = vmatpush1.msra.mxu0 0.0
    %2937 = vmatprep.subr.mxu0 0.0
    %2938 = vmatpush1.msra.mxu0 0.0
    %2939 = vmatprep.subr.mxu0 0.0
    %2940 = vmatpush1.msra.mxu0 0.0
    %2941 = vmatprep.subr.mxu0 0.0
    %2942 = vmatpush1.msra.mxu0 0.0
    %2943 = vmatprep.subr.mxu0 0.0
    %2944 = vmatpush1.msra.mxu0 0.0
    %2945 = vmatprep.mubr.f32.mxu0 0.0
    %2946 = vmatmul.mubr.f32.gmra.mrb[0].mxu0 %v2879
    %v2947 = vpop.f32.mrb[0].mxu0
    %v2948 = vadd.f32 0.0, %v2947
    %v2949 = vpop.f32.mrb[0].mxu0
    %2950 = vdwg.mxu0
    %v2952 = vsel %vm225, %v2872, 0
    %v2955 = vsel %vm225, %v2948, 0
    %2957 = vmatprep.subr.mxu0 0.0
    %2958 = vmatpush1.msra.mxu0 %v2129
    %2959 = vmatprep.subr.mxu0 0.0
    %2960 = vmatpush1.msra.mxu0 0.0
    %2961 = vmatprep.subr.mxu0 0.0
    %2962 = vmatpush1.msra.mxu0 0.0
    %2963 = vmatprep.subr.mxu0 0.0
    %2964 = vmatpush1.msra.mxu0 0.0
    %2965 = vmatprep.subr.mxu0 0.0
    %2966 = vmatpush1.msra.mxu0 0.0
    %2967 = vmatprep.subr.mxu0 0.0
    %2968 = vmatpush1.msra.mxu0 0.0
    %2969 = vmatprep.subr.mxu0 0.0
    %2970 = vmatpush1.msra.mxu0 0.0
    %2971 = vmatprep.subr.mxu0 0.0
    %2972 = vmatpush1.msra.mxu0 0.0
    %2973 = vmatprep.subr.mxu0 0.0
    %2974 = vmatpush1.msra.mxu0 0.0
    %2975 = vmatprep.subr.mxu0 0.0
    %2976 = vmatpush1.msra.mxu0 0.0
    %2977 = vmatprep.subr.mxu0 0.0
    %2978 = vmatpush1.msra.mxu0 0.0
    %2979 = vmatprep.subr.mxu0 0.0
    %2980 = vmatpush1.msra.mxu0 0.0
    %2981 = vmatprep.subr.mxu0 0.0
    %2982 = vmatpush1.msra.mxu0 0.0
    %2983 = vmatprep.subr.mxu0 0.0
    %2984 = vmatpush1.msra.mxu0 0.0
    %2985 = vmatprep.subr.mxu0 0.0
    %2986 = vmatpush1.msra.mxu0 0.0
    %2987 = vmatprep.subr.mxu0 0.0
    %2988 = vmatpush1.msra.mxu0 0.0
    %2989 = vmatprep.subr.mxu0 0.0
    %2990 = vmatpush1.msra.mxu0 0.0
    %2991 = vmatprep.subr.mxu0 0.0
    %2992 = vmatpush1.msra.mxu0 0.0
    %2993 = vmatprep.subr.mxu0 0.0
    %2994 = vmatpush1.msra.mxu0 0.0
    %2995 = vmatprep.subr.mxu0 0.0
    %2996 = vmatpush1.msra.mxu0 0.0
    %2997 = vmatprep.subr.mxu0 0.0
    %2998 = vmatpush1.msra.mxu0 0.0
    %2999 = vmatprep.subr.mxu0 0.0
    %3000 = vmatpush1.msra.mxu0 0.0
    %3001 = vmatprep.subr.mxu0 0.0
    %3002 = vmatpush1.msra.mxu0 0.0
    %3003 = vmatprep.subr.mxu0 0.0
    %3004 = vmatpush1.msra.mxu0 0.0
    %3005 = vmatprep.subr.mxu0 0.0
    %3006 = vmatpush1.msra.mxu0 0.0
    %3007 = vmatprep.subr.mxu0 0.0
    %3008 = vmatpush1.msra.mxu0 0.0
    %3009 = vmatprep.subr.mxu0 0.0
    %3010 = vmatpush1.msra.mxu0 0.0
    %3011 = vmatprep.subr.mxu0 0.0
    %3012 = vmatpush1.msra.mxu0 0.0
    %3013 = vmatprep.subr.mxu0 0.0
    %3014 = vmatpush1.msra.mxu0 0.0
    %3015 = vmatprep.subr.mxu0 0.0
    %3016 = vmatpush1.msra.mxu0 0.0
    %3017 = vmatprep.subr.mxu0 0.0
    %3018 = vmatpush1.msra.mxu0 0.0
    %3019 = vmatprep.subr.mxu0 0.0
    %3020 = vmatpush1.msra.mxu0 0.0
    %3021 = vmatprep.mubr.f32.mxu0 0.0
    %3022 = vmatmul.mubr.f32.gmra.mrb[0].mxu0 %v2952
    %v3023 = vpop.f32.mrb[0].mxu0
    %v3024 = vadd.f32 0.0, %v3023
    %v3025 = vpop.f32.mrb[0].mxu0
    %3026 = vmatprep.mubr.f32.mxu0 0.0
    %3027 = vmatmul.mubr.f32.gmra.mrb[0].mxu0 %v2955
    %v3028 = vpop.f32.mrb[0].mxu0
    %v3029 = vadd.f32 0.0, %v3028
    %v3030 = vpop.f32.mrb[0].mxu0
    %3031 = vdwg.mxu0
    %v3033 = vsel %vm225, %v2538, 0
    %v3036 = vsel %vm225, %v2614, 0
    %3038 = vmatprep.subr.mxu0 0.0
    %3039 = vmatpush1.msra.mxu0 %v2128
    %3040 = vmatprep.subr.mxu0 0.0
    %3041 = vmatpush1.msra.mxu0 0.0
    %3042 = vmatprep.subr.mxu0 0.0
    %3043 = vmatpush1.msra.mxu0 0.0
    %3044 = vmatprep.subr.mxu0 0.0
    %3045 = vmatpush1.msra.mxu0 0.0
    %3046 = vmatprep.subr.mxu0 0.0
    %3047 = vmatpush1.msra.mxu0 0.0
    %3048 = vmatprep.subr.mxu0 0.0
    %3049 = vmatpush1.msra.mxu0 0.0
    %3050 = vmatprep.subr.mxu0 0.0
    %3051 = vmatpush1.msra.mxu0 0.0
    %3052 = vmatprep.subr.mxu0 0.0
    %3053 = vmatpush1.msra.mxu0 0.0
    %3054 = vmatprep.subr.mxu0 0.0
    %3055 = vmatpush1.msra.mxu0 0.0
    %3056 = vmatprep.subr.mxu0 0.0
    %3057 = vmatpush1.msra.mxu0 0.0
    %3058 = vmatprep.subr.mxu0 0.0
    %3059 = vmatpush1.msra.mxu0 0.0
    %3060 = vmatprep.subr.mxu0 0.0
    %3061 = vmatpush1.msra.mxu0 0.0
    %3062 = vmatprep.subr.mxu0 0.0
    %3063 = vmatpush1.msra.mxu0 0.0
    %3064 = vmatprep.subr.mxu0 0.0
    %3065 = vmatpush1.msra.mxu0 0.0
    %3066 = vmatprep.subr.mxu0 0.0
    %3067 = vmatpush1.msra.mxu0 0.0
    %3068 = vmatprep.subr.mxu0 0.0
    %3069 = vmatpush1.msra.mxu0 0.0
    %3070 = vmatprep.subr.mxu0 0.0
    %3071 = vmatpush1.msra.mxu0 0.0
    %3072 = vmatprep.subr.mxu0 0.0
    %3073 = vmatpush1.msra.mxu0 0.0
    %3074 = vmatprep.subr.mxu0 0.0
    %3075 = vmatpush1.msra.mxu0 0.0
    %3076 = vmatprep.subr.mxu0 0.0
    %3077 = vmatpush1.msra.mxu0 0.0
    %3078 = vmatprep.subr.mxu0 0.0
    %3079 = vmatpush1.msra.mxu0 0.0
    %3080 = vmatprep.subr.mxu0 0.0
    %3081 = vmatpush1.msra.mxu0 0.0
    %3082 = vmatprep.subr.mxu0 0.0
    %3083 = vmatpush1.msra.mxu0 0.0
    %3084 = vmatprep.subr.mxu0 0.0
    %3085 = vmatpush1.msra.mxu0 0.0
    %3086 = vmatprep.subr.mxu0 0.0
    %3087 = vmatpush1.msra.mxu0 0.0
    %3088 = vmatprep.subr.mxu0 0.0
    %3089 = vmatpush1.msra.mxu0 0.0
    %3090 = vmatprep.subr.mxu0 0.0
    %3091 = vmatpush1.msra.mxu0 0.0
    %3092 = vmatprep.subr.mxu0 0.0
    %3093 = vmatpush1.msra.mxu0 0.0
    %3094 = vmatprep.subr.mxu0 0.0
    %3095 = vmatpush1.msra.mxu0 0.0
    %3096 = vmatprep.subr.mxu0 0.0
    %3097 = vmatpush1.msra.mxu0 0.0
    %3098 = vmatprep.subr.mxu0 0.0
    %3099 = vmatpush1.msra.mxu0 0.0
    %3100 = vmatprep.subr.mxu0 0.0
    %3101 = vmatpush1.msra.mxu0 0.0
    %3102 = vmatprep.mubr.f32.mxu0 0.0
    %3103 = vmatmul.mubr.f32.gmra.mrb[0].mxu0 %v3033
    %v3104 = vpop.f32.mrb[0].mxu0
    %v3105 = vadd.f32 %v3024, %v3104
    %v3106 = vpop.f32.mrb[0].mxu0
    %3107 = vmatprep.mubr.f32.mxu0 0.0
    %3108 = vmatmul.mubr.f32.gmra.mrb[0].mxu0 %v3036
    %v3109 = vpop.f32.mrb[0].mxu0
    %v3110 = vadd.f32 %v3029, %v3109
    %v3111 = vpop.f32.mrb[0].mxu0
    %3112 = vdwg.mxu0
    %3113 = vrot.lane.b32.xlu0 %v2277, 112
    %v3114 = vpop.permute.xlu0 %3113
    %3115 = vrot.lane.b32.xlu0 %v2277, 80
    %v3116 = vpop.permute.xlu0 %3115
    %v3117 = vsel %vm225, %v3114, 0
    %v3119 = vsel %vm225, %v3116, 0
    %3121 = vmatprep.subr.mxu0 0.0
    %3122 = vmatpush1.xpose.msra.mxu0 %v3119
    %3123 = vmatprep.subr.mxu0 0.0
    %3124 = vmatpush1.xpose.msra.mxu0 0.0
    %3125 = vmatprep.subr.mxu0 0.0
    %3126 = vmatpush1.xpose.msra.mxu0 0.0
    %3127 = vmatprep.subr.mxu0 0.0
    %3128 = vmatpush1.xpose.msra.mxu0 0.0
    %3129 = vmatprep.subr.mxu0 0.0
    %3130 = vmatpush1.xpose.msra.mxu0 0.0
    %3131 = vmatprep.subr.mxu0 0.0
    %3132 = vmatpush1.xpose.msra.mxu0 0.0
    %3133 = vmatprep.subr.mxu0 0.0
    %3134 = vmatpush1.xpose.msra.mxu0 0.0
    %3135 = vmatprep.subr.mxu0 0.0
    %3136 = vmatpush1.xpose.msra.mxu0 0.0
    %3137 = vmatprep.subr.mxu0 0.0
    %3138 = vmatpush1.xpose.msra.mxu0 0.0
    %3139 = vmatprep.subr.mxu0 0.0
    %3140 = vmatpush1.xpose.msra.mxu0 0.0
    %3141 = vmatprep.subr.mxu0 0.0
    %3142 = vmatpush1.xpose.msra.mxu0 0.0
    %3143 = vmatprep.subr.mxu0 0.0
    %3144 = vmatpush1.xpose.msra.mxu0 0.0
    %3145 = vmatprep.subr.mxu0 0.0
    %3146 = vmatpush1.xpose.msra.mxu0 0.0
    %3147 = vmatprep.subr.mxu0 0.0
    %3148 = vmatpush1.xpose.msra.mxu0 0.0
    %3149 = vmatprep.subr.mxu0 0.0
    %3150 = vmatpush1.xpose.msra.mxu0 0.0
    %3151 = vmatprep.subr.mxu0 0.0
    %3152 = vmatpush1.xpose.msra.mxu0 0.0
    %3153 = vmatprep.subr.mxu0 0.0
    %3154 = vmatpush1.xpose.msra.mxu0 0.0
    %3155 = vmatprep.subr.mxu0 0.0
    %3156 = vmatpush1.xpose.msra.mxu0 0.0
    %3157 = vmatprep.subr.mxu0 0.0
    %3158 = vmatpush1.xpose.msra.mxu0 0.0
    %3159 = vmatprep.subr.mxu0 0.0
    %3160 = vmatpush1.xpose.msra.mxu0 0.0
    %3161 = vmatprep.subr.mxu0 0.0
    %3162 = vmatpush1.xpose.msra.mxu0 0.0
    %3163 = vmatprep.subr.mxu0 0.0
    %3164 = vmatpush1.xpose.msra.mxu0 0.0
    %3165 = vmatprep.subr.mxu0 0.0
    %3166 = vmatpush1.xpose.msra.mxu0 0.0
    %3167 = vmatprep.subr.mxu0 0.0
    %3168 = vmatpush1.xpose.msra.mxu0 0.0
    %3169 = vmatprep.subr.mxu0 0.0
    %3170 = vmatpush1.xpose.msra.mxu0 0.0
    %3171 = vmatprep.subr.mxu0 0.0
    %3172 = vmatpush1.xpose.msra.mxu0 0.0
    %3173 = vmatprep.subr.mxu0 0.0
    %3174 = vmatpush1.xpose.msra.mxu0 0.0
    %3175 = vmatprep.subr.mxu0 0.0
    %3176 = vmatpush1.xpose.msra.mxu0 0.0
    %3177 = vmatprep.subr.mxu0 0.0
    %3178 = vmatpush1.xpose.msra.mxu0 0.0
    %3179 = vmatprep.subr.mxu0 0.0
    %3180 = vmatpush1.xpose.msra.mxu0 0.0
    %3181 = vmatprep.subr.mxu0 0.0
    %3182 = vmatpush1.xpose.msra.mxu0 0.0
    %3183 = vmatprep.subr.mxu0 0.0
    %3184 = vmatpush1.xpose.msra.mxu0 0.0
    %3185 = vmatprep.mubr.f32.mxu0 0.0
    %3186 = vmatmul.mubr.f32.gmra.mrb[0].mxu0 %v3117
    %v3187 = vpop.f32.mrb[0].mxu0
    %v3188 = vadd.f32 0.0, %v3187
    %v3189 = vpop.f32.mrb[0].mxu0
    %3190 = vdwg.mxu0
    %3191 = vrot.lane.b32.xlu0 %v2282, 112
    %v3192 = vpop.permute.xlu0 %3191
    %3193 = vrot.lane.b32.xlu0 %v2282, 80
    %v3194 = vpop.permute.xlu0 %3193
    %v3195 = vsel %vm225, %v3192, 0
    %v3197 = vsel %vm225, %v3194, 0
    %3199 = vmatprep.subr.mxu0 0.0
    %3200 = vmatpush1.xpose.msra.mxu0 %v3197
    %3201 = vmatprep.subr.mxu0 0.0
    %3202 = vmatpush1.xpose.msra.mxu0 0.0
    %3203 = vmatprep.subr.mxu0 0.0
    %3204 = vmatpush1.xpose.msra.mxu0 0.0
    %3205 = vmatprep.subr.mxu0 0.0
    %3206 = vmatpush1.xpose.msra.mxu0 0.0
    %3207 = vmatprep.subr.mxu0 0.0
    %3208 = vmatpush1.xpose.msra.mxu0 0.0
    %3209 = vmatprep.subr.mxu0 0.0
    %3210 = vmatpush1.xpose.msra.mxu0 0.0
    %3211 = vmatprep.subr.mxu0 0.0
    %3212 = vmatpush1.xpose.msra.mxu0 0.0
    %3213 = vmatprep.subr.mxu0 0.0
    %3214 = vmatpush1.xpose.msra.mxu0 0.0
    %3215 = vmatprep.subr.mxu0 0.0
    %3216 = vmatpush1.xpose.msra.mxu0 0.0
    %3217 = vmatprep.subr.mxu0 0.0
    %3218 = vmatpush1.xpose.msra.mxu0 0.0
    %3219 = vmatprep.subr.mxu0 0.0
    %3220 = vmatpush1.xpose.msra.mxu0 0.0
    %3221 = vmatprep.subr.mxu0 0.0
    %3222 = vmatpush1.xpose.msra.mxu0 0.0
    %3223 = vmatprep.subr.mxu0 0.0
    %3224 = vmatpush1.xpose.msra.mxu0 0.0
    %3225 = vmatprep.subr.mxu0 0.0
    %3226 = vmatpush1.xpose.msra.mxu0 0.0
    %3227 = vmatprep.subr.mxu0 0.0
    %3228 = vmatpush1.xpose.msra.mxu0 0.0
    %3229 = vmatprep.subr.mxu0 0.0
    %3230 = vmatpush1.xpose.msra.mxu0 0.0
    %3231 = vmatprep.subr.mxu0 0.0
    %3232 = vmatpush1.xpose.msra.mxu0 0.0
    %3233 = vmatprep.subr.mxu0 0.0
    %3234 = vmatpush1.xpose.msra.mxu0 0.0
    %3235 = vmatprep.subr.mxu0 0.0
    %3236 = vmatpush1.xpose.msra.mxu0 0.0
    %3237 = vmatprep.subr.mxu0 0.0
    %3238 = vmatpush1.xpose.msra.mxu0 0.0
    %3239 = vmatprep.subr.mxu0 0.0
    %3240 = vmatpush1.xpose.msra.mxu0 0.0
    %3241 = vmatprep.subr.mxu0 0.0
    %3242 = vmatpush1.xpose.msra.mxu0 0.0
    %3243 = vmatprep.subr.mxu0 0.0
    %3244 = vmatpush1.xpose.msra.mxu0 0.0
    %3245 = vmatprep.subr.mxu0 0.0
    %3246 = vmatpush1.xpose.msra.mxu0 0.0
    %3247 = vmatprep.subr.mxu0 0.0
    %3248 = vmatpush1.xpose.msra.mxu0 0.0
    %3249 = vmatprep.subr.mxu0 0.0
    %3250 = vmatpush1.xpose.msra.mxu0 0.0
    %3251 = vmatprep.subr.mxu0 0.0
    %3252 = vmatpush1.xpose.msra.mxu0 0.0
    %3253 = vmatprep.subr.mxu0 0.0
    %3254 = vmatpush1.xpose.msra.mxu0 0.0
    %3255 = vmatprep.subr.mxu0 0.0
    %3256 = vmatpush1.xpose.msra.mxu0 0.0
    %3257 = vmatprep.subr.mxu0 0.0
    %3258 = vmatpush1.xpose.msra.mxu0 0.0
    %3259 = vmatprep.subr.mxu0 0.0
    %3260 = vmatpush1.xpose.msra.mxu0 0.0
    %3261 = vmatprep.subr.mxu0 0.0
    %3262 = vmatpush1.xpose.msra.mxu0 0.0
    %3263 = vmatprep.mubr.f32.mxu0 0.0
    %3264 = vmatmul.mubr.f32.gmra.mrb[0].mxu0 %v3195
    %v3265 = vpop.f32.mrb[0].mxu0
    %v3266 = vadd.f32 0.0, %v3265
    %v3267 = vpop.f32.mrb[0].mxu0
    %3268 = vdwg.mxu0
    %v3269 = vmul.f32 %v3188, 0.35355338
    %v3270 = vmul.f32 %v3266, 0.35355338
    %v3271 = vadd.f32 %v3269, %v60
    %v3272 = vadd.f32 %v3270, %v61
    %v3273 = vsel %vm225, %v3271, -inf
    %3274 = vmax.xlane.f32.xlu0 %v3273
    %v3275 = vpop.xlane.xlu0 %3274
    %v3276 = vsel %vm225, %v3272, -inf
    %3277 = vmax.xlane.f32.xlu0 %v3276
    %v3278 = vpop.xlane.xlu0 %3277
    %v3279 = vsub.f32 %v3271, %v3275
    %v3280 = vsub.f32 %v3272, %v3278
    %v3281 = vmul.f32 %v3279, 1.442695
    %v3282 = vpow.pop %v3281
    %v3283 = vmul.f32 %v3280, 1.442695
    %v3284 = vpow.pop %v3283
    %v3285 = vsel %vm225, %v3282, 0.0
    %3286 = vadd.xlane.f32.xlu0 %v3285
    %v3287 = vpop.xlane.xlu0 %3286
    %v3288 = vsel %vm225, %v3284, 0.0
    %3289 = vadd.xlane.f32.xlu0 %v3288
    %v3290 = vpop.xlane.xlu0 %3289
    %v3291 = vrcp.pop %v3287
    %v3292 = vrcp.pop %v3290
    %v3293 = vmul.f32 %v3282, %v3291
    %v3294 = vmul.f32 %v3284, %v3292
    %3295 = vrot.lane.b32.xlu0 %v2277, 48
    %v3296 = vpop.permute.xlu0 %3295
    %v3299 = vsel %vm225, %v3293, 0
    %3301 = vmatprep.subr.mxu0 0.0
    %3302 = vmatpush1.msra.mxu0 %v3296
    %3303 = vmatprep.subr.mxu0 0.0
    %3304 = vmatpush1.msra.mxu0 0.0
    %3305 = vmatprep.subr.mxu0 0.0
    %3306 = vmatpush1.msra.mxu0 0.0
    %3307 = vmatprep.subr.mxu0 0.0
    %3308 = vmatpush1.msra.mxu0 0.0
    %3309 = vmatprep.subr.mxu0 0.0
    %3310 = vmatpush1.msra.mxu0 0.0
    %3311 = vmatprep.subr.mxu0 0.0
    %3312 = vmatpush1.msra.mxu0 0.0
    %3313 = vmatprep.subr.mxu0 0.0
    %3314 = vmatpush1.msra.mxu0 0.0
    %3315 = vmatprep.subr.mxu0 0.0
    %3316 = vmatpush1.msra.mxu0 0.0
    %3317 = vmatprep.subr.mxu0 0.0
    %3318 = vmatpush1.msra.mxu0 0.0
    %3319 = vmatprep.subr.mxu0 0.0
    %3320 = vmatpush1.msra.mxu0 0.0
    %3321 = vmatprep.subr.mxu0 0.0
    %3322 = vmatpush1.msra.mxu0 0.0
    %3323 = vmatprep.subr.mxu0 0.0
    %3324 = vmatpush1.msra.mxu0 0.0
    %3325 = vmatprep.subr.mxu0 0.0
    %3326 = vmatpush1.msra.mxu0 0.0
    %3327 = vmatprep.subr.mxu0 0.0
    %3328 = vmatpush1.msra.mxu0 0.0
    %3329 = vmatprep.subr.mxu0 0.0
    %3330 = vmatpush1.msra.mxu0 0.0
    %3331 = vmatprep.subr.mxu0 0.0
    %3332 = vmatpush1.msra.mxu0 0.0
    %3333 = vmatprep.subr.mxu0 0.0
    %3334 = vmatpush1.msra.mxu0 0.0
    %3335 = vmatprep.subr.mxu0 0.0
    %3336 = vmatpush1.msra.mxu0 0.0
    %3337 = vmatprep.subr.mxu0 0.0
    %3338 = vmatpush1.msra.mxu0 0.0
    %3339 = vmatprep.subr.mxu0 0.0
    %3340 = vmatpush1.msra.mxu0 0.0
    %3341 = vmatprep.subr.mxu0 0.0
    %3342 = vmatpush1.msra.mxu0 0.0
    %3343 = vmatprep.subr.mxu0 0.0
    %3344 = vmatpush1.msra.mxu0 0.0
    %3345 = vmatprep.subr.mxu0 0.0
    %3346 = vmatpush1.msra.mxu0 0.0
    %3347 = vmatprep.subr.mxu0 0.0
    %3348 = vmatpush1.msra.mxu0 0.0
    %3349 = vmatprep.subr.mxu0 0.0
    %3350 = vmatpush1.msra.mxu0 0.0
    %3351 = vmatprep.subr.mxu0 0.0
    %3352 = vmatpush1.msra.mxu0 0.0
    %3353 = vmatprep.subr.mxu0 0.0
    %3354 = vmatpush1.msra.mxu0 0.0
    %3355 = vmatprep.subr.mxu0 0.0
    %3356 = vmatpush1.msra.mxu0 0.0
    %3357 = vmatprep.subr.mxu0 0.0
    %3358 = vmatpush1.msra.mxu0 0.0
    %3359 = vmatprep.subr.mxu0 0.0
    %3360 = vmatpush1.msra.mxu0 0.0
    %3361 = vmatprep.subr.mxu0 0.0
    %3362 = vmatpush1.msra.mxu0 0.0
    %3363 = vmatprep.subr.mxu0 0.0
    %3364 = vmatpush1.msra.mxu0 0.0
    %3365 = vmatprep.mubr.f32.mxu0 0.0
    %3366 = vmatmul.mubr.f32.gmra.mrb[0].mxu0 %v3299
    %v3367 = vpop.f32.mrb[0].mxu0
    %v3368 = vadd.f32 0.0, %v3367
    %v3369 = vpop.f32.mrb[0].mxu0
    %3370 = vdwg.mxu0
    %3371 = vrot.lane.b32.xlu0 %v2282, 48
    %v3372 = vpop.permute.xlu0 %3371
    %v3375 = vsel %vm225, %v3294, 0
    %3377 = vmatprep.subr.mxu0 0.0
    %3378 = vmatpush1.msra.mxu0 %v3372
    %3379 = vmatprep.subr.mxu0 0.0
    %3380 = vmatpush1.msra.mxu0 0.0
    %3381 = vmatprep.subr.mxu0 0.0
    %3382 = vmatpush1.msra.mxu0 0.0
    %3383 = vmatprep.subr.mxu0 0.0
    %3384 = vmatpush1.msra.mxu0 0.0
    %3385 = vmatprep.subr.mxu0 0.0
    %3386 = vmatpush1.msra.mxu0 0.0
    %3387 = vmatprep.subr.mxu0 0.0
    %3388 = vmatpush1.msra.mxu0 0.0
    %3389 = vmatprep.subr.mxu0 0.0
    %3390 = vmatpush1.msra.mxu0 0.0
    %3391 = vmatprep.subr.mxu0 0.0
    %3392 = vmatpush1.msra.mxu0 0.0
    %3393 = vmatprep.subr.mxu0 0.0
    %3394 = vmatpush1.msra.mxu0 0.0
    %3395 = vmatprep.subr.mxu0 0.0
    %3396 = vmatpush1.msra.mxu0 0.0
    %3397 = vmatprep.subr.mxu0 0.0
    %3398 = vmatpush1.msra.mxu0 0.0
    %3399 = vmatprep.subr.mxu0 0.0
    %3400 = vmatpush1.msra.mxu0 0.0
    %3401 = vmatprep.subr.mxu0 0.0
    %3402 = vmatpush1.msra.mxu0 0.0
    %3403 = vmatprep.subr.mxu0 0.0
    %3404 = vmatpush1.msra.mxu0 0.0
    %3405 = vmatprep.subr.mxu0 0.0
    %3406 = vmatpush1.msra.mxu0 0.0
    %3407 = vmatprep.subr.mxu0 0.0
    %3408 = vmatpush1.msra.mxu0 0.0
    %3409 = vmatprep.subr.mxu0 0.0
    %3410 = vmatpush1.msra.mxu0 0.0
    %3411 = vmatprep.subr.mxu0 0.0
    %3412 = vmatpush1.msra.mxu0 0.0
    %3413 = vmatprep.subr.mxu0 0.0
    %3414 = vmatpush1.msra.mxu0 0.0
    %3415 = vmatprep.subr.mxu0 0.0
    %3416 = vmatpush1.msra.mxu0 0.0
    %3417 = vmatprep.subr.mxu0 0.0
    %3418 = vmatpush1.msra.mxu0 0.0
    %3419 = vmatprep.subr.mxu0 0.0
    %3420 = vmatpush1.msra.mxu0 0.0
    %3421 = vmatprep.subr.mxu0 0.0
    %3422 = vmatpush1.msra.mxu0 0.0
    %3423 = vmatprep.subr.mxu0 0.0
    %3424 = vmatpush1.msra.mxu0 0.0
    %3425 = vmatprep.subr.mxu0 0.0
    %3426 = vmatpush1.msra.mxu0 0.0
    %3427 = vmatprep.subr.mxu0 0.0
    %3428 = vmatpush1.msra.mxu0 0.0
    %3429 = vmatprep.subr.mxu0 0.0
    %3430 = vmatpush1.msra.mxu0 0.0
    %3431 = vmatprep.subr.mxu0 0.0
    %3432 = vmatpush1.msra.mxu0 0.0
    %3433 = vmatprep.subr.mxu0 0.0
    %3434 = vmatpush1.msra.mxu0 0.0
    %3435 = vmatprep.subr.mxu0 0.0
    %3436 = vmatpush1.msra.mxu0 0.0
    %3437 = vmatprep.subr.mxu0 0.0
    %3438 = vmatpush1.msra.mxu0 0.0
    %3439 = vmatprep.subr.mxu0 0.0
    %3440 = vmatpush1.msra.mxu0 0.0
    %3441 = vmatprep.mubr.f32.mxu0 0.0
    %3442 = vmatmul.mubr.f32.gmra.mrb[0].mxu0 %v3375
    %v3443 = vpop.f32.mrb[0].mxu0
    %v3444 = vadd.f32 0.0, %v3443
    %v3445 = vpop.f32.mrb[0].mxu0
    %3446 = vdwg.mxu0
    %v3448 = vsel %vm225, %v3368, 0
    %v3451 = vsel %vm225, %v3444, 0
    %3453 = vmatprep.subr.mxu0 0.0
    %3454 = vmatpush1.msra.mxu0 %v2130
    %3455 = vmatprep.subr.mxu0 0.0
    %3456 = vmatpush1.msra.mxu0 0.0
    %3457 = vmatprep.subr.mxu0 0.0
    %3458 = vmatpush1.msra.mxu0 0.0
    %3459 = vmatprep.subr.mxu0 0.0
    %3460 = vmatpush1.msra.mxu0 0.0
    %3461 = vmatprep.subr.mxu0 0.0
    %3462 = vmatpush1.msra.mxu0 0.0
    %3463 = vmatprep.subr.mxu0 0.0
    %3464 = vmatpush1.msra.mxu0 0.0
    %3465 = vmatprep.subr.mxu0 0.0
    %3466 = vmatpush1.msra.mxu0 0.0
    %3467 = vmatprep.subr.mxu0 0.0
    %3468 = vmatpush1.msra.mxu0 0.0
    %3469 = vmatprep.subr.mxu0 0.0
    %3470 = vmatpush1.msra.mxu0 0.0
    %3471 = vmatprep.subr.mxu0 0.0
    %3472 = vmatpush1.msra.mxu0 0.0
    %3473 = vmatprep.subr.mxu0 0.0
    %3474 = vmatpush1.msra.mxu0 0.0
    %3475 = vmatprep.subr.mxu0 0.0
    %3476 = vmatpush1.msra.mxu0 0.0
    %3477 = vmatprep.subr.mxu0 0.0
    %3478 = vmatpush1.msra.mxu0 0.0
    %3479 = vmatprep.subr.mxu0 0.0
    %3480 = vmatpush1.msra.mxu0 0.0
    %3481 = vmatprep.subr.mxu0 0.0
    %3482 = vmatpush1.msra.mxu0 0.0
    %3483 = vmatprep.subr.mxu0 0.0
    %3484 = vmatpush1.msra.mxu0 0.0
    %3485 = vmatprep.subr.mxu0 0.0
    %3486 = vmatpush1.msra.mxu0 0.0
    %3487 = vmatprep.subr.mxu0 0.0
    %3488 = vmatpush1.msra.mxu0 0.0
    %3489 = vmatprep.subr.mxu0 0.0
    %3490 = vmatpush1.msra.mxu0 0.0
    %3491 = vmatprep.subr.mxu0 0.0
    %3492 = vmatpush1.msra.mxu0 0.0
    %3493 = vmatprep.subr.mxu0 0.0
    %3494 = vmatpush1.msra.mxu0 0.0
    %3495 = vmatprep.subr.mxu0 0.0
    %3496 = vmatpush1.msra.mxu0 0.0
    %3497 = vmatprep.subr.mxu0 0.0
    %3498 = vmatpush1.msra.mxu0 0.0
    %3499 = vmatprep.subr.mxu0 0.0
    %3500 = vmatpush1.msra.mxu0 0.0
    %3501 = vmatprep.subr.mxu0 0.0
    %3502 = vmatpush1.msra.mxu0 0.0
    %3503 = vmatprep.subr.mxu0 0.0
    %3504 = vmatpush1.msra.mxu0 0.0
    %3505 = vmatprep.subr.mxu0 0.0
    %3506 = vmatpush1.msra.mxu0 0.0
    %3507 = vmatprep.subr.mxu0 0.0
    %3508 = vmatpush1.msra.mxu0 0.0
    %3509 = vmatprep.subr.mxu0 0.0
    %3510 = vmatpush1.msra.mxu0 0.0
    %3511 = vmatprep.subr.mxu0 0.0
    %3512 = vmatpush1.msra.mxu0 0.0
    %3513 = vmatprep.subr.mxu0 0.0
    %3514 = vmatpush1.msra.mxu0 0.0
    %3515 = vmatprep.subr.mxu0 0.0
    %3516 = vmatpush1.msra.mxu0 0.0
    %3517 = vmatprep.mubr.f32.mxu0 0.0
    %3518 = vmatmul.mubr.f32.gmra.mrb[0].mxu0 %v3448
    %v3519 = vpop.f32.mrb[0].mxu0
    %v3520 = vadd.f32 0.0, %v3519
    %v3521 = vpop.f32.mrb[0].mxu0
    %3522 = vmatprep.mubr.f32.mxu0 0.0
    %3523 = vmatmul.mubr.f32.gmra.mrb[0].mxu0 %v3451
    %v3524 = vpop.f32.mrb[0].mxu0
    %v3525 = vadd.f32 0.0, %v3524
    %v3526 = vpop.f32.mrb[0].mxu0
    %3527 = vdwg.mxu0
    %v3528 = vadd.f32 %v3105, %v3520
    %v3529 = vadd.f32 %v3110, %v3525
    %3530 = vrot.lane.b32.xlu0 %v2277, 104
    %v3531 = vpop.permute.xlu0 %3530
    %3532 = vrot.lane.b32.xlu0 %v2277, 72
    %v3533 = vpop.permute.xlu0 %3532
    %v3534 = vsel %vm225, %v3531, 0
    %v3536 = vsel %vm225, %v3533, 0
    %3538 = vmatprep.subr.mxu0 0.0
    %3539 = vmatpush1.xpose.msra.mxu0 %v3536
    %3540 = vmatprep.subr.mxu0 0.0
    %3541 = vmatpush1.xpose.msra.mxu0 0.0
    %3542 = vmatprep.subr.mxu0 0.0
    %3543 = vmatpush1.xpose.msra.mxu0 0.0
    %3544 = vmatprep.subr.mxu0 0.0
    %3545 = vmatpush1.xpose.msra.mxu0 0.0
    %3546 = vmatprep.subr.mxu0 0.0
    %3547 = vmatpush1.xpose.msra.mxu0 0.0
    %3548 = vmatprep.subr.mxu0 0.0
    %3549 = vmatpush1.xpose.msra.mxu0 0.0
    %3550 = vmatprep.subr.mxu0 0.0
    %3551 = vmatpush1.xpose.msra.mxu0 0.0
    %3552 = vmatprep.subr.mxu0 0.0
    %3553 = vmatpush1.xpose.msra.mxu0 0.0
    %3554 = vmatprep.subr.mxu0 0.0
    %3555 = vmatpush1.xpose.msra.mxu0 0.0
    %3556 = vmatprep.subr.mxu0 0.0
    %3557 = vmatpush1.xpose.msra.mxu0 0.0
    %3558 = vmatprep.subr.mxu0 0.0
    %3559 = vmatpush1.xpose.msra.mxu0 0.0
    %3560 = vmatprep.subr.mxu0 0.0
    %3561 = vmatpush1.xpose.msra.mxu0 0.0
    %3562 = vmatprep.subr.mxu0 0.0
    %3563 = vmatpush1.xpose.msra.mxu0 0.0
    %3564 = vmatprep.subr.mxu0 0.0
    %3565 = vmatpush1.xpose.msra.mxu0 0.0
    %3566 = vmatprep.subr.mxu0 0.0
    %3567 = vmatpush1.xpose.msra.mxu0 0.0
    %3568 = vmatprep.subr.mxu0 0.0
    %3569 = vmatpush1.xpose.msra.mxu0 0.0
    %3570 = vmatprep.subr.mxu0 0.0
    %3571 = vmatpush1.xpose.msra.mxu0 0.0
    %3572 = vmatprep.subr.mxu0 0.0
    %3573 = vmatpush1.xpose.msra.mxu0 0.0
    %3574 = vmatprep.subr.mxu0 0.0
    %3575 = vmatpush1.xpose.msra.mxu0 0.0
    %3576 = vmatprep.subr.mxu0 0.0
    %3577 = vmatpush1.xpose.msra.mxu0 0.0
    %3578 = vmatprep.subr.mxu0 0.0
    %3579 = vmatpush1.xpose.msra.mxu0 0.0
    %3580 = vmatprep.subr.mxu0 0.0
    %3581 = vmatpush1.xpose.msra.mxu0 0.0
    %3582 = vmatprep.subr.mxu0 0.0
    %3583 = vmatpush1.xpose.msra.mxu0 0.0
    %3584 = vmatprep.subr.mxu0 0.0
    %3585 = vmatpush1.xpose.msra.mxu0 0.0
    %3586 = vmatprep.subr.mxu0 0.0
    %3587 = vmatpush1.xpose.msra.mxu0 0.0
    %3588 = vmatprep.subr.mxu0 0.0
    %3589 = vmatpush1.xpose.msra.mxu0 0.0
    %3590 = vmatprep.subr.mxu0 0.0
    %3591 = vmatpush1.xpose.msra.mxu0 0.0
    %3592 = vmatprep.subr.mxu0 0.0
    %3593 = vmatpush1.xpose.msra.mxu0 0.0
    %3594 = vmatprep.subr.mxu0 0.0
    %3595 = vmatpush1.xpose.msra.mxu0 0.0
    %3596 = vmatprep.subr.mxu0 0.0
    %3597 = vmatpush1.xpose.msra.mxu0 0.0
    %3598 = vmatprep.subr.mxu0 0.0
    %3599 = vmatpush1.xpose.msra.mxu0 0.0
    %3600 = vmatprep.subr.mxu0 0.0
    %3601 = vmatpush1.xpose.msra.mxu0 0.0
    %3602 = vmatprep.mubr.f32.mxu0 0.0
    %3603 = vmatmul.mubr.f32.gmra.mrb[0].mxu0 %v3534
    %v3604 = vpop.f32.mrb[0].mxu0
    %v3605 = vadd.f32 0.0, %v3604
    %v3606 = vpop.f32.mrb[0].mxu0
    %3607 = vdwg.mxu0
    %3608 = vrot.lane.b32.xlu0 %v2282, 104
    %v3609 = vpop.permute.xlu0 %3608
    %3610 = vrot.lane.b32.xlu0 %v2282, 72
    %v3611 = vpop.permute.xlu0 %3610
    %v3612 = vsel %vm225, %v3609, 0
    %v3614 = vsel %vm225, %v3611, 0
    %3616 = vmatprep.subr.mxu0 0.0
    %3617 = vmatpush1.xpose.msra.mxu0 %v3614
    %3618 = vmatprep.subr.mxu0 0.0
    %3619 = vmatpush1.xpose.msra.mxu0 0.0
    %3620 = vmatprep.subr.mxu0 0.0
    %3621 = vmatpush1.xpose.msra.mxu0 0.0
    %3622 = vmatprep.subr.mxu0 0.0
    %3623 = vmatpush1.xpose.msra.mxu0 0.0
    %3624 = vmatprep.subr.mxu0 0.0
    %3625 = vmatpush1.xpose.msra.mxu0 0.0
    %3626 = vmatprep.subr.mxu0 0.0
    %3627 = vmatpush1.xpose.msra.mxu0 0.0
    %3628 = vmatprep.subr.mxu0 0.0
    %3629 = vmatpush1.xpose.msra.mxu0 0.0
    %3630 = vmatprep.subr.mxu0 0.0
    %3631 = vmatpush1.xpose.msra.mxu0 0.0
    %3632 = vmatprep.subr.mxu0 0.0
    %3633 = vmatpush1.xpose.msra.mxu0 0.0
    %3634 = vmatprep.subr.mxu0 0.0
    %3635 = vmatpush1.xpose.msra.mxu0 0.0
    %3636 = vmatprep.subr.mxu0 0.0
    %3637 = vmatpush1.xpose.msra.mxu0 0.0
    %3638 = vmatprep.subr.mxu0 0.0
    %3639 = vmatpush1.xpose.msra.mxu0 0.0
    %3640 = vmatprep.subr.mxu0 0.0
    %3641 = vmatpush1.xpose.msra.mxu0 0.0
    %3642 = vmatprep.subr.mxu0 0.0
    %3643 = vmatpush1.xpose.msra.mxu0 0.0
    %3644 = vmatprep.subr.mxu0 0.0
    %3645 = vmatpush1.xpose.msra.mxu0 0.0
    %3646 = vmatprep.subr.mxu0 0.0
    %3647 = vmatpush1.xpose.msra.mxu0 0.0
    %3648 = vmatprep.subr.mxu0 0.0
    %3649 = vmatpush1.xpose.msra.mxu0 0.0
    %3650 = vmatprep.subr.mxu0 0.0
    %3651 = vmatpush1.xpose.msra.mxu0 0.0
    %3652 = vmatprep.subr.mxu0 0.0
    %3653 = vmatpush1.xpose.msra.mxu0 0.0
    %3654 = vmatprep.subr.mxu0 0.0
    %3655 = vmatpush1.xpose.msra.mxu0 0.0
    %3656 = vmatprep.subr.mxu0 0.0
    %3657 = vmatpush1.xpose.msra.mxu0 0.0
    %3658 = vmatprep.subr.mxu0 0.0
    %3659 = vmatpush1.xpose.msra.mxu0 0.0
    %3660 = vmatprep.subr.mxu0 0.0
    %3661 = vmatpush1.xpose.msra.mxu0 0.0
    %3662 = vmatprep.subr.mxu0 0.0
    %3663 = vmatpush1.xpose.msra.mxu0 0.0
    %3664 = vmatprep.subr.mxu0 0.0
    %3665 = vmatpush1.xpose.msra.mxu0 0.0
    %3666 = vmatprep.subr.mxu0 0.0
    %3667 = vmatpush1.xpose.msra.mxu0 0.0
    %3668 = vmatprep.subr.mxu0 0.0
    %3669 = vmatpush1.xpose.msra.mxu0 0.0
    %3670 = vmatprep.subr.mxu0 0.0
    %3671 = vmatpush1.xpose.msra.mxu0 0.0
    %3672 = vmatprep.subr.mxu0 0.0
    %3673 = vmatpush1.xpose.msra.mxu0 0.0
    %3674 = vmatprep.subr.mxu0 0.0
    %3675 = vmatpush1.xpose.msra.mxu0 0.0
    %3676 = vmatprep.subr.mxu0 0.0
    %3677 = vmatpush1.xpose.msra.mxu0 0.0
    %3678 = vmatprep.subr.mxu0 0.0
    %3679 = vmatpush1.xpose.msra.mxu0 0.0
    %3680 = vmatprep.mubr.f32.mxu0 0.0
    %3681 = vmatmul.mubr.f32.gmra.mrb[0].mxu0 %v3612
    %v3682 = vpop.f32.mrb[0].mxu0
    %v3683 = vadd.f32 0.0, %v3682
    %v3684 = vpop.f32.mrb[0].mxu0
    %3685 = vdwg.mxu0
    %v3686 = vmul.f32 %v3605, 0.35355338
    %v3687 = vmul.f32 %v3683, 0.35355338
    %v3688 = vadd.f32 %v3686, %v60
    %v3689 = vadd.f32 %v3687, %v61
    %v3690 = vsel %vm225, %v3688, -inf
    %3691 = vmax.xlane.f32.xlu0 %v3690
    %v3692 = vpop.xlane.xlu0 %3691
    %v3693 = vsel %vm225, %v3689, -inf
    %3694 = vmax.xlane.f32.xlu0 %v3693
    %v3695 = vpop.xlane.xlu0 %3694
    %v3696 = vsub.f32 %v3688, %v3692
    %v3697 = vsub.f32 %v3689, %v3695
    %v3698 = vmul.f32 %v3696, 1.442695
    %v3699 = vpow.pop %v3698
    %v3700 = vmul.f32 %v3697, 1.442695
    %v3701 = vpow.pop %v3700
    %v3702 = vsel %vm225, %v3699, 0.0
    %3703 = vadd.xlane.f32.xlu0 %v3702
    %v3704 = vpop.xlane.xlu0 %3703
    %v3705 = vsel %vm225, %v3701, 0.0
    %3706 = vadd.xlane.f32.xlu0 %v3705
    %v3707 = vpop.xlane.xlu0 %3706
    %v3708 = vrcp.pop %v3704
    %v3709 = vrcp.pop %v3707
    %v3710 = vmul.f32 %v3699, %v3708
    %v3711 = vmul.f32 %v3701, %v3709
    %3712 = vrot.lane.b32.xlu0 %v2277, 40
    %v3713 = vpop.permute.xlu0 %3712
    %v3716 = vsel %vm225, %v3710, 0
    %3718 = vmatprep.subr.mxu0 0.0
    %3719 = vmatpush1.msra.mxu0 %v3713
    %3720 = vmatprep.subr.mxu0 0.0
    %3721 = vmatpush1.msra.mxu0 0.0
    %3722 = vmatprep.subr.mxu0 0.0
    %3723 = vmatpush1.msra.mxu0 0.0
    %3724 = vmatprep.subr.mxu0 0.0
    %3725 = vmatpush1.msra.mxu0 0.0
    %3726 = vmatprep.subr.mxu0 0.0
    %3727 = vmatpush1.msra.mxu0 0.0
    %3728 = vmatprep.subr.mxu0 0.0
    %3729 = vmatpush1.msra.mxu0 0.0
    %3730 = vmatprep.subr.mxu0 0.0
    %3731 = vmatpush1.msra.mxu0 0.0
    %3732 = vmatprep.subr.mxu0 0.0
    %3733 = vmatpush1.msra.mxu0 0.0
    %3734 = vmatprep.subr.mxu0 0.0
    %3735 = vmatpush1.msra.mxu0 0.0
    %3736 = vmatprep.subr.mxu0 0.0
    %3737 = vmatpush1.msra.mxu0 0.0
    %3738 = vmatprep.subr.mxu0 0.0
    %3739 = vmatpush1.msra.mxu0 0.0
    %3740 = vmatprep.subr.mxu0 0.0
    %3741 = vmatpush1.msra.mxu0 0.0
    %3742 = vmatprep.subr.mxu0 0.0
    %3743 = vmatpush1.msra.mxu0 0.0
    %3744 = vmatprep.subr.mxu0 0.0
    %3745 = vmatpush1.msra.mxu0 0.0
    %3746 = vmatprep.subr.mxu0 0.0
    %3747 = vmatpush1.msra.mxu0 0.0
    %3748 = vmatprep.subr.mxu0 0.0
    %3749 = vmatpush1.msra.mxu0 0.0
    %3750 = vmatprep.subr.mxu0 0.0
    %3751 = vmatpush1.msra.mxu0 0.0
    %3752 = vmatprep.subr.mxu0 0.0
    %3753 = vmatpush1.msra.mxu0 0.0
    %3754 = vmatprep.subr.mxu0 0.0
    %3755 = vmatpush1.msra.mxu0 0.0
    %3756 = vmatprep.subr.mxu0 0.0
    %3757 = vmatpush1.msra.mxu0 0.0
    %3758 = vmatprep.subr.mxu0 0.0
    %3759 = vmatpush1.msra.mxu0 0.0
    %3760 = vmatprep.subr.mxu0 0.0
    %3761 = vmatpush1.msra.mxu0 0.0
    %3762 = vmatprep.subr.mxu0 0.0
    %3763 = vmatpush1.msra.mxu0 0.0
    %3764 = vmatprep.subr.mxu0 0.0
    %3765 = vmatpush1.msra.mxu0 0.0
    %3766 = vmatprep.subr.mxu0 0.0
    %3767 = vmatpush1.msra.mxu0 0.0
    %3768 = vmatprep.subr.mxu0 0.0
    %3769 = vmatpush1.msra.mxu0 0.0
    %3770 = vmatprep.subr.mxu0 0.0
    %3771 = vmatpush1.msra.mxu0 0.0
    %3772 = vmatprep.subr.mxu0 0.0
    %3773 = vmatpush1.msra.mxu0 0.0
    %3774 = vmatprep.subr.mxu0 0.0
    %3775 = vmatpush1.msra.mxu0 0.0
    %3776 = vmatprep.subr.mxu0 0.0
    %3777 = vmatpush1.msra.mxu0 0.0
    %3778 = vmatprep.subr.mxu0 0.0
    %3779 = vmatpush1.msra.mxu0 0.0
    %3780 = vmatprep.subr.mxu0 0.0
    %3781 = vmatpush1.msra.mxu0 0.0
    %3782 = vmatprep.mubr.f32.mxu0 0.0
    %3783 = vmatmul.mubr.f32.gmra.mrb[0].mxu0 %v3716
    %v3784 = vpop.f32.mrb[0].mxu0
    %v3785 = vadd.f32 0.0, %v3784
    %v3786 = vpop.f32.mrb[0].mxu0
    %3787 = vdwg.mxu0
    %3788 = vrot.lane.b32.xlu0 %v2282, 40
    %v3789 = vpop.permute.xlu0 %3788
    %v3792 = vsel %vm225, %v3711, 0
    %3794 = vmatprep.subr.mxu0 0.0
    %3795 = vmatpush1.msra.mxu0 %v3789
    %3796 = vmatprep.subr.mxu0 0.0
    %3797 = vmatpush1.msra.mxu0 0.0
    %3798 = vmatprep.subr.mxu0 0.0
    %3799 = vmatpush1.msra.mxu0 0.0
    %3800 = vmatprep.subr.mxu0 0.0
    %3801 = vmatpush1.msra.mxu0 0.0
    %3802 = vmatprep.subr.mxu0 0.0
    %3803 = vmatpush1.msra.mxu0 0.0
    %3804 = vmatprep.subr.mxu0 0.0
    %3805 = vmatpush1.msra.mxu0 0.0
    %3806 = vmatprep.subr.mxu0 0.0
    %3807 = vmatpush1.msra.mxu0 0.0
    %3808 = vmatprep.subr.mxu0 0.0
    %3809 = vmatpush1.msra.mxu0 0.0
    %3810 = vmatprep.subr.mxu0 0.0
    %3811 = vmatpush1.msra.mxu0 0.0
    %3812 = vmatprep.subr.mxu0 0.0
    %3813 = vmatpush1.msra.mxu0 0.0
    %3814 = vmatprep.subr.mxu0 0.0
    %3815 = vmatpush1.msra.mxu0 0.0
    %3816 = vmatprep.subr.mxu0 0.0
    %3817 = vmatpush1.msra.mxu0 0.0
    %3818 = vmatprep.subr.mxu0 0.0
    %3819 = vmatpush1.msra.mxu0 0.0
    %3820 = vmatprep.subr.mxu0 0.0
    %3821 = vmatpush1.msra.mxu0 0.0
    %3822 = vmatprep.subr.mxu0 0.0
    %3823 = vmatpush1.msra.mxu0 0.0
    %3824 = vmatprep.subr.mxu0 0.0
    %3825 = vmatpush1.msra.mxu0 0.0
    %3826 = vmatprep.subr.mxu0 0.0
    %3827 = vmatpush1.msra.mxu0 0.0
    %3828 = vmatprep.subr.mxu0 0.0
    %3829 = vmatpush1.msra.mxu0 0.0
    %3830 = vmatprep.subr.mxu0 0.0
    %3831 = vmatpush1.msra.mxu0 0.0
    %3832 = vmatprep.subr.mxu0 0.0
    %3833 = vmatpush1.msra.mxu0 0.0
    %3834 = vmatprep.subr.mxu0 0.0
    %3835 = vmatpush1.msra.mxu0 0.0
    %3836 = vmatprep.subr.mxu0 0.0
    %3837 = vmatpush1.msra.mxu0 0.0
    %3838 = vmatprep.subr.mxu0 0.0
    %3839 = vmatpush1.msra.mxu0 0.0
    %3840 = vmatprep.subr.mxu0 0.0
    %3841 = vmatpush1.msra.mxu0 0.0
    %3842 = vmatprep.subr.mxu0 0.0
    %3843 = vmatpush1.msra.mxu0 0.0
    %3844 = vmatprep.subr.mxu0 0.0
    %3845 = vmatpush1.msra.mxu0 0.0
    %3846 = vmatprep.subr.mxu0 0.0
    %3847 = vmatpush1.msra.mxu0 0.0
    %3848 = vmatprep.subr.mxu0 0.0
    %3849 = vmatpush1.msra.mxu0 0.0
    %3850 = vmatprep.subr.mxu0 0.0
    %3851 = vmatpush1.msra.mxu0 0.0
    %3852 = vmatprep.subr.mxu0 0.0
    %3853 = vmatpush1.msra.mxu0 0.0
    %3854 = vmatprep.subr.mxu0 0.0
    %3855 = vmatpush1.msra.mxu0 0.0
    %3856 = vmatprep.subr.mxu0 0.0
    %3857 = vmatpush1.msra.mxu0 0.0
    %3858 = vmatprep.mubr.f32.mxu0 0.0
    %3859 = vmatmul.mubr.f32.gmra.mrb[0].mxu0 %v3792
    %v3860 = vpop.f32.mrb[0].mxu0
    %v3861 = vadd.f32 0.0, %v3860
    %v3862 = vpop.f32.mrb[0].mxu0
    %3863 = vdwg.mxu0
    %v3865 = vsel %vm225, %v3785, 0
    %v3868 = vsel %vm225, %v3861, 0
    %3870 = vmatprep.subr.mxu0 0.0
    %3871 = vmatpush1.msra.mxu0 %v2131
    %3872 = vmatprep.subr.mxu0 0.0
    %3873 = vmatpush1.msra.mxu0 0.0
    %3874 = vmatprep.subr.mxu0 0.0
    %3875 = vmatpush1.msra.mxu0 0.0
    %3876 = vmatprep.subr.mxu0 0.0
    %3877 = vmatpush1.msra.mxu0 0.0
    %3878 = vmatprep.subr.mxu0 0.0
    %3879 = vmatpush1.msra.mxu0 0.0
    %3880 = vmatprep.subr.mxu0 0.0
    %3881 = vmatpush1.msra.mxu0 0.0
    %3882 = vmatprep.subr.mxu0 0.0
    %3883 = vmatpush1.msra.mxu0 0.0
    %3884 = vmatprep.subr.mxu0 0.0
    %3885 = vmatpush1.msra.mxu0 0.0
    %3886 = vmatprep.subr.mxu0 0.0
    %3887 = vmatpush1.msra.mxu0 0.0
    %3888 = vmatprep.subr.mxu0 0.0
    %3889 = vmatpush1.msra.mxu0 0.0
    %3890 = vmatprep.subr.mxu0 0.0
    %3891 = vmatpush1.msra.mxu0 0.0
    %3892 = vmatprep.subr.mxu0 0.0
    %3893 = vmatpush1.msra.mxu0 0.0
    %3894 = vmatprep.subr.mxu0 0.0
    %3895 = vmatpush1.msra.mxu0 0.0
    %3896 = vmatprep.subr.mxu0 0.0
    %3897 = vmatpush1.msra.mxu0 0.0
    %3898 = vmatprep.subr.mxu0 0.0
    %3899 = vmatpush1.msra.mxu0 0.0
    %3900 = vmatprep.subr.mxu0 0.0
    %3901 = vmatpush1.msra.mxu0 0.0
    %3902 = vmatprep.subr.mxu0 0.0
    %3903 = vmatpush1.msra.mxu0 0.0
    %3904 = vmatprep.subr.mxu0 0.0
    %3905 = vmatpush1.msra.mxu0 0.0
    %3906 = vmatprep.subr.mxu0 0.0
    %3907 = vmatpush1.msra.mxu0 0.0
    %3908 = vmatprep.subr.mxu0 0.0
    %3909 = vmatpush1.msra.mxu0 0.0
    %3910 = vmatprep.subr.mxu0 0.0
    %3911 = vmatpush1.msra.mxu0 0.0
    %3912 = vmatprep.subr.mxu0 0.0
    %3913 = vmatpush1.msra.mxu0 0.0
    %3914 = vmatprep.subr.mxu0 0.0
    %3915 = vmatpush1.msra.mxu0 0.0
    %3916 = vmatprep.subr.mxu0 0.0
    %3917 = vmatpush1.msra.mxu0 0.0
    %3918 = vmatprep.subr.mxu0 0.0
    %3919 = vmatpush1.msra.mxu0 0.0
    %3920 = vmatprep.subr.mxu0 0.0
    %3921 = vmatpush1.msra.mxu0 0.0
    %3922 = vmatprep.subr.mxu0 0.0
    %3923 = vmatpush1.msra.mxu0 0.0
    %3924 = vmatprep.subr.mxu0 0.0
    %3925 = vmatpush1.msra.mxu0 0.0
    %3926 = vmatprep.subr.mxu0 0.0
    %3927 = vmatpush1.msra.mxu0 0.0
    %3928 = vmatprep.subr.mxu0 0.0
    %3929 = vmatpush1.msra.mxu0 0.0
    %3930 = vmatprep.subr.mxu0 0.0
    %3931 = vmatpush1.msra.mxu0 0.0
    %3932 = vmatprep.subr.mxu0 0.0
    %3933 = vmatpush1.msra.mxu0 0.0
    %3934 = vmatprep.mubr.f32.mxu0 0.0
    %3935 = vmatmul.mubr.f32.gmra.mrb[0].mxu0 %v3865
    %v3936 = vpop.f32.mrb[0].mxu0
    %v3937 = vadd.f32 0.0, %v3936
    %v3938 = vpop.f32.mrb[0].mxu0
    %3939 = vmatprep.mubr.f32.mxu0 0.0
    %3940 = vmatmul.mubr.f32.gmra.mrb[0].mxu0 %v3868
    %v3941 = vpop.f32.mrb[0].mxu0
    %v3942 = vadd.f32 0.0, %v3941
    %v3943 = vpop.f32.mrb[0].mxu0
    %3944 = vdwg.mxu0
    %v3945 = vadd.f32 %v3528, %v3937
    %v3946 = vadd.f32 %v3529, %v3942
    %v3947 = vadd.f32 %v2120, %v3945
    %v3948 = vadd.f32 %v2121, %v3946
    %v3949 = vlaneseq
    %v3950 = vshrl.u32 %v3949, 7
    %v3951 = vsub.s32 1, %v3950
    %v3952 = vrot.slane %v2147, %v3951
    %v3953 = vadd.f32 %v3947, %v3952
    %v3954 = vadd.f32 %v3948, %v3952
    %v3955 = vsel %vm83, %v3953, 0.0
    %3956 = vadd.xlane.f32.xlu0 %v3955
    %v3957 = vpop.xlane.xlu0 %3956
    %v3958 = vsel %vm83, %v3954, 0.0
    %3959 = vadd.xlane.f32.xlu0 %v3958
    %v3960 = vpop.xlane.xlu0 %3959
    %v3961 = vmul.f32 %v3957, %v90
    %v3962 = vmul.f32 %v3960, %v90
    %v3963 = vsub.f32 %v3953, %v3961
    %v3964 = vsub.f32 %v3954, %v3962
    %v3965 = vmul.f32 %v3963, %v3963
    %v3966 = vmul.f32 %v3964, %v3964
    %v3967 = vsel %vm83, %v3965, 0.0
    %3968 = vadd.xlane.f32.xlu0 %v3967
    %v3969 = vpop.xlane.xlu0 %3968
    %v3970 = vsel %vm83, %v3966, 0.0
    %3971 = vadd.xlane.f32.xlu0 %v3970
    %v3972 = vpop.xlane.xlu0 %3971
    %v3973 = vmul.f32 %v3969, 0.032258064
    %v3974 = vmul.f32 %v3972, 0.032258064
    %v3975 = vrsqrt.pop %v3973
    %v3976 = vmul.f32 %v3973, %v3975
    %vm3977 = vcmp.eq.f32.partialorder %v3973, inf
    %v3978 = vsel %vm3977, %v3973, %v3976
    %vm3979 = vcmp.eq.f32.partialorder %v3973, 0.0
    %v3980 = vand.u32 %v3973, 2147483648
    %v3981 = vsel %vm3979, %v3980, %v3978
    %v3982 = vrsqrt.pop %v3974
    %v3983 = vmul.f32 %v3974, %v3982
    %vm3984 = vcmp.eq.f32.partialorder %v3974, inf
    %v3985 = vsel %vm3984, %v3974, %v3983
    %vm3986 = vcmp.eq.f32.partialorder %v3974, 0.0
    %v3987 = vand.u32 %v3974, 2147483648
    %v3988 = vsel %vm3986, %v3987, %v3985
    %v3989 = vlaneseq
    %v3990 = vshrl.u32 %v3989, 7
    %v3991 = vsub.s32 6, %v3990
    %v3992 = vrot.slane %v2147, %v3991
    %v3993 = vmul.f32 %v3992, %v3963
    %v3994 = vmul.f32 %v3992, %v3964
    %v3995 = vadd.f32 %v3981, 1e-06
    %v3996 = vadd.f32 %v3988, 1e-06
    %v3997 = vrcp.pop %v3995
    %v3998 = vmul.f32 %v3993, %v3997
    %v3999 = vrcp.pop %v3996
    %v4000 = vmul.f32 %v3994, %v3999
    %v4001 = vlaneseq
    %v4002 = vshrl.u32 %v4001, 7
    %v4003 = vsub.s32 7, %v4002
    %v4004 = vrot.slane %v2147, %v4003
    %v4005 = vadd.f32 %v3998, %v4004
    %v4006 = vadd.f32 %v4000, %v4004
    %v4007 = vlaneseq
    %v4008 = vshrl.u32 %v4007, 7
    %v4009 = vsub.s32 2, %v4008
    %v4010 = vrot.slane %v2147, %v4009
    %v4012 = vsel %vm83, %v4005, 0
    %v4015 = vsel %vm83, %v4006, 0
    %4017 = vmatprep.subr.mxu0 0.0
    %4018 = vmatpush1.msra.mxu0 %v2133
    %4019 = vmatprep.subr.mxu0 0.0
    %4020 = vmatpush1.msra.mxu0 %v2134
    %4021 = vmatprep.subr.mxu0 0.0
    %4022 = vmatpush1.msra.mxu0 %v2135
    %4023 = vmatprep.subr.mxu0 0.0
    %4024 = vmatpush1.msra.mxu0 %v2136
    %4025 = vmatprep.subr.mxu0 0.0
    %4026 = vmatpush1.msra.mxu0 0.0
    %4027 = vmatprep.subr.mxu0 0.0
    %4028 = vmatpush1.msra.mxu0 0.0
    %4029 = vmatprep.subr.mxu0 0.0
    %4030 = vmatpush1.msra.mxu0 0.0
    %4031 = vmatprep.subr.mxu0 0.0
    %4032 = vmatpush1.msra.mxu0 0.0
    %4033 = vmatprep.subr.mxu0 0.0
    %4034 = vmatpush1.msra.mxu0 0.0
    %4035 = vmatprep.subr.mxu0 0.0
    %4036 = vmatpush1.msra.mxu0 0.0
    %4037 = vmatprep.subr.mxu0 0.0
    %4038 = vmatpush1.msra.mxu0 0.0
    %4039 = vmatprep.subr.mxu0 0.0
    %4040 = vmatpush1.msra.mxu0 0.0
    %4041 = vmatprep.subr.mxu0 0.0
    %4042 = vmatpush1.msra.mxu0 0.0
    %4043 = vmatprep.subr.mxu0 0.0
    %4044 = vmatpush1.msra.mxu0 0.0
    %4045 = vmatprep.subr.mxu0 0.0
    %4046 = vmatpush1.msra.mxu0 0.0
    %4047 = vmatprep.subr.mxu0 0.0
    %4048 = vmatpush1.msra.mxu0 0.0
    %4049 = vmatprep.subr.mxu0 0.0
    %4050 = vmatpush1.msra.mxu0 0.0
    %4051 = vmatprep.subr.mxu0 0.0
    %4052 = vmatpush1.msra.mxu0 0.0
    %4053 = vmatprep.subr.mxu0 0.0
    %4054 = vmatpush1.msra.mxu0 0.0
    %4055 = vmatprep.subr.mxu0 0.0
    %4056 = vmatpush1.msra.mxu0 0.0
    %4057 = vmatprep.subr.mxu0 0.0
    %4058 = vmatpush1.msra.mxu0 0.0
    %4059 = vmatprep.subr.mxu0 0.0
    %4060 = vmatpush1.msra.mxu0 0.0
    %4061 = vmatprep.subr.mxu0 0.0
    %4062 = vmatpush1.msra.mxu0 0.0
    %4063 = vmatprep.subr.mxu0 0.0
    %4064 = vmatpush1.msra.mxu0 0.0
    %4065 = vmatprep.subr.mxu0 0.0
    %4066 = vmatpush1.msra.mxu0 0.0
    %4067 = vmatprep.subr.mxu0 0.0
    %4068 = vmatpush1.msra.mxu0 0.0
    %4069 = vmatprep.subr.mxu0 0.0
    %4070 = vmatpush1.msra.mxu0 0.0
    %4071 = vmatprep.subr.mxu0 0.0
    %4072 = vmatpush1.msra.mxu0 0.0
    %4073 = vmatprep.subr.mxu0 0.0
    %4074 = vmatpush1.msra.mxu0 0.0
    %4075 = vmatprep.subr.mxu0 0.0
    %4076 = vmatpush1.msra.mxu0 0.0
    %4077 = vmatprep.subr.mxu0 0.0
    %4078 = vmatpush1.msra.mxu0 0.0
    %4079 = vmatprep.subr.mxu0 0.0
    %4080 = vmatpush1.msra.mxu0 0.0
    %4081 = vmatprep.mubr.f32.mxu0 0.0
    %4082 = vmatmul.mubr.f32.gmra.mrb[0].mxu0 %v4012
    %v4083 = vpop.f32.mrb[0].mxu0
    %v4084 = vadd.f32 %v4010, %v4083
    %v4085 = vpop.f32.mrb[0].mxu0
    %4086 = vmatprep.mubr.f32.mxu0 0.0
    %4087 = vmatmul.mubr.f32.gmra.mrb[0].mxu0 %v4015
    %v4088 = vpop.f32.mrb[0].mxu0
    %v4089 = vadd.f32 %v4010, %v4088
    %v4090 = vpop.f32.mrb[0].mxu0
    %4091 = vdwg.mxu0
    %v4092 = vmax.f32 %v4084, 0.0
    %v4093 = vmax.f32 %v4089, 0.0
    %v4095 = vsel %vm2032, %v4092, 0
    %v4098 = vsel %vm2032, %v4093, 0
    %4100 = vmatprep.subr.mxu0 0.0
    %4101 = vmatpush1.msra.mxu0 %v2138
    %4102 = vmatprep.subr.mxu0 0.0
    %4103 = vmatpush1.msra.mxu0 %v2139
    %4104 = vmatprep.subr.mxu0 0.0
    %4105 = vmatpush1.msra.mxu0 %v2140
    %4106 = vmatprep.subr.mxu0 0.0
    %4107 = vmatpush1.msra.mxu0 %v2141
    %4108 = vmatprep.subr.mxu0 0.0
    %4109 = vmatpush1.msra.mxu0 %v2142
    %4110 = vmatprep.subr.mxu0 0.0
    %4111 = vmatpush1.msra.mxu0 %v2143
    %4112 = vmatprep.subr.mxu0 0.0
    %4113 = vmatpush1.msra.mxu0 %v2144
    %4114 = vmatprep.subr.mxu0 0.0
    %4115 = vmatpush1.msra.mxu0 %v2145
    %4116 = vmatprep.subr.mxu0 0.0
    %4117 = vmatpush1.msra.mxu0 0.0
    %4118 = vmatprep.subr.mxu0 0.0
    %4119 = vmatpush1.msra.mxu0 0.0
    %4120 = vmatprep.subr.mxu0 0.0
    %4121 = vmatpush1.msra.mxu0 0.0
    %4122 = vmatprep.subr.mxu0 0.0
    %4123 = vmatpush1.msra.mxu0 0.0
    %4124 = vmatprep.subr.mxu0 0.0
    %4125 = vmatpush1.msra.mxu0 0.0
    %4126 = vmatprep.subr.mxu0 0.0
    %4127 = vmatpush1.msra.mxu0 0.0
    %4128 = vmatprep.subr.mxu0 0.0
    %4129 = vmatpush1.msra.mxu0 0.0
    %4130 = vmatprep.subr.mxu0 0.0
    %4131 = vmatpush1.msra.mxu0 0.0
    %4132 = vmatprep.subr.mxu0 0.0
    %4133 = vmatpush1.msra.mxu0 0.0
    %4134 = vmatprep.subr.mxu0 0.0
    %4135 = vmatpush1.msra.mxu0 0.0
    %4136 = vmatprep.subr.mxu0 0.0
    %4137 = vmatpush1.msra.mxu0 0.0
    %4138 = vmatprep.subr.mxu0 0.0
    %4139 = vmatpush1.msra.mxu0 0.0
    %4140 = vmatprep.subr.mxu0 0.0
    %4141 = vmatpush1.msra.mxu0 0.0
    %4142 = vmatprep.subr.mxu0 0.0
    %4143 = vmatpush1.msra.mxu0 0.0
    %4144 = vmatprep.subr.mxu0 0.0
    %4145 = vmatpush1.msra.mxu0 0.0
    %4146 = vmatprep.subr.mxu0 0.0
    %4147 = vmatpush1.msra.mxu0 0.0
    %4148 = vmatprep.subr.mxu0 0.0
    %4149 = vmatpush1.msra.mxu0 0.0
    %4150 = vmatprep.subr.mxu0 0.0
    %4151 = vmatpush1.msra.mxu0 0.0
    %4152 = vmatprep.subr.mxu0 0.0
    %4153 = vmatpush1.msra.mxu0 0.0
    %4154 = vmatprep.subr.mxu0 0.0
    %4155 = vmatpush1.msra.mxu0 0.0
    %4156 = vmatprep.subr.mxu0 0.0
    %4157 = vmatpush1.msra.mxu0 0.0
    %4158 = vmatprep.subr.mxu0 0.0
    %4159 = vmatpush1.msra.mxu0 0.0
    %4160 = vmatprep.subr.mxu0 0.0
    %4161 = vmatpush1.msra.mxu0 0.0
    %4162 = vmatprep.subr.mxu0 0.0
    %4163 = vmatpush1.msra.mxu0 0.0
    %4164 = vmatprep.mubr.f32.mxu0 0.0
    %4165 = vmatmul.mubr.f32.gmra.mrb[0].mxu0 %v4095
    %v4166 = vpop.f32.mrb[0].mxu0
    %v4167 = vadd.f32 0.0, %v4166
    %v4168 = vpop.f32.mrb[0].mxu0
    %4169 = vmatprep.mubr.f32.mxu0 0.0
    %4170 = vmatmul.mubr.f32.gmra.mrb[0].mxu0 %v4098
    %v4171 = vpop.f32.mrb[0].mxu0
    %v4172 = vadd.f32 0.0, %v4171
    %v4173 = vpop.f32.mrb[0].mxu0
    %4174 = vdwg.mxu0
    %v4175 = vadd.f32 %v3953, %v4167
    %v4176 = vadd.f32 %v3954, %v4172
    %v4177 = vlaneseq
    %v4178 = vshrl.u32 %v4177, 7
    %v4179 = vsub.s32 3, %v4178
    %v4180 = vrot.slane %v2147, %v4179
    %v4181 = vadd.f32 %v4175, %v4180
    %v4182 = vadd.f32 %v4176, %v4180
    %v4183 = vld [vmem:[%s7] sm:$0x1]
    %v4184 = vld [vmem:[%s7 + $0x1] sm:$0x1]
    %v4185 = vsel %vm83, %v4181, 0.0
    %4186 = vadd.xlane.f32.xlu0 %v4185
    %v4187 = vpop.xlane.xlu0 %4186
    %v4188 = vsel %vm83, %v4182, 0.0
    %4189 = vadd.xlane.f32.xlu0 %v4188
    %v4190 = vpop.xlane.xlu0 %4189
    %v4191 = vmul.f32 %v4187, %v90
    %v4192 = vmul.f32 %v4190, %v90
    %v4193 = vsub.f32 %v4181, %v4191
    %v4194 = vsub.f32 %v4182, %v4192
    %v4195 = vmul.f32 %v4193, %v4193
    %v4196 = vmul.f32 %v4194, %v4194
    %v4197 = vsel %vm83, %v4195, 0.0
    %4198 = vadd.xlane.f32.xlu0 %v4197
    %v4199 = vpop.xlane.xlu0 %4198
    %v4200 = vsel %vm83, %v4196, 0.0
    %4201 = vadd.xlane.f32.xlu0 %v4200
    %v4202 = vpop.xlane.xlu0 %4201
    %v4203 = vmul.f32 %v4199, 0.032258064
    %v4204 = vmul.f32 %v4202, 0.032258064
    %v4205 = vrsqrt.pop %v4203
    %v4206 = vmul.f32 %v4203, %v4205
    %vm4207 = vcmp.eq.f32.partialorder %v4203, inf
    %v4208 = vsel %vm4207, %v4203, %v4206
    %vm4209 = vcmp.eq.f32.partialorder %v4203, 0.0
    %v4210 = vand.u32 %v4203, 2147483648
    %v4211 = vsel %vm4209, %v4210, %v4208
    %v4212 = vrsqrt.pop %v4204
    %v4213 = vmul.f32 %v4204, %v4212
    %vm4214 = vcmp.eq.f32.partialorder %v4204, inf
    %v4215 = vsel %vm4214, %v4204, %v4213
    %vm4216 = vcmp.eq.f32.partialorder %v4204, 0.0
    %v4217 = vand.u32 %v4204, 2147483648
    %v4218 = vsel %vm4216, %v4217, %v4215
    %v4219 = vlaneseq
    %v4220 = vshrl.u32 %v4219, 7
    %v4221 = vsub.s32 0, %v4220
    %v4222 = vrot.slane %v4183, %v4221
    %v4223 = vmul.f32 %v4222, %v4193
    %v4224 = vmul.f32 %v4222, %v4194
    %v4225 = vadd.f32 %v4211, 1e-06
    %v4226 = vadd.f32 %v4218, 1e-06
    %v4227 = vrcp.pop %v4225
    %v4228 = vmul.f32 %v4223, %v4227
    %v4229 = vrcp.pop %v4226
    %v4230 = vmul.f32 %v4224, %v4229
    %v4231 = vlaneseq
    %v4232 = vshrl.u32 %v4231, 7
    %v4233 = vsub.s32 0, %v4232
    %v4234 = vrot.slane %v4184, %v4233
    %v4235 = vadd.f32 %v4228, %v4234
    %v4236 = vadd.f32 %v4230, %v4234
    %4237 = vst.msk [vmem:[#allocation7] sm:$0xff] %vm83, %v4235
    %4238 = vst.msk [vmem:[#allocation7 + $0x8] sm:$0xff] %vm83, %v4236
    // Predicated region
    $region42: #{tpu_custom_call.1} parent=1 // pred_check
      _
    $region43: #{tpu_custom_call.1} parent=1 // pred_check_branch
      %4240 = sbr.rel (0) target = $region45
    $region44: #{tpu_custom_call.1} parent=1 // pred_region
      %s4242 = ssub.s32 256, 256
      %4243 = vsyncadd [#allocation4], %s4242
      %s4244 = sshll.u32 [#allocation7], 4
      %s4245 = int_to_ptr.vmem [resolvable:$true] %s4244
      %4250 = dma.vmem_to_hbm [thread:$0]  %s4245, 256, %s8, [#allocation4], 128, 128, 8
    $region45: #{tpu_custom_call.1} parent=1 // pred_fallthru
      _
    // Predicated region
    $region46: #{tpu_custom_call.1} parent=1 // pred_check
      _
    $region47: #{tpu_custom_call.1} parent=1 // pred_check_branch
      %4252 = sbr.rel (0) target = $region49
    $region48: #{tpu_custom_call.1} parent=1 // pred_region
      %4253 = dma.done [#allocation4], 256
    $region49: #{tpu_custom_call.1} parent=1 // pred_fallthru
      _
    %4254 = vsyncpa [#allocation3], 1
    %4255 = vsyncpa [#allocation6], 1
    %4256 = vsyncpa [#allocation4], 1

</llo_original>
